<compile_context>
chip_gen: v7x
topology: tpu7x:2x2x1
jax: 0.10.0
libtpu: 0.0.40
codegen_flags: <defaults>
</compile_context>

<pallas_src>
import functools

import jax
import jax.numpy as jnp
import numpy as np
from jax.experimental import pallas as pl
from jax.experimental.pallas import tpu as pltpu

SCAN_LEN = 360  # the torch module builds the LSTM input size from a (1, 1, 360) dummy
CH_LANES = 128  # per-channel lane block for the padded feat layout

_VMEM = pl.BlockSpec(memory_space=pltpu.MemorySpace.VMEM)
_SMEM = pl.BlockSpec(memory_space=pltpu.MemorySpace.SMEM)


def _tree_sum(terms):
    """Pairwise (tree) sum of a list of arrays -> shorter dependent add chains."""
    terms = list(terms)
    while len(terms) > 1:
        nxt = [terms[i] + terms[i + 1] for i in range(0, len(terms) - 1, 2)]
        if len(terms) % 2:
            nxt.append(terms[-1])
        terms = nxt
    return terms[0]


# --------------------------------- fused kernel --------------------------------- #

def _fused_kernel(x4_ref, w1_ref, s1_ref, w2_ref, s2_ref,
                  wih_ref, whh_ref, bias_ref, wfc_ref, bfc_ref,
                  out_ref, h1_sc, feat_sc,
                  *, batch, seq, c1, k1, c2, k2, hidden, t1, ch, margin, plane_w):
    n = batch * seq           # rows, time-major: row = t * batch + i

    # -------- conv block 1: Conv1d(1->c1, k1, 'same') + BN + ReLU + MaxPool(2) --------
    # x4_ref[r, :, q] = xpad[:, 4q + r]  (4-phase split of the zero-padded scan).
    x4 = x4_ref[...]                                       # (4, n, W4) f32
    taps = []
    for j in range(k1 + 3):                                # taps[j][:, t] = xpad[:, 4t + j]
        q, r = divmod(j, 4)
        taps.append(x4[r, :, q:q + t1])                    # (n, t1)

    zl = jnp.zeros((n, margin), jnp.float32)
    zr = jnp.zeros((n, plane_w - margin - t1), jnp.float32)
    for co in range(c1):
        acc = []
        for r in range(4):                                 # conv output position 4t + r
            acc.append(_tree_sum(
                [w1_ref[co * k1 + k] * taps[r + k] for k in range(k1)]))
        s = s1_ref[co]
        # pooled1[2t]   = max(conv[4t],   conv[4t+1])  -> parity slot 0
        # pooled1[2t+1] = max(conv[4t+2], conv[4t+3])  -> parity slot 1
        even = jnp.maximum(jnp.maximum(acc[0], acc[1]) + s, 0.0)
        odd = jnp.maximum(jnp.maximum(acc[2], acc[3]) + s, 0.0)
        # build the full 128-lane plane in registers (zero margins = 'same' padding),
        # then one aligned, unmasked full-lane store per (parity, channel) plane.
        h1_sc[0, co, :, :] = jnp.concatenate([zl, even, zr], axis=1)
        h1_sc[1, co, :, :] = jnp.concatenate([zl, odd, zr], axis=1)

    # -------- conv block 2: Conv1d(c1->c2, k2, 'same') + BN + ReLU + MaxPool(2) --------
    # views[ci][j][:, l] = h1pad[ci, :, 2l + j]  (h1pad = pooled1 zero-padded by k2//2),
    # read straight from the parity-split scratch with small static lane offsets.
    p2 = k2 // 2
    views = []
    for ci in range(c1):
        vj = []
        for j in range(k2 + 1):
            d = j - p2
            par = d % 2                                    # parity slot
            sh = d // 2                                    # floor shift
            a = margin + sh
            vj.append(h1_sc[par, ci, :, a:a + t1])
        views.append(vj)

    zc = jnp.zeros((n, ch - t1), jnp.float32)
    for co in range(c2):
        ev, od = [], []
        for ci in range(c1):
            for k in range(k2):
                w = w2_ref[(co * c1 + ci) * k2 + k]
                ev.append(w * views[ci][k])                # conv at even output positions
                od.append(w * views[ci][k + 1])            # conv at odd output positions
        s = s2_ref[co]
        pooled = jnp.maximum(jnp.maximum(_tree_sum(ev), _tree_sum(od)) + s, 0.0)
        # channel-padded bf16 feat block: aligned 128-lane store, zero lanes above t1.
        feat_sc[:, co * ch:(co + 1) * ch] = jnp.concatenate(
            [pooled, zc], axis=1).astype(jnp.bfloat16)

    # -------- LSTM (1 layer, batch_first) + final FC -----------------------------------
    # Input projection hoisted out of the time loop: one bf16 MXU matmul over the only
    # deep contraction (K = c2*128, clean multiple of 128/256), f32 accumulation.
    xproj = jnp.dot(feat_sc[...], wih_ref[...],
                    preferred_element_type=jnp.float32) + bias_ref[...]   # (n, 4H)
    whh = whh_ref[...]                                     # (H, 4H) bf16, hoisted load

    h = jnp.zeros((batch, hidden), jnp.float32)
    c = jnp.zeros((batch, hidden), jnp.float32)
    for t in range(seq):                                   # small static trip count
        gates = xproj[t * batch:(t + 1) * batch, :] + jnp.dot(
            h.astype(jnp.bfloat16), whh, preferred_element_type=jnp.float32)
        # gate columns pre-packed as (i, f, o, g): sigmoid only over the first 3H lanes.
        sg = jax.nn.sigmoid(gates[:, :3 * hidden])
        i_g = sg[:, 0:hidden]
        f_g = sg[:, hidden:2 * hidden]
        o_g = sg[:, 2 * hidden:3 * hidden]
        g_g = jnp.tanh(gates[:, 3 * hidden:])
        c = f_g * c + i_g * g_g
        h = o_g * jnp.tanh(c)

    out_ref[...] = (jnp.dot(h.astype(jnp.bfloat16), wfc_ref[...],
                            preferred_element_type=jnp.float32) + bfc_ref[...])


# ----------------------------------- wrapper ------------------------------------ #

def forward(params, x):
    """x: (b, seq, 360) or (b, 360) -> (b, output_size). Torch eval-mode forward."""
    if x.ndim == 2:
        x = x[:, None, :]
    x = x.astype(jnp.float32)
    b, seq, L = x.shape
    w1, w2 = params["w1"], params["w2"]
    c1, _, k1 = w1.shape
    c2, _, k2 = w2.shape
    hidden = params["whh_k"].shape[0]
    out_size = params["wfc_bf16"].shape[1]
    t1 = L // 4
    assert L % 4 == 0 and k1 % 2 == 1 and k2 % 2 == 1
    assert t1 <= CH_LANES
    assert params["wih_k"].shape[0] == c2 * CH_LANES
    n = b * seq
    margin = k2 // 2 + 1
    plane_w = -(-(t1 + 2 * margin) // 128) * 128           # 128-lane-aligned pooled1 plane

    # Tiny 1x-sized host prep of the raw scan (time-major rows + 4-phase split for the
    # fused conv/pool); fuses into the surrounding jit, everything else stays in-kernel.
    x2d = jnp.transpose(x, (1, 0, 2)).reshape(n, L)        # row = t * b + i (time-major)
    p1 = k1 // 2
    w4 = -(-(L + 2 * p1) // 4)                             # ceil((L + 2*pad) / 4)
    xpad = jnp.pad(x2d, ((0, 0), (p1, 4 * w4 - L - p1)))
    x4 = xpad.reshape(n, w4, 4).transpose(2, 0, 1)         # (4, n, w4)

    kernel = functools.partial(
        _fused_kernel, batch=b, seq=seq, c1=c1, k1=k1, c2=c2, k2=k2,
        hidden=hidden, t1=t1, ch=CH_LANES, margin=margin, plane_w=plane_w)

    return pl.pallas_call(
        kernel,
        out_shape=jax.ShapeDtypeStruct((b, out_size), jnp.float32),
        in_specs=[_VMEM, _SMEM, _SMEM, _SMEM, _SMEM,
                  _VMEM, _VMEM, _VMEM, _VMEM, _VMEM],
        out_specs=_VMEM,
        scratch_shapes=[
            pltpu.VMEM((2, c1, n, plane_w), jnp.float32),   # parity-split pooled1 planes
            pltpu.VMEM((n, c2 * CH_LANES), jnp.bfloat16),   # channel-padded bf16 feat
        ],
    )(x4,
      w1.reshape(-1), params["shift1"],
      w2.reshape(-1), params["shift2"],
      params["wih_k"], params["whh_k"], params["bias_k"],
      params["wfc_bf16"], params["bfc"])


# ------------------------- parameter init (deterministic) ------------------------ #

def init_params(key, conv_params_list, hidden_size, output_size, scan_len=SCAN_LEN):
    assert len(conv_params_list) == 2, "fused kernel is specialized to 2 conv blocks"
    keys = iter(jax.random.split(key, 32))
    conv = []
    in_ch = 1
    L = scan_len
    for cd in conv_params_list:
        out_ch, ks = cd["out_channels"], cd["kernel_size"]
        assert cd.get("stride", 1) == 1 and cd.get("pool", False)
        w = 0.3 * jax.random.normal(next(keys), (out_ch, in_ch, ks), jnp.float32)
        b_conv = 0.1 * jax.random.normal(next(keys), (out_ch,), jnp.float32)
        gamma = 1.0 + 0.1 * jax.random.normal(next(keys), (out_ch,), jnp.float32)
        beta = 0.1 * jax.random.normal(next(keys), (out_ch,), jnp.float32)
        r_mean = 0.05 * jax.random.normal(next(keys), (out_ch,), jnp.float32)
        r_var = 0.5 + jax.random.uniform(next(keys), (out_ch,), jnp.float32)
        inv_std = gamma / jnp.sqrt(r_var + 1e-5)           # eval-mode BN
        conv.append({
            "w": w * inv_std[:, None, None],               # BN scale folded into weights
            "shift": beta + (b_conv - r_mean) * inv_std,   # remaining per-channel shift
        })
        in_ch = out_ch
        L = L // 2
    c2, t1 = in_ch, L
    conv_flat_dim = c2 * t1
    H, F = hidden_size, conv_flat_dim
    k = 1.0 / np.sqrt(H)
    u = lambda shape: jax.random.uniform(next(keys), shape, jnp.float32, -k, k)
    w_ih, w_hh = u((4 * H, F)), u((4 * H, H))
    b_ih, b_hh = u((4 * H,)), u((4 * H,))
    w_fc, b_fc = u((output_size, H)), u((output_size,))

    # --- kernel packing ---------------------------------------------------------------
    # 1) channel-pad W_ih rows: feature (co, l) -> row co*128 + l, zeros for l >= t1 so the
    #    padded feat lanes contribute exact zeros.
    # 2) permute gate columns from torch order (i, f, g, o) to (i, f, o, g) so the in-kernel
    #    sigmoid covers a contiguous 3H block and the g-quarter sigmoid is never computed.
    assert t1 <= CH_LANES
    perm = np.concatenate([np.arange(0, H), np.arange(H, 2 * H),
                           np.arange(3 * H, 4 * H), np.arange(2 * H, 3 * H)])
    wih_rows = w_ih.T.reshape(c2, t1, 4 * H)               # (c2, t1, 4H)
    wih_pad = jnp.zeros((c2, CH_LANES, 4 * H), jnp.float32).at[:, :t1, :].set(wih_rows)
    wih_k = wih_pad.reshape(c2 * CH_LANES, 4 * H)[:, perm].astype(jnp.bfloat16)
    whh_k = w_hh.T[:, perm].astype(jnp.bfloat16)
    bias_k = (b_ih + b_hh)[perm][None, :]

    return {
        "w1": conv[0]["w"], "shift1": conv[0]["shift"],
        "w2": conv[1]["w"], "shift2": conv[1]["shift"],
        # kernel-packed MXU operands (bf16, channel-padded rows, (i,f,o,g) gate order)
        "wih_k": wih_k, "whh_k": whh_k, "bias_k": bias_k,
        # torch-gate-order bf16 operands for the pure-JAX reference
        "wih_bf16": w_ih.T.astype(jnp.bfloat16),
        "whh_bf16": w_hh.T.astype(jnp.bfloat16),
        "bias": (b_ih + b_hh)[None, :],
        "wfc_bf16": w_fc.T.astype(jnp.bfloat16),
        "bfc": b_fc[None, :],
    }


# ------------------------------ pure-JAX reference ------------------------------- #

def reference_forward(params, x):
    """Mirrors the torch forward (eval-BN folded, bf16 matmul operands, f32 accumulate)."""
    if x.ndim == 2:
        x = x[:, None, :]
    x = x.astype(jnp.float32)
    b, seq, L = x.shape
    h = x.reshape(b * seq, 1, L)
    for w, shift in ((params["w1"], params["shift1"]), (params["w2"], params["shift2"])):
        Cout, Cin, K = w.shape
        pad = K // 2
        Lout = h.shape[-1]
        hp = jnp.pad(h, ((0, 0), (0, 0), (pad, pad)))
        cols = jnp.stack([hp[:, :, k:k + Lout] for k in range(K)], axis=-1)  # (N,Cin,L,K)
        y = jnp.einsum("oik,nilk->nol", w, cols, precision=jax.lax.Precision.HIGHEST)
        y = jnp.maximum(y + shift[None, :, None], 0.0)
        Lf = Lout // 2
        h = jnp.maximum(y[..., 0:2 * Lf:2], y[..., 1:2 * Lf:2])
    feat = h.reshape(b, seq, -1)
    H = params["whh_bf16"].shape[0]
    wih, whh = params["wih_bf16"], params["whh_bf16"]
    hh = jnp.zeros((b, H), jnp.float32)
    cc = jnp.zeros((b, H), jnp.float32)
    for t in range(seq):
        g = (jnp.dot(feat[:, t].astype(jnp.bfloat16), wih,
                     preferred_element_type=jnp.float32)
             + jnp.dot(hh.astype(jnp.bfloat16), whh,
                       preferred_element_type=jnp.float32)
             + params["bias"])
        i = jax.nn.sigmoid(g[:, :H])
        f = jax.nn.sigmoid(g[:, H:2 * H])
        gg = jnp.tanh(g[:, 2 * H:3 * H])
        o = jax.nn.sigmoid(g[:, 3 * H:])
        cc = f * cc + i * gg
        hh = o * jnp.tanh(cc)
    return (jnp.dot(hh.astype(jnp.bfloat16), params["wfc_bf16"],
                    preferred_element_type=jnp.float32) + params["bfc"])


# ------------------------------------- main -------------------------------------- #

if __name__ == "__main__":
    key = jax.random.PRNGKey(0)
    pkey, xkey = jax.random.split(key)

    conv_params_list = [
        {"out_channels": 4, "kernel_size": 5, "pool": True, "stride": 1},
        {"out_channels": 8, "kernel_size": 3, "pool": True, "stride": 1},
    ]
    params = init_params(pkey, conv_params_list, hidden_size=32, output_size=3)

    # x: (batch=2, seq=4, input_size=360)  (LiDAR scan length fixed by the module)
    x = jax.random.normal(xkey, (2, 4, SCAN_LEN), jnp.float32)

    out = jax.block_until_ready(jax.jit(forward)(params, x))
    ref = jax.block_until_ready(reference_forward(params, x))

    assert out.shape == (2, 3), out.shape
    err = float(np.max(np.abs(np.asarray(out) - np.asarray(ref))))
    assert np.allclose(np.asarray(out), np.asarray(ref), atol=5e-3, rtol=5e-3), err
    print("KERNEL_OK")
</pallas_src>

<mosaic_0001>
module attributes {stable_mosaic.version = 11 : i64} {
  func.func @_fused_kernel(%arg0: memref<4x8x91xf32, #tpu.memory_space<vmem>>, %arg1: memref<20xf32, #tpu.memory_space<smem>>, %arg2: memref<4xf32, #tpu.memory_space<smem>>, %arg3: memref<96xf32, #tpu.memory_space<smem>>, %arg4: memref<8xf32, #tpu.memory_space<smem>>, %arg5: memref<1024x128xbf16, #tpu.memory_space<vmem>>, %arg6: memref<32x128xbf16, #tpu.memory_space<vmem>>, %arg7: memref<1x128xf32, #tpu.memory_space<vmem>>, %arg8: memref<32x3xbf16, #tpu.memory_space<vmem>>, %arg9: memref<1x3xf32, #tpu.memory_space<vmem>>, %arg10: memref<2x3xf32, #tpu.memory_space<vmem>>, %arg11: memref<2x4x8x128xf32, #tpu.memory_space<vmem>>, %arg12: memref<8x1024xbf16, #tpu.memory_space<vmem>>) attributes {dimension_semantics = [], scalar_prefetch = 0 : i64, scratch_operands = 2 : i64, tpu.core_type = #tpu.core_type<tc>} {
    %c0 = arith.constant 0 : index
    %c0_0 = arith.constant 0 : index
    %c0_1 = arith.constant 0 : index
    %0 = vector.load %arg0[%c0, %c0_0, %c0_1] : memref<4x8x91xf32, #tpu.memory_space<vmem>>, vector<4x8x91xf32>
    %1 = vector.extract_strided_slice %0 {offsets = [0, 0, 0], sizes = [1, 8, 90], strides = [1, 1, 1]} : vector<4x8x91xf32> to vector<1x8x90xf32>
    %2 = vector.shape_cast %1 : vector<1x8x90xf32> to vector<8x90xf32>
    %3 = vector.extract_strided_slice %0 {offsets = [1, 0, 0], sizes = [1, 8, 90], strides = [1, 1, 1]} : vector<4x8x91xf32> to vector<1x8x90xf32>
    %4 = vector.shape_cast %3 : vector<1x8x90xf32> to vector<8x90xf32>
    %5 = vector.extract_strided_slice %0 {offsets = [2, 0, 0], sizes = [1, 8, 90], strides = [1, 1, 1]} : vector<4x8x91xf32> to vector<1x8x90xf32>
    %6 = vector.shape_cast %5 : vector<1x8x90xf32> to vector<8x90xf32>
    %7 = vector.extract_strided_slice %0 {offsets = [3, 0, 0], sizes = [1, 8, 90], strides = [1, 1, 1]} : vector<4x8x91xf32> to vector<1x8x90xf32>
    %8 = vector.shape_cast %7 : vector<1x8x90xf32> to vector<8x90xf32>
    %9 = vector.extract_strided_slice %0 {offsets = [0, 0, 1], sizes = [1, 8, 90], strides = [1, 1, 1]} : vector<4x8x91xf32> to vector<1x8x90xf32>
    %10 = vector.shape_cast %9 : vector<1x8x90xf32> to vector<8x90xf32>
    %11 = vector.extract_strided_slice %0 {offsets = [1, 0, 1], sizes = [1, 8, 90], strides = [1, 1, 1]} : vector<4x8x91xf32> to vector<1x8x90xf32>
    %12 = vector.shape_cast %11 : vector<1x8x90xf32> to vector<8x90xf32>
    %13 = vector.extract_strided_slice %0 {offsets = [2, 0, 1], sizes = [1, 8, 90], strides = [1, 1, 1]} : vector<4x8x91xf32> to vector<1x8x90xf32>
    %14 = vector.shape_cast %13 : vector<1x8x90xf32> to vector<8x90xf32>
    %15 = vector.extract_strided_slice %0 {offsets = [3, 0, 1], sizes = [1, 8, 90], strides = [1, 1, 1]} : vector<4x8x91xf32> to vector<1x8x90xf32>
    %16 = vector.shape_cast %15 : vector<1x8x90xf32> to vector<8x90xf32>
    %cst = arith.constant 0.000000e+00 : f32
    %17 = vector.broadcast %cst : f32 to vector<8x2xf32>
    %cst_2 = arith.constant 0.000000e+00 : f32
    %18 = vector.broadcast %cst_2 : f32 to vector<8x36xf32>
    %c0_3 = arith.constant 0 : index
    %19 = memref.load %arg1[%c0_3] : memref<20xf32, #tpu.memory_space<smem>>
    %20 = vector.broadcast %19 : f32 to vector<8x90xf32>
    %21 = arith.mulf %20, %2 : vector<8x90xf32>
    %c1 = arith.constant 1 : index
    %22 = memref.load %arg1[%c1] : memref<20xf32, #tpu.memory_space<smem>>
    %23 = vector.broadcast %22 : f32 to vector<8x90xf32>
    %24 = arith.mulf %23, %4 : vector<8x90xf32>
    %c2 = arith.constant 2 : index
    %25 = memref.load %arg1[%c2] : memref<20xf32, #tpu.memory_space<smem>>
    %26 = vector.broadcast %25 : f32 to vector<8x90xf32>
    %27 = arith.mulf %26, %6 : vector<8x90xf32>
    %c3 = arith.constant 3 : index
    %28 = memref.load %arg1[%c3] : memref<20xf32, #tpu.memory_space<smem>>
    %29 = vector.broadcast %28 : f32 to vector<8x90xf32>
    %30 = arith.mulf %29, %8 : vector<8x90xf32>
    %c4 = arith.constant 4 : index
    %31 = memref.load %arg1[%c4] : memref<20xf32, #tpu.memory_space<smem>>
    %32 = vector.broadcast %31 : f32 to vector<8x90xf32>
    %33 = arith.mulf %32, %10 : vector<8x90xf32>
    %34 = arith.addf %21, %24 : vector<8x90xf32>
    %35 = arith.addf %27, %30 : vector<8x90xf32>
    %36 = arith.addf %34, %35 : vector<8x90xf32>
    %37 = arith.addf %36, %33 : vector<8x90xf32>
    %c0_4 = arith.constant 0 : index
    %38 = memref.load %arg1[%c0_4] : memref<20xf32, #tpu.memory_space<smem>>
    %39 = vector.broadcast %38 : f32 to vector<8x90xf32>
    %40 = arith.mulf %39, %4 : vector<8x90xf32>
    %c1_5 = arith.constant 1 : index
    %41 = memref.load %arg1[%c1_5] : memref<20xf32, #tpu.memory_space<smem>>
    %42 = vector.broadcast %41 : f32 to vector<8x90xf32>
    %43 = arith.mulf %42, %6 : vector<8x90xf32>
    %c2_6 = arith.constant 2 : index
    %44 = memref.load %arg1[%c2_6] : memref<20xf32, #tpu.memory_space<smem>>
    %45 = vector.broadcast %44 : f32 to vector<8x90xf32>
    %46 = arith.mulf %45, %8 : vector<8x90xf32>
    %c3_7 = arith.constant 3 : index
    %47 = memref.load %arg1[%c3_7] : memref<20xf32, #tpu.memory_space<smem>>
    %48 = vector.broadcast %47 : f32 to vector<8x90xf32>
    %49 = arith.mulf %48, %10 : vector<8x90xf32>
    %c4_8 = arith.constant 4 : index
    %50 = memref.load %arg1[%c4_8] : memref<20xf32, #tpu.memory_space<smem>>
    %51 = vector.broadcast %50 : f32 to vector<8x90xf32>
    %52 = arith.mulf %51, %12 : vector<8x90xf32>
    %53 = arith.addf %40, %43 : vector<8x90xf32>
    %54 = arith.addf %46, %49 : vector<8x90xf32>
    %55 = arith.addf %53, %54 : vector<8x90xf32>
    %56 = arith.addf %55, %52 : vector<8x90xf32>
    %c0_9 = arith.constant 0 : index
    %57 = memref.load %arg1[%c0_9] : memref<20xf32, #tpu.memory_space<smem>>
    %58 = vector.broadcast %57 : f32 to vector<8x90xf32>
    %59 = arith.mulf %58, %6 : vector<8x90xf32>
    %c1_10 = arith.constant 1 : index
    %60 = memref.load %arg1[%c1_10] : memref<20xf32, #tpu.memory_space<smem>>
    %61 = vector.broadcast %60 : f32 to vector<8x90xf32>
    %62 = arith.mulf %61, %8 : vector<8x90xf32>
    %c2_11 = arith.constant 2 : index
    %63 = memref.load %arg1[%c2_11] : memref<20xf32, #tpu.memory_space<smem>>
    %64 = vector.broadcast %63 : f32 to vector<8x90xf32>
    %65 = arith.mulf %64, %10 : vector<8x90xf32>
    %c3_12 = arith.constant 3 : index
    %66 = memref.load %arg1[%c3_12] : memref<20xf32, #tpu.memory_space<smem>>
    %67 = vector.broadcast %66 : f32 to vector<8x90xf32>
    %68 = arith.mulf %67, %12 : vector<8x90xf32>
    %c4_13 = arith.constant 4 : index
    %69 = memref.load %arg1[%c4_13] : memref<20xf32, #tpu.memory_space<smem>>
    %70 = vector.broadcast %69 : f32 to vector<8x90xf32>
    %71 = arith.mulf %70, %14 : vector<8x90xf32>
    %72 = arith.addf %59, %62 : vector<8x90xf32>
    %73 = arith.addf %65, %68 : vector<8x90xf32>
    %74 = arith.addf %72, %73 : vector<8x90xf32>
    %75 = arith.addf %74, %71 : vector<8x90xf32>
    %c0_14 = arith.constant 0 : index
    %76 = memref.load %arg1[%c0_14] : memref<20xf32, #tpu.memory_space<smem>>
    %77 = vector.broadcast %76 : f32 to vector<8x90xf32>
    %78 = arith.mulf %77, %8 : vector<8x90xf32>
    %c1_15 = arith.constant 1 : index
    %79 = memref.load %arg1[%c1_15] : memref<20xf32, #tpu.memory_space<smem>>
    %80 = vector.broadcast %79 : f32 to vector<8x90xf32>
    %81 = arith.mulf %80, %10 : vector<8x90xf32>
    %c2_16 = arith.constant 2 : index
    %82 = memref.load %arg1[%c2_16] : memref<20xf32, #tpu.memory_space<smem>>
    %83 = vector.broadcast %82 : f32 to vector<8x90xf32>
    %84 = arith.mulf %83, %12 : vector<8x90xf32>
    %c3_17 = arith.constant 3 : index
    %85 = memref.load %arg1[%c3_17] : memref<20xf32, #tpu.memory_space<smem>>
    %86 = vector.broadcast %85 : f32 to vector<8x90xf32>
    %87 = arith.mulf %86, %14 : vector<8x90xf32>
    %c4_18 = arith.constant 4 : index
    %88 = memref.load %arg1[%c4_18] : memref<20xf32, #tpu.memory_space<smem>>
    %89 = vector.broadcast %88 : f32 to vector<8x90xf32>
    %90 = arith.mulf %89, %16 : vector<8x90xf32>
    %91 = arith.addf %78, %81 : vector<8x90xf32>
    %92 = arith.addf %84, %87 : vector<8x90xf32>
    %93 = arith.addf %91, %92 : vector<8x90xf32>
    %94 = arith.addf %93, %90 : vector<8x90xf32>
    %c0_19 = arith.constant 0 : index
    %95 = memref.load %arg2[%c0_19] : memref<4xf32, #tpu.memory_space<smem>>
    %96 = arith.maximumf %37, %56 : vector<8x90xf32>
    %97 = vector.broadcast %95 : f32 to vector<8x90xf32>
    %98 = arith.addf %96, %97 : vector<8x90xf32>
    %cst_20 = arith.constant 0.000000e+00 : f32
    %99 = vector.broadcast %cst_20 : f32 to vector<8x90xf32>
    %100 = arith.maximumf %98, %99 : vector<8x90xf32>
    %101 = arith.maximumf %75, %94 : vector<8x90xf32>
    %102 = vector.broadcast %95 : f32 to vector<8x90xf32>
    %103 = arith.addf %101, %102 : vector<8x90xf32>
    %cst_21 = arith.constant 0.000000e+00 : f32
    %104 = vector.broadcast %cst_21 : f32 to vector<8x90xf32>
    %105 = arith.maximumf %103, %104 : vector<8x90xf32>
    %106 = tpu.concatenate %17, %100, %18 in 1 : vector<8x2xf32>, vector<8x90xf32>, vector<8x36xf32> -> vector<8x128xf32>
    %c0_22 = arith.constant 0 : index
    %c0_23 = arith.constant 0 : index
    %c0_24 = arith.constant 0 : index
    %c0_25 = arith.constant 0 : index
    %107 = vector.load %arg11[%c0_22, %c0_23, %c0_24, %c0_25] : memref<2x4x8x128xf32, #tpu.memory_space<vmem>>, vector<1x1x8x128xf32>
    %108 = vector.shape_cast %107 : vector<1x1x8x128xf32> to vector<8x128xf32>
    %109 = vector.shape_cast %106 : vector<8x128xf32> to vector<1x1x8x128xf32>
    tpu.vector_store %arg11[%c0_22, %c0_23, %c0_24, %c0_25], %109 {strides = array<i32>} : memref<2x4x8x128xf32, #tpu.memory_space<vmem>>, vector<1x1x8x128xf32>,
    %110 = tpu.concatenate %17, %105, %18 in 1 : vector<8x2xf32>, vector<8x90xf32>, vector<8x36xf32> -> vector<8x128xf32>
    %c1_26 = arith.constant 1 : index
    %c0_27 = arith.constant 0 : index
    %c0_28 = arith.constant 0 : index
    %c0_29 = arith.constant 0 : index
    %111 = vector.load %arg11[%c1_26, %c0_27, %c0_28, %c0_29] : memref<2x4x8x128xf32, #tpu.memory_space<vmem>>, vector<1x1x8x128xf32>
    %112 = vector.shape_cast %111 : vector<1x1x8x128xf32> to vector<8x128xf32>
    %113 = vector.shape_cast %110 : vector<8x128xf32> to vector<1x1x8x128xf32>
    tpu.vector_store %arg11[%c1_26, %c0_27, %c0_28, %c0_29], %113 {strides = array<i32>} : memref<2x4x8x128xf32, #tpu.memory_space<vmem>>, vector<1x1x8x128xf32>,
    %c5 = arith.constant 5 : index
    %114 = memref.load %arg1[%c5] : memref<20xf32, #tpu.memory_space<smem>>
    %115 = vector.broadcast %114 : f32 to vector<8x90xf32>
    %116 = arith.mulf %115, %2 : vector<8x90xf32>
    %c6 = arith.constant 6 : index
    %117 = memref.load %arg1[%c6] : memref<20xf32, #tpu.memory_space<smem>>
    %118 = vector.broadcast %117 : f32 to vector<8x90xf32>
    %119 = arith.mulf %118, %4 : vector<8x90xf32>
    %c7 = arith.constant 7 : index
    %120 = memref.load %arg1[%c7] : memref<20xf32, #tpu.memory_space<smem>>
    %121 = vector.broadcast %120 : f32 to vector<8x90xf32>
    %122 = arith.mulf %121, %6 : vector<8x90xf32>
    %c8 = arith.constant 8 : index
    %123 = memref.load %arg1[%c8] : memref<20xf32, #tpu.memory_space<smem>>
    %124 = vector.broadcast %123 : f32 to vector<8x90xf32>
    %125 = arith.mulf %124, %8 : vector<8x90xf32>
    %c9 = arith.constant 9 : index
    %126 = memref.load %arg1[%c9] : memref<20xf32, #tpu.memory_space<smem>>
    %127 = vector.broadcast %126 : f32 to vector<8x90xf32>
    %128 = arith.mulf %127, %10 : vector<8x90xf32>
    %129 = arith.addf %116, %119 : vector<8x90xf32>
    %130 = arith.addf %122, %125 : vector<8x90xf32>
    %131 = arith.addf %129, %130 : vector<8x90xf32>
    %132 = arith.addf %131, %128 : vector<8x90xf32>
    %c5_30 = arith.constant 5 : index
    %133 = memref.load %arg1[%c5_30] : memref<20xf32, #tpu.memory_space<smem>>
    %134 = vector.broadcast %133 : f32 to vector<8x90xf32>
    %135 = arith.mulf %134, %4 : vector<8x90xf32>
    %c6_31 = arith.constant 6 : index
    %136 = memref.load %arg1[%c6_31] : memref<20xf32, #tpu.memory_space<smem>>
    %137 = vector.broadcast %136 : f32 to vector<8x90xf32>
    %138 = arith.mulf %137, %6 : vector<8x90xf32>
    %c7_32 = arith.constant 7 : index
    %139 = memref.load %arg1[%c7_32] : memref<20xf32, #tpu.memory_space<smem>>
    %140 = vector.broadcast %139 : f32 to vector<8x90xf32>
    %141 = arith.mulf %140, %8 : vector<8x90xf32>
    %c8_33 = arith.constant 8 : index
    %142 = memref.load %arg1[%c8_33] : memref<20xf32, #tpu.memory_space<smem>>
    %143 = vector.broadcast %142 : f32 to vector<8x90xf32>
    %144 = arith.mulf %143, %10 : vector<8x90xf32>
    %c9_34 = arith.constant 9 : index
    %145 = memref.load %arg1[%c9_34] : memref<20xf32, #tpu.memory_space<smem>>
    %146 = vector.broadcast %145 : f32 to vector<8x90xf32>
    %147 = arith.mulf %146, %12 : vector<8x90xf32>
    %148 = arith.addf %135, %138 : vector<8x90xf32>
    %149 = arith.addf %141, %144 : vector<8x90xf32>
    %150 = arith.addf %148, %149 : vector<8x90xf32>
    %151 = arith.addf %150, %147 : vector<8x90xf32>
    %c5_35 = arith.constant 5 : index
    %152 = memref.load %arg1[%c5_35] : memref<20xf32, #tpu.memory_space<smem>>
    %153 = vector.broadcast %152 : f32 to vector<8x90xf32>
    %154 = arith.mulf %153, %6 : vector<8x90xf32>
    %c6_36 = arith.constant 6 : index
    %155 = memref.load %arg1[%c6_36] : memref<20xf32, #tpu.memory_space<smem>>
    %156 = vector.broadcast %155 : f32 to vector<8x90xf32>
    %157 = arith.mulf %156, %8 : vector<8x90xf32>
    %c7_37 = arith.constant 7 : index
    %158 = memref.load %arg1[%c7_37] : memref<20xf32, #tpu.memory_space<smem>>
    %159 = vector.broadcast %158 : f32 to vector<8x90xf32>
    %160 = arith.mulf %159, %10 : vector<8x90xf32>
    %c8_38 = arith.constant 8 : index
    %161 = memref.load %arg1[%c8_38] : memref<20xf32, #tpu.memory_space<smem>>
    %162 = vector.broadcast %161 : f32 to vector<8x90xf32>
    %163 = arith.mulf %162, %12 : vector<8x90xf32>
    %c9_39 = arith.constant 9 : index
    %164 = memref.load %arg1[%c9_39] : memref<20xf32, #tpu.memory_space<smem>>
    %165 = vector.broadcast %164 : f32 to vector<8x90xf32>
    %166 = arith.mulf %165, %14 : vector<8x90xf32>
    %167 = arith.addf %154, %157 : vector<8x90xf32>
    %168 = arith.addf %160, %163 : vector<8x90xf32>
    %169 = arith.addf %167, %168 : vector<8x90xf32>
    %170 = arith.addf %169, %166 : vector<8x90xf32>
    %c5_40 = arith.constant 5 : index
    %171 = memref.load %arg1[%c5_40] : memref<20xf32, #tpu.memory_space<smem>>
    %172 = vector.broadcast %171 : f32 to vector<8x90xf32>
    %173 = arith.mulf %172, %8 : vector<8x90xf32>
    %c6_41 = arith.constant 6 : index
    %174 = memref.load %arg1[%c6_41] : memref<20xf32, #tpu.memory_space<smem>>
    %175 = vector.broadcast %174 : f32 to vector<8x90xf32>
    %176 = arith.mulf %175, %10 : vector<8x90xf32>
    %c7_42 = arith.constant 7 : index
    %177 = memref.load %arg1[%c7_42] : memref<20xf32, #tpu.memory_space<smem>>
    %178 = vector.broadcast %177 : f32 to vector<8x90xf32>
    %179 = arith.mulf %178, %12 : vector<8x90xf32>
    %c8_43 = arith.constant 8 : index
    %180 = memref.load %arg1[%c8_43] : memref<20xf32, #tpu.memory_space<smem>>
    %181 = vector.broadcast %180 : f32 to vector<8x90xf32>
    %182 = arith.mulf %181, %14 : vector<8x90xf32>
    %c9_44 = arith.constant 9 : index
    %183 = memref.load %arg1[%c9_44] : memref<20xf32, #tpu.memory_space<smem>>
    %184 = vector.broadcast %183 : f32 to vector<8x90xf32>
    %185 = arith.mulf %184, %16 : vector<8x90xf32>
    %186 = arith.addf %173, %176 : vector<8x90xf32>
    %187 = arith.addf %179, %182 : vector<8x90xf32>
    %188 = arith.addf %186, %187 : vector<8x90xf32>
    %189 = arith.addf %188, %185 : vector<8x90xf32>
    %c1_45 = arith.constant 1 : index
    %190 = memref.load %arg2[%c1_45] : memref<4xf32, #tpu.memory_space<smem>>
    %191 = arith.maximumf %132, %151 : vector<8x90xf32>
    %192 = vector.broadcast %190 : f32 to vector<8x90xf32>
    %193 = arith.addf %191, %192 : vector<8x90xf32>
    %cst_46 = arith.constant 0.000000e+00 : f32
    %194 = vector.broadcast %cst_46 : f32 to vector<8x90xf32>
    %195 = arith.maximumf %193, %194 : vector<8x90xf32>
    %196 = arith.maximumf %170, %189 : vector<8x90xf32>
    %197 = vector.broadcast %190 : f32 to vector<8x90xf32>
    %198 = arith.addf %196, %197 : vector<8x90xf32>
    %cst_47 = arith.constant 0.000000e+00 : f32
    %199 = vector.broadcast %cst_47 : f32 to vector<8x90xf32>
    %200 = arith.maximumf %198, %199 : vector<8x90xf32>
    %201 = tpu.concatenate %17, %195, %18 in 1 : vector<8x2xf32>, vector<8x90xf32>, vector<8x36xf32> -> vector<8x128xf32>
    %c0_48 = arith.constant 0 : index
    %c1_49 = arith.constant 1 : index
    %c0_50 = arith.constant 0 : index
    %c0_51 = arith.constant 0 : index
    %202 = vector.load %arg11[%c0_48, %c1_49, %c0_50, %c0_51] : memref<2x4x8x128xf32, #tpu.memory_space<vmem>>, vector<1x1x8x128xf32>
    %203 = vector.shape_cast %202 : vector<1x1x8x128xf32> to vector<8x128xf32>
    %204 = vector.shape_cast %201 : vector<8x128xf32> to vector<1x1x8x128xf32>
    tpu.vector_store %arg11[%c0_48, %c1_49, %c0_50, %c0_51], %204 {strides = array<i32>} : memref<2x4x8x128xf32, #tpu.memory_space<vmem>>, vector<1x1x8x128xf32>,
    %205 = tpu.concatenate %17, %200, %18 in 1 : vector<8x2xf32>, vector<8x90xf32>, vector<8x36xf32> -> vector<8x128xf32>
    %c1_52 = arith.constant 1 : index
    %c1_53 = arith.constant 1 : index
    %c0_54 = arith.constant 0 : index
    %c0_55 = arith.constant 0 : index
    %206 = vector.load %arg11[%c1_52, %c1_53, %c0_54, %c0_55] : memref<2x4x8x128xf32, #tpu.memory_space<vmem>>, vector<1x1x8x128xf32>
    %207 = vector.shape_cast %206 : vector<1x1x8x128xf32> to vector<8x128xf32>
    %208 = vector.shape_cast %205 : vector<8x128xf32> to vector<1x1x8x128xf32>
    tpu.vector_store %arg11[%c1_52, %c1_53, %c0_54, %c0_55], %208 {strides = array<i32>} : memref<2x4x8x128xf32, #tpu.memory_space<vmem>>, vector<1x1x8x128xf32>,
    %c10 = arith.constant 10 : index
    %209 = memref.load %arg1[%c10] : memref<20xf32, #tpu.memory_space<smem>>
    %210 = vector.broadcast %209 : f32 to vector<8x90xf32>
    %211 = arith.mulf %210, %2 : vector<8x90xf32>
    %c11 = arith.constant 11 : index
    %212 = memref.load %arg1[%c11] : memref<20xf32, #tpu.memory_space<smem>>
    %213 = vector.broadcast %212 : f32 to vector<8x90xf32>
    %214 = arith.mulf %213, %4 : vector<8x90xf32>
    %c12 = arith.constant 12 : index
    %215 = memref.load %arg1[%c12] : memref<20xf32, #tpu.memory_space<smem>>
    %216 = vector.broadcast %215 : f32 to vector<8x90xf32>
    %217 = arith.mulf %216, %6 : vector<8x90xf32>
    %c13 = arith.constant 13 : index
    %218 = memref.load %arg1[%c13] : memref<20xf32, #tpu.memory_space<smem>>
    %219 = vector.broadcast %218 : f32 to vector<8x90xf32>
    %220 = arith.mulf %219, %8 : vector<8x90xf32>
    %c14 = arith.constant 14 : index
    %221 = memref.load %arg1[%c14] : memref<20xf32, #tpu.memory_space<smem>>
    %222 = vector.broadcast %221 : f32 to vector<8x90xf32>
    %223 = arith.mulf %222, %10 : vector<8x90xf32>
    %224 = arith.addf %211, %214 : vector<8x90xf32>
    %225 = arith.addf %217, %220 : vector<8x90xf32>
    %226 = arith.addf %224, %225 : vector<8x90xf32>
    %227 = arith.addf %226, %223 : vector<8x90xf32>
    %c10_56 = arith.constant 10 : index
    %228 = memref.load %arg1[%c10_56] : memref<20xf32, #tpu.memory_space<smem>>
    %229 = vector.broadcast %228 : f32 to vector<8x90xf32>
    %230 = arith.mulf %229, %4 : vector<8x90xf32>
    %c11_57 = arith.constant 11 : index
    %231 = memref.load %arg1[%c11_57] : memref<20xf32, #tpu.memory_space<smem>>
    %232 = vector.broadcast %231 : f32 to vector<8x90xf32>
    %233 = arith.mulf %232, %6 : vector<8x90xf32>
    %c12_58 = arith.constant 12 : index
    %234 = memref.load %arg1[%c12_58] : memref<20xf32, #tpu.memory_space<smem>>
    %235 = vector.broadcast %234 : f32 to vector<8x90xf32>
    %236 = arith.mulf %235, %8 : vector<8x90xf32>
    %c13_59 = arith.constant 13 : index
    %237 = memref.load %arg1[%c13_59] : memref<20xf32, #tpu.memory_space<smem>>
    %238 = vector.broadcast %237 : f32 to vector<8x90xf32>
    %239 = arith.mulf %238, %10 : vector<8x90xf32>
    %c14_60 = arith.constant 14 : index
    %240 = memref.load %arg1[%c14_60] : memref<20xf32, #tpu.memory_space<smem>>
    %241 = vector.broadcast %240 : f32 to vector<8x90xf32>
    %242 = arith.mulf %241, %12 : vector<8x90xf32>
    %243 = arith.addf %230, %233 : vector<8x90xf32>
    %244 = arith.addf %236, %239 : vector<8x90xf32>
    %245 = arith.addf %243, %244 : vector<8x90xf32>
    %246 = arith.addf %245, %242 : vector<8x90xf32>
    %c10_61 = arith.constant 10 : index
    %247 = memref.load %arg1[%c10_61] : memref<20xf32, #tpu.memory_space<smem>>
    %248 = vector.broadcast %247 : f32 to vector<8x90xf32>
    %249 = arith.mulf %248, %6 : vector<8x90xf32>
    %c11_62 = arith.constant 11 : index
    %250 = memref.load %arg1[%c11_62] : memref<20xf32, #tpu.memory_space<smem>>
    %251 = vector.broadcast %250 : f32 to vector<8x90xf32>
    %252 = arith.mulf %251, %8 : vector<8x90xf32>
    %c12_63 = arith.constant 12 : index
    %253 = memref.load %arg1[%c12_63] : memref<20xf32, #tpu.memory_space<smem>>
    %254 = vector.broadcast %253 : f32 to vector<8x90xf32>
    %255 = arith.mulf %254, %10 : vector<8x90xf32>
    %c13_64 = arith.constant 13 : index
    %256 = memref.load %arg1[%c13_64] : memref<20xf32, #tpu.memory_space<smem>>
    %257 = vector.broadcast %256 : f32 to vector<8x90xf32>
    %258 = arith.mulf %257, %12 : vector<8x90xf32>
    %c14_65 = arith.constant 14 : index
    %259 = memref.load %arg1[%c14_65] : memref<20xf32, #tpu.memory_space<smem>>
    %260 = vector.broadcast %259 : f32 to vector<8x90xf32>
    %261 = arith.mulf %260, %14 : vector<8x90xf32>
    %262 = arith.addf %249, %252 : vector<8x90xf32>
    %263 = arith.addf %255, %258 : vector<8x90xf32>
    %264 = arith.addf %262, %263 : vector<8x90xf32>
    %265 = arith.addf %264, %261 : vector<8x90xf32>
    %c10_66 = arith.constant 10 : index
    %266 = memref.load %arg1[%c10_66] : memref<20xf32, #tpu.memory_space<smem>>
    %267 = vector.broadcast %266 : f32 to vector<8x90xf32>
    %268 = arith.mulf %267, %8 : vector<8x90xf32>
    %c11_67 = arith.constant 11 : index
    %269 = memref.load %arg1[%c11_67] : memref<20xf32, #tpu.memory_space<smem>>
    %270 = vector.broadcast %269 : f32 to vector<8x90xf32>
    %271 = arith.mulf %270, %10 : vector<8x90xf32>
    %c12_68 = arith.constant 12 : index
    %272 = memref.load %arg1[%c12_68] : memref<20xf32, #tpu.memory_space<smem>>
    %273 = vector.broadcast %272 : f32 to vector<8x90xf32>
    %274 = arith.mulf %273, %12 : vector<8x90xf32>
    %c13_69 = arith.constant 13 : index
    %275 = memref.load %arg1[%c13_69] : memref<20xf32, #tpu.memory_space<smem>>
    %276 = vector.broadcast %275 : f32 to vector<8x90xf32>
    %277 = arith.mulf %276, %14 : vector<8x90xf32>
    %c14_70 = arith.constant 14 : index
    %278 = memref.load %arg1[%c14_70] : memref<20xf32, #tpu.memory_space<smem>>
    %279 = vector.broadcast %278 : f32 to vector<8x90xf32>
    %280 = arith.mulf %279, %16 : vector<8x90xf32>
    %281 = arith.addf %268, %271 : vector<8x90xf32>
    %282 = arith.addf %274, %277 : vector<8x90xf32>
    %283 = arith.addf %281, %282 : vector<8x90xf32>
    %284 = arith.addf %283, %280 : vector<8x90xf32>
    %c2_71 = arith.constant 2 : index
    %285 = memref.load %arg2[%c2_71] : memref<4xf32, #tpu.memory_space<smem>>
    %286 = arith.maximumf %227, %246 : vector<8x90xf32>
    %287 = vector.broadcast %285 : f32 to vector<8x90xf32>
    %288 = arith.addf %286, %287 : vector<8x90xf32>
    %cst_72 = arith.constant 0.000000e+00 : f32
    %289 = vector.broadcast %cst_72 : f32 to vector<8x90xf32>
    %290 = arith.maximumf %288, %289 : vector<8x90xf32>
    %291 = arith.maximumf %265, %284 : vector<8x90xf32>
    %292 = vector.broadcast %285 : f32 to vector<8x90xf32>
    %293 = arith.addf %291, %292 : vector<8x90xf32>
    %cst_73 = arith.constant 0.000000e+00 : f32
    %294 = vector.broadcast %cst_73 : f32 to vector<8x90xf32>
    %295 = arith.maximumf %293, %294 : vector<8x90xf32>
    %296 = tpu.concatenate %17, %290, %18 in 1 : vector<8x2xf32>, vector<8x90xf32>, vector<8x36xf32> -> vector<8x128xf32>
    %c0_74 = arith.constant 0 : index
    %c2_75 = arith.constant 2 : index
    %c0_76 = arith.constant 0 : index
    %c0_77 = arith.constant 0 : index
    %297 = vector.load %arg11[%c0_74, %c2_75, %c0_76, %c0_77] : memref<2x4x8x128xf32, #tpu.memory_space<vmem>>, vector<1x1x8x128xf32>
    %298 = vector.shape_cast %297 : vector<1x1x8x128xf32> to vector<8x128xf32>
    %299 = vector.shape_cast %296 : vector<8x128xf32> to vector<1x1x8x128xf32>
    tpu.vector_store %arg11[%c0_74, %c2_75, %c0_76, %c0_77], %299 {strides = array<i32>} : memref<2x4x8x128xf32, #tpu.memory_space<vmem>>, vector<1x1x8x128xf32>,
    %300 = tpu.concatenate %17, %295, %18 in 1 : vector<8x2xf32>, vector<8x90xf32>, vector<8x36xf32> -> vector<8x128xf32>
    %c1_78 = arith.constant 1 : index
    %c2_79 = arith.constant 2 : index
    %c0_80 = arith.constant 0 : index
    %c0_81 = arith.constant 0 : index
    %301 = vector.load %arg11[%c1_78, %c2_79, %c0_80, %c0_81] : memref<2x4x8x128xf32, #tpu.memory_space<vmem>>, vector<1x1x8x128xf32>
    %302 = vector.shape_cast %301 : vector<1x1x8x128xf32> to vector<8x128xf32>
    %303 = vector.shape_cast %300 : vector<8x128xf32> to vector<1x1x8x128xf32>
    tpu.vector_store %arg11[%c1_78, %c2_79, %c0_80, %c0_81], %303 {strides = array<i32>} : memref<2x4x8x128xf32, #tpu.memory_space<vmem>>, vector<1x1x8x128xf32>,
    %c15 = arith.constant 15 : index
    %304 = memref.load %arg1[%c15] : memref<20xf32, #tpu.memory_space<smem>>
    %305 = vector.broadcast %304 : f32 to vector<8x90xf32>
    %306 = arith.mulf %305, %2 : vector<8x90xf32>
    %c16 = arith.constant 16 : index
    %307 = memref.load %arg1[%c16] : memref<20xf32, #tpu.memory_space<smem>>
    %308 = vector.broadcast %307 : f32 to vector<8x90xf32>
    %309 = arith.mulf %308, %4 : vector<8x90xf32>
    %c17 = arith.constant 17 : index
    %310 = memref.load %arg1[%c17] : memref<20xf32, #tpu.memory_space<smem>>
    %311 = vector.broadcast %310 : f32 to vector<8x90xf32>
    %312 = arith.mulf %311, %6 : vector<8x90xf32>
    %c18 = arith.constant 18 : index
    %313 = memref.load %arg1[%c18] : memref<20xf32, #tpu.memory_space<smem>>
    %314 = vector.broadcast %313 : f32 to vector<8x90xf32>
    %315 = arith.mulf %314, %8 : vector<8x90xf32>
    %c19 = arith.constant 19 : index
    %316 = memref.load %arg1[%c19] : memref<20xf32, #tpu.memory_space<smem>>
    %317 = vector.broadcast %316 : f32 to vector<8x90xf32>
    %318 = arith.mulf %317, %10 : vector<8x90xf32>
    %319 = arith.addf %306, %309 : vector<8x90xf32>
    %320 = arith.addf %312, %315 : vector<8x90xf32>
    %321 = arith.addf %319, %320 : vector<8x90xf32>
    %322 = arith.addf %321, %318 : vector<8x90xf32>
    %c15_82 = arith.constant 15 : index
    %323 = memref.load %arg1[%c15_82] : memref<20xf32, #tpu.memory_space<smem>>
    %324 = vector.broadcast %323 : f32 to vector<8x90xf32>
    %325 = arith.mulf %324, %4 : vector<8x90xf32>
    %c16_83 = arith.constant 16 : index
    %326 = memref.load %arg1[%c16_83] : memref<20xf32, #tpu.memory_space<smem>>
    %327 = vector.broadcast %326 : f32 to vector<8x90xf32>
    %328 = arith.mulf %327, %6 : vector<8x90xf32>
    %c17_84 = arith.constant 17 : index
    %329 = memref.load %arg1[%c17_84] : memref<20xf32, #tpu.memory_space<smem>>
    %330 = vector.broadcast %329 : f32 to vector<8x90xf32>
    %331 = arith.mulf %330, %8 : vector<8x90xf32>
    %c18_85 = arith.constant 18 : index
    %332 = memref.load %arg1[%c18_85] : memref<20xf32, #tpu.memory_space<smem>>
    %333 = vector.broadcast %332 : f32 to vector<8x90xf32>
    %334 = arith.mulf %333, %10 : vector<8x90xf32>
    %c19_86 = arith.constant 19 : index
    %335 = memref.load %arg1[%c19_86] : memref<20xf32, #tpu.memory_space<smem>>
    %336 = vector.broadcast %335 : f32 to vector<8x90xf32>
    %337 = arith.mulf %336, %12 : vector<8x90xf32>
    %338 = arith.addf %325, %328 : vector<8x90xf32>
    %339 = arith.addf %331, %334 : vector<8x90xf32>
    %340 = arith.addf %338, %339 : vector<8x90xf32>
    %341 = arith.addf %340, %337 : vector<8x90xf32>
    %c15_87 = arith.constant 15 : index
    %342 = memref.load %arg1[%c15_87] : memref<20xf32, #tpu.memory_space<smem>>
    %343 = vector.broadcast %342 : f32 to vector<8x90xf32>
    %344 = arith.mulf %343, %6 : vector<8x90xf32>
    %c16_88 = arith.constant 16 : index
    %345 = memref.load %arg1[%c16_88] : memref<20xf32, #tpu.memory_space<smem>>
    %346 = vector.broadcast %345 : f32 to vector<8x90xf32>
    %347 = arith.mulf %346, %8 : vector<8x90xf32>
    %c17_89 = arith.constant 17 : index
    %348 = memref.load %arg1[%c17_89] : memref<20xf32, #tpu.memory_space<smem>>
    %349 = vector.broadcast %348 : f32 to vector<8x90xf32>
    %350 = arith.mulf %349, %10 : vector<8x90xf32>
    %c18_90 = arith.constant 18 : index
    %351 = memref.load %arg1[%c18_90] : memref<20xf32, #tpu.memory_space<smem>>
    %352 = vector.broadcast %351 : f32 to vector<8x90xf32>
    %353 = arith.mulf %352, %12 : vector<8x90xf32>
    %c19_91 = arith.constant 19 : index
    %354 = memref.load %arg1[%c19_91] : memref<20xf32, #tpu.memory_space<smem>>
    %355 = vector.broadcast %354 : f32 to vector<8x90xf32>
    %356 = arith.mulf %355, %14 : vector<8x90xf32>
    %357 = arith.addf %344, %347 : vector<8x90xf32>
    %358 = arith.addf %350, %353 : vector<8x90xf32>
    %359 = arith.addf %357, %358 : vector<8x90xf32>
    %360 = arith.addf %359, %356 : vector<8x90xf32>
    %c15_92 = arith.constant 15 : index
    %361 = memref.load %arg1[%c15_92] : memref<20xf32, #tpu.memory_space<smem>>
    %362 = vector.broadcast %361 : f32 to vector<8x90xf32>
    %363 = arith.mulf %362, %8 : vector<8x90xf32>
    %c16_93 = arith.constant 16 : index
    %364 = memref.load %arg1[%c16_93] : memref<20xf32, #tpu.memory_space<smem>>
    %365 = vector.broadcast %364 : f32 to vector<8x90xf32>
    %366 = arith.mulf %365, %10 : vector<8x90xf32>
    %c17_94 = arith.constant 17 : index
    %367 = memref.load %arg1[%c17_94] : memref<20xf32, #tpu.memory_space<smem>>
    %368 = vector.broadcast %367 : f32 to vector<8x90xf32>
    %369 = arith.mulf %368, %12 : vector<8x90xf32>
    %c18_95 = arith.constant 18 : index
    %370 = memref.load %arg1[%c18_95] : memref<20xf32, #tpu.memory_space<smem>>
    %371 = vector.broadcast %370 : f32 to vector<8x90xf32>
    %372 = arith.mulf %371, %14 : vector<8x90xf32>
    %c19_96 = arith.constant 19 : index
    %373 = memref.load %arg1[%c19_96] : memref<20xf32, #tpu.memory_space<smem>>
    %374 = vector.broadcast %373 : f32 to vector<8x90xf32>
    %375 = arith.mulf %374, %16 : vector<8x90xf32>
    %376 = arith.addf %363, %366 : vector<8x90xf32>
    %377 = arith.addf %369, %372 : vector<8x90xf32>
    %378 = arith.addf %376, %377 : vector<8x90xf32>
    %379 = arith.addf %378, %375 : vector<8x90xf32>
    %c3_97 = arith.constant 3 : index
    %380 = memref.load %arg2[%c3_97] : memref<4xf32, #tpu.memory_space<smem>>
    %381 = arith.maximumf %322, %341 : vector<8x90xf32>
    %382 = vector.broadcast %380 : f32 to vector<8x90xf32>
    %383 = arith.addf %381, %382 : vector<8x90xf32>
    %cst_98 = arith.constant 0.000000e+00 : f32
    %384 = vector.broadcast %cst_98 : f32 to vector<8x90xf32>
    %385 = arith.maximumf %383, %384 : vector<8x90xf32>
    %386 = arith.maximumf %360, %379 : vector<8x90xf32>
    %387 = vector.broadcast %380 : f32 to vector<8x90xf32>
    %388 = arith.addf %386, %387 : vector<8x90xf32>
    %cst_99 = arith.constant 0.000000e+00 : f32
    %389 = vector.broadcast %cst_99 : f32 to vector<8x90xf32>
    %390 = arith.maximumf %388, %389 : vector<8x90xf32>
    %391 = tpu.concatenate %17, %385, %18 in 1 : vector<8x2xf32>, vector<8x90xf32>, vector<8x36xf32> -> vector<8x128xf32>
    %c0_100 = arith.constant 0 : index
    %c3_101 = arith.constant 3 : index
    %c0_102 = arith.constant 0 : index
    %c0_103 = arith.constant 0 : index
    %392 = vector.load %arg11[%c0_100, %c3_101, %c0_102, %c0_103] : memref<2x4x8x128xf32, #tpu.memory_space<vmem>>, vector<1x1x8x128xf32>
    %393 = vector.shape_cast %392 : vector<1x1x8x128xf32> to vector<8x128xf32>
    %394 = vector.shape_cast %391 : vector<8x128xf32> to vector<1x1x8x128xf32>
    tpu.vector_store %arg11[%c0_100, %c3_101, %c0_102, %c0_103], %394 {strides = array<i32>} : memref<2x4x8x128xf32, #tpu.memory_space<vmem>>, vector<1x1x8x128xf32>,
    %395 = tpu.concatenate %17, %390, %18 in 1 : vector<8x2xf32>, vector<8x90xf32>, vector<8x36xf32> -> vector<8x128xf32>
    %c1_104 = arith.constant 1 : index
    %c3_105 = arith.constant 3 : index
    %c0_106 = arith.constant 0 : index
    %c0_107 = arith.constant 0 : index
    %396 = vector.load %arg11[%c1_104, %c3_105, %c0_106, %c0_107] : memref<2x4x8x128xf32, #tpu.memory_space<vmem>>, vector<1x1x8x128xf32>
    %397 = vector.shape_cast %396 : vector<1x1x8x128xf32> to vector<8x128xf32>
    %398 = vector.shape_cast %395 : vector<8x128xf32> to vector<1x1x8x128xf32>
    tpu.vector_store %arg11[%c1_104, %c3_105, %c0_106, %c0_107], %398 {strides = array<i32>} : memref<2x4x8x128xf32, #tpu.memory_space<vmem>>, vector<1x1x8x128xf32>,
    %c1_108 = arith.constant 1 : index
    %c0_109 = arith.constant 0 : index
    %c0_110 = arith.constant 0 : index
    %c1_111 = arith.constant 1 : index
    %399 = vector.load %arg11[%c1_108, %c0_109, %c0_110, %c1_111] : memref<2x4x8x128xf32, #tpu.memory_space<vmem>>, vector<1x1x8x90xf32>
    %400 = vector.shape_cast %399 : vector<1x1x8x90xf32> to vector<8x90xf32>
    %c0_112 = arith.constant 0 : index
    %c0_113 = arith.constant 0 : index
    %c0_114 = arith.constant 0 : index
    %c2_115 = arith.constant 2 : index
    %401 = vector.load %arg11[%c0_112, %c0_113, %c0_114, %c2_115] : memref<2x4x8x128xf32, #tpu.memory_space<vmem>>, vector<1x1x8x90xf32>
    %402 = vector.shape_cast %401 : vector<1x1x8x90xf32> to vector<8x90xf32>
    %c1_116 = arith.constant 1 : index
    %c0_117 = arith.constant 0 : index
    %c0_118 = arith.constant 0 : index
    %c2_119 = arith.constant 2 : index
    %403 = vector.load %arg11[%c1_116, %c0_117, %c0_118, %c2_119] : memref<2x4x8x128xf32, #tpu.memory_space<vmem>>, vector<1x1x8x90xf32>
    %404 = vector.shape_cast %403 : vector<1x1x8x90xf32> to vector<8x90xf32>
    %c0_120 = arith.constant 0 : index
    %c0_121 = arith.constant 0 : index
    %c0_122 = arith.constant 0 : index
    %c3_123 = arith.constant 3 : index
    %405 = vector.load %arg11[%c0_120, %c0_121, %c0_122, %c3_123] : memref<2x4x8x128xf32, #tpu.memory_space<vmem>>, vector<1x1x8x90xf32>
    %406 = vector.shape_cast %405 : vector<1x1x8x90xf32> to vector<8x90xf32>
    %c1_124 = arith.constant 1 : index
    %c1_125 = arith.constant 1 : index
    %c0_126 = arith.constant 0 : index
    %c1_127 = arith.constant 1 : index
    %407 = vector.load %arg11[%c1_124, %c1_125, %c0_126, %c1_127] : memref<2x4x8x128xf32, #tpu.memory_space<vmem>>, vector<1x1x8x90xf32>
    %408 = vector.shape_cast %407 : vector<1x1x8x90xf32> to vector<8x90xf32>
    %c0_128 = arith.constant 0 : index
    %c1_129 = arith.constant 1 : index
    %c0_130 = arith.constant 0 : index
    %c2_131 = arith.constant 2 : index
    %409 = vector.load %arg11[%c0_128, %c1_129, %c0_130, %c2_131] : memref<2x4x8x128xf32, #tpu.memory_space<vmem>>, vector<1x1x8x90xf32>
    %410 = vector.shape_cast %409 : vector<1x1x8x90xf32> to vector<8x90xf32>
    %c1_132 = arith.constant 1 : index
    %c1_133 = arith.constant 1 : index
    %c0_134 = arith.constant 0 : index
    %c2_135 = arith.constant 2 : index
    %411 = vector.load %arg11[%c1_132, %c1_133, %c0_134, %c2_135] : memref<2x4x8x128xf32, #tpu.memory_space<vmem>>, vector<1x1x8x90xf32>
    %412 = vector.shape_cast %411 : vector<1x1x8x90xf32> to vector<8x90xf32>
    %c0_136 = arith.constant 0 : index
    %c1_137 = arith.constant 1 : index
    %c0_138 = arith.constant 0 : index
    %c3_139 = arith.constant 3 : index
    %413 = vector.load %arg11[%c0_136, %c1_137, %c0_138, %c3_139] : memref<2x4x8x128xf32, #tpu.memory_space<vmem>>, vector<1x1x8x90xf32>
    %414 = vector.shape_cast %413 : vector<1x1x8x90xf32> to vector<8x90xf32>
    %c1_140 = arith.constant 1 : index
    %c2_141 = arith.constant 2 : index
    %c0_142 = arith.constant 0 : index
    %c1_143 = arith.constant 1 : index
    %415 = vector.load %arg11[%c1_140, %c2_141, %c0_142, %c1_143] : memref<2x4x8x128xf32, #tpu.memory_space<vmem>>, vector<1x1x8x90xf32>
    %416 = vector.shape_cast %415 : vector<1x1x8x90xf32> to vector<8x90xf32>
    %c0_144 = arith.constant 0 : index
    %c2_145 = arith.constant 2 : index
    %c0_146 = arith.constant 0 : index
    %c2_147 = arith.constant 2 : index
    %417 = vector.load %arg11[%c0_144, %c2_145, %c0_146, %c2_147] : memref<2x4x8x128xf32, #tpu.memory_space<vmem>>, vector<1x1x8x90xf32>
    %418 = vector.shape_cast %417 : vector<1x1x8x90xf32> to vector<8x90xf32>
    %c1_148 = arith.constant 1 : index
    %c2_149 = arith.constant 2 : index
    %c0_150 = arith.constant 0 : index
    %c2_151 = arith.constant 2 : index
    %419 = vector.load %arg11[%c1_148, %c2_149, %c0_150, %c2_151] : memref<2x4x8x128xf32, #tpu.memory_space<vmem>>, vector<1x1x8x90xf32>
    %420 = vector.shape_cast %419 : vector<1x1x8x90xf32> to vector<8x90xf32>
    %c0_152 = arith.constant 0 : index
    %c2_153 = arith.constant 2 : index
    %c0_154 = arith.constant 0 : index
    %c3_155 = arith.constant 3 : index
    %421 = vector.load %arg11[%c0_152, %c2_153, %c0_154, %c3_155] : memref<2x4x8x128xf32, #tpu.memory_space<vmem>>, vector<1x1x8x90xf32>
    %422 = vector.shape_cast %421 : vector<1x1x8x90xf32> to vector<8x90xf32>
    %c1_156 = arith.constant 1 : index
    %c3_157 = arith.constant 3 : index
    %c0_158 = arith.constant 0 : index
    %c1_159 = arith.constant 1 : index
    %423 = vector.load %arg11[%c1_156, %c3_157, %c0_158, %c1_159] : memref<2x4x8x128xf32, #tpu.memory_space<vmem>>, vector<1x1x8x90xf32>
    %424 = vector.shape_cast %423 : vector<1x1x8x90xf32> to vector<8x90xf32>
    %c0_160 = arith.constant 0 : index
    %c3_161 = arith.constant 3 : index
    %c0_162 = arith.constant 0 : index
    %c2_163 = arith.constant 2 : index
    %425 = vector.load %arg11[%c0_160, %c3_161, %c0_162, %c2_163] : memref<2x4x8x128xf32, #tpu.memory_space<vmem>>, vector<1x1x8x90xf32>
    %426 = vector.shape_cast %425 : vector<1x1x8x90xf32> to vector<8x90xf32>
    %c1_164 = arith.constant 1 : index
    %c3_165 = arith.constant 3 : index
    %c0_166 = arith.constant 0 : index
    %c2_167 = arith.constant 2 : index
    %427 = vector.load %arg11[%c1_164, %c3_165, %c0_166, %c2_167] : memref<2x4x8x128xf32, #tpu.memory_space<vmem>>, vector<1x1x8x90xf32>
    %428 = vector.shape_cast %427 : vector<1x1x8x90xf32> to vector<8x90xf32>
    %c0_168 = arith.constant 0 : index
    %c3_169 = arith.constant 3 : index
    %c0_170 = arith.constant 0 : index
    %c3_171 = arith.constant 3 : index
    %429 = vector.load %arg11[%c0_168, %c3_169, %c0_170, %c3_171] : memref<2x4x8x128xf32, #tpu.memory_space<vmem>>, vector<1x1x8x90xf32>
    %430 = vector.shape_cast %429 : vector<1x1x8x90xf32> to vector<8x90xf32>
    %cst_172 = arith.constant 0.000000e+00 : f32
    %431 = vector.broadcast %cst_172 : f32 to vector<8x38xf32>
    %c0_173 = arith.constant 0 : index
    %432 = memref.load %arg3[%c0_173] : memref<96xf32, #tpu.memory_space<smem>>
    %433 = vector.broadcast %432 : f32 to vector<8x90xf32>
    %434 = arith.mulf %433, %400 : vector<8x90xf32>
    %435 = vector.broadcast %432 : f32 to vector<8x90xf32>
    %436 = arith.mulf %435, %402 : vector<8x90xf32>
    %c1_174 = arith.constant 1 : index
    %437 = memref.load %arg3[%c1_174] : memref<96xf32, #tpu.memory_space<smem>>
    %438 = vector.broadcast %437 : f32 to vector<8x90xf32>
    %439 = arith.mulf %438, %402 : vector<8x90xf32>
    %440 = vector.broadcast %437 : f32 to vector<8x90xf32>
    %441 = arith.mulf %440, %404 : vector<8x90xf32>
    %c2_175 = arith.constant 2 : index
    %442 = memref.load %arg3[%c2_175] : memref<96xf32, #tpu.memory_space<smem>>
    %443 = vector.broadcast %442 : f32 to vector<8x90xf32>
    %444 = arith.mulf %443, %404 : vector<8x90xf32>
    %445 = vector.broadcast %442 : f32 to vector<8x90xf32>
    %446 = arith.mulf %445, %406 : vector<8x90xf32>
    %c3_176 = arith.constant 3 : index
    %447 = memref.load %arg3[%c3_176] : memref<96xf32, #tpu.memory_space<smem>>
    %448 = vector.broadcast %447 : f32 to vector<8x90xf32>
    %449 = arith.mulf %448, %408 : vector<8x90xf32>
    %450 = vector.broadcast %447 : f32 to vector<8x90xf32>
    %451 = arith.mulf %450, %410 : vector<8x90xf32>
    %c4_177 = arith.constant 4 : index
    %452 = memref.load %arg3[%c4_177] : memref<96xf32, #tpu.memory_space<smem>>
    %453 = vector.broadcast %452 : f32 to vector<8x90xf32>
    %454 = arith.mulf %453, %410 : vector<8x90xf32>
    %455 = vector.broadcast %452 : f32 to vector<8x90xf32>
    %456 = arith.mulf %455, %412 : vector<8x90xf32>
    %c5_178 = arith.constant 5 : index
    %457 = memref.load %arg3[%c5_178] : memref<96xf32, #tpu.memory_space<smem>>
    %458 = vector.broadcast %457 : f32 to vector<8x90xf32>
    %459 = arith.mulf %458, %412 : vector<8x90xf32>
    %460 = vector.broadcast %457 : f32 to vector<8x90xf32>
    %461 = arith.mulf %460, %414 : vector<8x90xf32>
    %c6_179 = arith.constant 6 : index
    %462 = memref.load %arg3[%c6_179] : memref<96xf32, #tpu.memory_space<smem>>
    %463 = vector.broadcast %462 : f32 to vector<8x90xf32>
    %464 = arith.mulf %463, %416 : vector<8x90xf32>
    %465 = vector.broadcast %462 : f32 to vector<8x90xf32>
    %466 = arith.mulf %465, %418 : vector<8x90xf32>
    %c7_180 = arith.constant 7 : index
    %467 = memref.load %arg3[%c7_180] : memref<96xf32, #tpu.memory_space<smem>>
    %468 = vector.broadcast %467 : f32 to vector<8x90xf32>
    %469 = arith.mulf %468, %418 : vector<8x90xf32>
    %470 = vector.broadcast %467 : f32 to vector<8x90xf32>
    %471 = arith.mulf %470, %420 : vector<8x90xf32>
    %c8_181 = arith.constant 8 : index
    %472 = memref.load %arg3[%c8_181] : memref<96xf32, #tpu.memory_space<smem>>
    %473 = vector.broadcast %472 : f32 to vector<8x90xf32>
    %474 = arith.mulf %473, %420 : vector<8x90xf32>
    %475 = vector.broadcast %472 : f32 to vector<8x90xf32>
    %476 = arith.mulf %475, %422 : vector<8x90xf32>
    %c9_182 = arith.constant 9 : index
    %477 = memref.load %arg3[%c9_182] : memref<96xf32, #tpu.memory_space<smem>>
    %478 = vector.broadcast %477 : f32 to vector<8x90xf32>
    %479 = arith.mulf %478, %424 : vector<8x90xf32>
    %480 = vector.broadcast %477 : f32 to vector<8x90xf32>
    %481 = arith.mulf %480, %426 : vector<8x90xf32>
    %c10_183 = arith.constant 10 : index
    %482 = memref.load %arg3[%c10_183] : memref<96xf32, #tpu.memory_space<smem>>
    %483 = vector.broadcast %482 : f32 to vector<8x90xf32>
    %484 = arith.mulf %483, %426 : vector<8x90xf32>
    %485 = vector.broadcast %482 : f32 to vector<8x90xf32>
    %486 = arith.mulf %485, %428 : vector<8x90xf32>
    %c11_184 = arith.constant 11 : index
    %487 = memref.load %arg3[%c11_184] : memref<96xf32, #tpu.memory_space<smem>>
    %488 = vector.broadcast %487 : f32 to vector<8x90xf32>
    %489 = arith.mulf %488, %428 : vector<8x90xf32>
    %490 = vector.broadcast %487 : f32 to vector<8x90xf32>
    %491 = arith.mulf %490, %430 : vector<8x90xf32>
    %c0_185 = arith.constant 0 : index
    %492 = memref.load %arg4[%c0_185] : memref<8xf32, #tpu.memory_space<smem>>
    %493 = arith.addf %434, %439 : vector<8x90xf32>
    %494 = arith.addf %444, %449 : vector<8x90xf32>
    %495 = arith.addf %454, %459 : vector<8x90xf32>
    %496 = arith.addf %464, %469 : vector<8x90xf32>
    %497 = arith.addf %474, %479 : vector<8x90xf32>
    %498 = arith.addf %484, %489 : vector<8x90xf32>
    %499 = arith.addf %493, %494 : vector<8x90xf32>
    %500 = arith.addf %495, %496 : vector<8x90xf32>
    %501 = arith.addf %497, %498 : vector<8x90xf32>
    %502 = arith.addf %499, %500 : vector<8x90xf32>
    %503 = arith.addf %502, %501 : vector<8x90xf32>
    %504 = arith.addf %436, %441 : vector<8x90xf32>
    %505 = arith.addf %446, %451 : vector<8x90xf32>
    %506 = arith.addf %456, %461 : vector<8x90xf32>
    %507 = arith.addf %466, %471 : vector<8x90xf32>
    %508 = arith.addf %476, %481 : vector<8x90xf32>
    %509 = arith.addf %486, %491 : vector<8x90xf32>
    %510 = arith.addf %504, %505 : vector<8x90xf32>
    %511 = arith.addf %506, %507 : vector<8x90xf32>
    %512 = arith.addf %508, %509 : vector<8x90xf32>
    %513 = arith.addf %510, %511 : vector<8x90xf32>
    %514 = arith.addf %513, %512 : vector<8x90xf32>
    %515 = arith.maximumf %503, %514 : vector<8x90xf32>
    %516 = vector.broadcast %492 : f32 to vector<8x90xf32>
    %517 = arith.addf %515, %516 : vector<8x90xf32>
    %cst_186 = arith.constant 0.000000e+00 : f32
    %518 = vector.broadcast %cst_186 : f32 to vector<8x90xf32>
    %519 = arith.maximumf %517, %518 : vector<8x90xf32>
    %520 = tpu.concatenate %519, %431 in 1 : vector<8x90xf32>, vector<8x38xf32> -> vector<8x128xf32>
    %521 = arith.truncf %520 : vector<8x128xf32> to vector<8x128xbf16>
    %c0_187 = arith.constant 0 : index
    %c0_188 = arith.constant 0 : index
    %522 = vector.load %arg12[%c0_187, %c0_188] : memref<8x1024xbf16, #tpu.memory_space<vmem>>, vector<8x128xbf16>
    tpu.vector_store %arg12[%c0_187, %c0_188], %521 {strides = array<i32>} : memref<8x1024xbf16, #tpu.memory_space<vmem>>, vector<8x128xbf16>,
    %c12_189 = arith.constant 12 : index
    %523 = memref.load %arg3[%c12_189] : memref<96xf32, #tpu.memory_space<smem>>
    %524 = vector.broadcast %523 : f32 to vector<8x90xf32>
    %525 = arith.mulf %524, %400 : vector<8x90xf32>
    %526 = vector.broadcast %523 : f32 to vector<8x90xf32>
    %527 = arith.mulf %526, %402 : vector<8x90xf32>
    %c13_190 = arith.constant 13 : index
    %528 = memref.load %arg3[%c13_190] : memref<96xf32, #tpu.memory_space<smem>>
    %529 = vector.broadcast %528 : f32 to vector<8x90xf32>
    %530 = arith.mulf %529, %402 : vector<8x90xf32>
    %531 = vector.broadcast %528 : f32 to vector<8x90xf32>
    %532 = arith.mulf %531, %404 : vector<8x90xf32>
    %c14_191 = arith.constant 14 : index
    %533 = memref.load %arg3[%c14_191] : memref<96xf32, #tpu.memory_space<smem>>
    %534 = vector.broadcast %533 : f32 to vector<8x90xf32>
    %535 = arith.mulf %534, %404 : vector<8x90xf32>
    %536 = vector.broadcast %533 : f32 to vector<8x90xf32>
    %537 = arith.mulf %536, %406 : vector<8x90xf32>
    %c15_192 = arith.constant 15 : index
    %538 = memref.load %arg3[%c15_192] : memref<96xf32, #tpu.memory_space<smem>>
    %539 = vector.broadcast %538 : f32 to vector<8x90xf32>
    %540 = arith.mulf %539, %408 : vector<8x90xf32>
    %541 = vector.broadcast %538 : f32 to vector<8x90xf32>
    %542 = arith.mulf %541, %410 : vector<8x90xf32>
    %c16_193 = arith.constant 16 : index
    %543 = memref.load %arg3[%c16_193] : memref<96xf32, #tpu.memory_space<smem>>
    %544 = vector.broadcast %543 : f32 to vector<8x90xf32>
    %545 = arith.mulf %544, %410 : vector<8x90xf32>
    %546 = vector.broadcast %543 : f32 to vector<8x90xf32>
    %547 = arith.mulf %546, %412 : vector<8x90xf32>
    %c17_194 = arith.constant 17 : index
    %548 = memref.load %arg3[%c17_194] : memref<96xf32, #tpu.memory_space<smem>>
    %549 = vector.broadcast %548 : f32 to vector<8x90xf32>
    %550 = arith.mulf %549, %412 : vector<8x90xf32>
    %551 = vector.broadcast %548 : f32 to vector<8x90xf32>
    %552 = arith.mulf %551, %414 : vector<8x90xf32>
    %c18_195 = arith.constant 18 : index
    %553 = memref.load %arg3[%c18_195] : memref<96xf32, #tpu.memory_space<smem>>
    %554 = vector.broadcast %553 : f32 to vector<8x90xf32>
    %555 = arith.mulf %554, %416 : vector<8x90xf32>
    %556 = vector.broadcast %553 : f32 to vector<8x90xf32>
    %557 = arith.mulf %556, %418 : vector<8x90xf32>
    %c19_196 = arith.constant 19 : index
    %558 = memref.load %arg3[%c19_196] : memref<96xf32, #tpu.memory_space<smem>>
    %559 = vector.broadcast %558 : f32 to vector<8x90xf32>
    %560 = arith.mulf %559, %418 : vector<8x90xf32>
    %561 = vector.broadcast %558 : f32 to vector<8x90xf32>
    %562 = arith.mulf %561, %420 : vector<8x90xf32>
    %c20 = arith.constant 20 : index
    %563 = memref.load %arg3[%c20] : memref<96xf32, #tpu.memory_space<smem>>
    %564 = vector.broadcast %563 : f32 to vector<8x90xf32>
    %565 = arith.mulf %564, %420 : vector<8x90xf32>
    %566 = vector.broadcast %563 : f32 to vector<8x90xf32>
    %567 = arith.mulf %566, %422 : vector<8x90xf32>
    %c21 = arith.constant 21 : index
    %568 = memref.load %arg3[%c21] : memref<96xf32, #tpu.memory_space<smem>>
    %569 = vector.broadcast %568 : f32 to vector<8x90xf32>
    %570 = arith.mulf %569, %424 : vector<8x90xf32>
    %571 = vector.broadcast %568 : f32 to vector<8x90xf32>
    %572 = arith.mulf %571, %426 : vector<8x90xf32>
    %c22 = arith.constant 22 : index
    %573 = memref.load %arg3[%c22] : memref<96xf32, #tpu.memory_space<smem>>
    %574 = vector.broadcast %573 : f32 to vector<8x90xf32>
    %575 = arith.mulf %574, %426 : vector<8x90xf32>
    %576 = vector.broadcast %573 : f32 to vector<8x90xf32>
    %577 = arith.mulf %576, %428 : vector<8x90xf32>
    %c23 = arith.constant 23 : index
    %578 = memref.load %arg3[%c23] : memref<96xf32, #tpu.memory_space<smem>>
    %579 = vector.broadcast %578 : f32 to vector<8x90xf32>
    %580 = arith.mulf %579, %428 : vector<8x90xf32>
    %581 = vector.broadcast %578 : f32 to vector<8x90xf32>
    %582 = arith.mulf %581, %430 : vector<8x90xf32>
    %c1_197 = arith.constant 1 : index
    %583 = memref.load %arg4[%c1_197] : memref<8xf32, #tpu.memory_space<smem>>
    %584 = arith.addf %525, %530 : vector<8x90xf32>
    %585 = arith.addf %535, %540 : vector<8x90xf32>
    %586 = arith.addf %545, %550 : vector<8x90xf32>
    %587 = arith.addf %555, %560 : vector<8x90xf32>
    %588 = arith.addf %565, %570 : vector<8x90xf32>
    %589 = arith.addf %575, %580 : vector<8x90xf32>
    %590 = arith.addf %584, %585 : vector<8x90xf32>
    %591 = arith.addf %586, %587 : vector<8x90xf32>
    %592 = arith.addf %588, %589 : vector<8x90xf32>
    %593 = arith.addf %590, %591 : vector<8x90xf32>
    %594 = arith.addf %593, %592 : vector<8x90xf32>
    %595 = arith.addf %527, %532 : vector<8x90xf32>
    %596 = arith.addf %537, %542 : vector<8x90xf32>
    %597 = arith.addf %547, %552 : vector<8x90xf32>
    %598 = arith.addf %557, %562 : vector<8x90xf32>
    %599 = arith.addf %567, %572 : vector<8x90xf32>
    %600 = arith.addf %577, %582 : vector<8x90xf32>
    %601 = arith.addf %595, %596 : vector<8x90xf32>
    %602 = arith.addf %597, %598 : vector<8x90xf32>
    %603 = arith.addf %599, %600 : vector<8x90xf32>
    %604 = arith.addf %601, %602 : vector<8x90xf32>
    %605 = arith.addf %604, %603 : vector<8x90xf32>
    %606 = arith.maximumf %594, %605 : vector<8x90xf32>
    %607 = vector.broadcast %583 : f32 to vector<8x90xf32>
    %608 = arith.addf %606, %607 : vector<8x90xf32>
    %cst_198 = arith.constant 0.000000e+00 : f32
    %609 = vector.broadcast %cst_198 : f32 to vector<8x90xf32>
    %610 = arith.maximumf %608, %609 : vector<8x90xf32>
    %611 = tpu.concatenate %610, %431 in 1 : vector<8x90xf32>, vector<8x38xf32> -> vector<8x128xf32>
    %612 = arith.truncf %611 : vector<8x128xf32> to vector<8x128xbf16>
    %c0_199 = arith.constant 0 : index
    %c128 = arith.constant 128 : index
    %613 = vector.load %arg12[%c0_199, %c128] : memref<8x1024xbf16, #tpu.memory_space<vmem>>, vector<8x128xbf16>
    tpu.vector_store %arg12[%c0_199, %c128], %612 {strides = array<i32>} : memref<8x1024xbf16, #tpu.memory_space<vmem>>, vector<8x128xbf16>,
    %c24 = arith.constant 24 : index
    %614 = memref.load %arg3[%c24] : memref<96xf32, #tpu.memory_space<smem>>
    %615 = vector.broadcast %614 : f32 to vector<8x90xf32>
    %616 = arith.mulf %615, %400 : vector<8x90xf32>
    %617 = vector.broadcast %614 : f32 to vector<8x90xf32>
    %618 = arith.mulf %617, %402 : vector<8x90xf32>
    %c25 = arith.constant 25 : index
    %619 = memref.load %arg3[%c25] : memref<96xf32, #tpu.memory_space<smem>>
    %620 = vector.broadcast %619 : f32 to vector<8x90xf32>
    %621 = arith.mulf %620, %402 : vector<8x90xf32>
    %622 = vector.broadcast %619 : f32 to vector<8x90xf32>
    %623 = arith.mulf %622, %404 : vector<8x90xf32>
    %c26 = arith.constant 26 : index
    %624 = memref.load %arg3[%c26] : memref<96xf32, #tpu.memory_space<smem>>
    %625 = vector.broadcast %624 : f32 to vector<8x90xf32>
    %626 = arith.mulf %625, %404 : vector<8x90xf32>
    %627 = vector.broadcast %624 : f32 to vector<8x90xf32>
    %628 = arith.mulf %627, %406 : vector<8x90xf32>
    %c27 = arith.constant 27 : index
    %629 = memref.load %arg3[%c27] : memref<96xf32, #tpu.memory_space<smem>>
    %630 = vector.broadcast %629 : f32 to vector<8x90xf32>
    %631 = arith.mulf %630, %408 : vector<8x90xf32>
    %632 = vector.broadcast %629 : f32 to vector<8x90xf32>
    %633 = arith.mulf %632, %410 : vector<8x90xf32>
    %c28 = arith.constant 28 : index
    %634 = memref.load %arg3[%c28] : memref<96xf32, #tpu.memory_space<smem>>
    %635 = vector.broadcast %634 : f32 to vector<8x90xf32>
    %636 = arith.mulf %635, %410 : vector<8x90xf32>
    %637 = vector.broadcast %634 : f32 to vector<8x90xf32>
    %638 = arith.mulf %637, %412 : vector<8x90xf32>
    %c29 = arith.constant 29 : index
    %639 = memref.load %arg3[%c29] : memref<96xf32, #tpu.memory_space<smem>>
    %640 = vector.broadcast %639 : f32 to vector<8x90xf32>
    %641 = arith.mulf %640, %412 : vector<8x90xf32>
    %642 = vector.broadcast %639 : f32 to vector<8x90xf32>
    %643 = arith.mulf %642, %414 : vector<8x90xf32>
    %c30 = arith.constant 30 : index
    %644 = memref.load %arg3[%c30] : memref<96xf32, #tpu.memory_space<smem>>
    %645 = vector.broadcast %644 : f32 to vector<8x90xf32>
    %646 = arith.mulf %645, %416 : vector<8x90xf32>
    %647 = vector.broadcast %644 : f32 to vector<8x90xf32>
    %648 = arith.mulf %647, %418 : vector<8x90xf32>
    %c31 = arith.constant 31 : index
    %649 = memref.load %arg3[%c31] : memref<96xf32, #tpu.memory_space<smem>>
    %650 = vector.broadcast %649 : f32 to vector<8x90xf32>
    %651 = arith.mulf %650, %418 : vector<8x90xf32>
    %652 = vector.broadcast %649 : f32 to vector<8x90xf32>
    %653 = arith.mulf %652, %420 : vector<8x90xf32>
    %c32 = arith.constant 32 : index
    %654 = memref.load %arg3[%c32] : memref<96xf32, #tpu.memory_space<smem>>
    %655 = vector.broadcast %654 : f32 to vector<8x90xf32>
    %656 = arith.mulf %655, %420 : vector<8x90xf32>
    %657 = vector.broadcast %654 : f32 to vector<8x90xf32>
    %658 = arith.mulf %657, %422 : vector<8x90xf32>
    %c33 = arith.constant 33 : index
    %659 = memref.load %arg3[%c33] : memref<96xf32, #tpu.memory_space<smem>>
    %660 = vector.broadcast %659 : f32 to vector<8x90xf32>
    %661 = arith.mulf %660, %424 : vector<8x90xf32>
    %662 = vector.broadcast %659 : f32 to vector<8x90xf32>
    %663 = arith.mulf %662, %426 : vector<8x90xf32>
    %c34 = arith.constant 34 : index
    %664 = memref.load %arg3[%c34] : memref<96xf32, #tpu.memory_space<smem>>
    %665 = vector.broadcast %664 : f32 to vector<8x90xf32>
    %666 = arith.mulf %665, %426 : vector<8x90xf32>
    %667 = vector.broadcast %664 : f32 to vector<8x90xf32>
    %668 = arith.mulf %667, %428 : vector<8x90xf32>
    %c35 = arith.constant 35 : index
    %669 = memref.load %arg3[%c35] : memref<96xf32, #tpu.memory_space<smem>>
    %670 = vector.broadcast %669 : f32 to vector<8x90xf32>
    %671 = arith.mulf %670, %428 : vector<8x90xf32>
    %672 = vector.broadcast %669 : f32 to vector<8x90xf32>
    %673 = arith.mulf %672, %430 : vector<8x90xf32>
    %c2_200 = arith.constant 2 : index
    %674 = memref.load %arg4[%c2_200] : memref<8xf32, #tpu.memory_space<smem>>
    %675 = arith.addf %616, %621 : vector<8x90xf32>
    %676 = arith.addf %626, %631 : vector<8x90xf32>
    %677 = arith.addf %636, %641 : vector<8x90xf32>
    %678 = arith.addf %646, %651 : vector<8x90xf32>
    %679 = arith.addf %656, %661 : vector<8x90xf32>
    %680 = arith.addf %666, %671 : vector<8x90xf32>
    %681 = arith.addf %675, %676 : vector<8x90xf32>
    %682 = arith.addf %677, %678 : vector<8x90xf32>
    %683 = arith.addf %679, %680 : vector<8x90xf32>
    %684 = arith.addf %681, %682 : vector<8x90xf32>
    %685 = arith.addf %684, %683 : vector<8x90xf32>
    %686 = arith.addf %618, %623 : vector<8x90xf32>
    %687 = arith.addf %628, %633 : vector<8x90xf32>
    %688 = arith.addf %638, %643 : vector<8x90xf32>
    %689 = arith.addf %648, %653 : vector<8x90xf32>
    %690 = arith.addf %658, %663 : vector<8x90xf32>
    %691 = arith.addf %668, %673 : vector<8x90xf32>
    %692 = arith.addf %686, %687 : vector<8x90xf32>
    %693 = arith.addf %688, %689 : vector<8x90xf32>
    %694 = arith.addf %690, %691 : vector<8x90xf32>
    %695 = arith.addf %692, %693 : vector<8x90xf32>
    %696 = arith.addf %695, %694 : vector<8x90xf32>
    %697 = arith.maximumf %685, %696 : vector<8x90xf32>
    %698 = vector.broadcast %674 : f32 to vector<8x90xf32>
    %699 = arith.addf %697, %698 : vector<8x90xf32>
    %cst_201 = arith.constant 0.000000e+00 : f32
    %700 = vector.broadcast %cst_201 : f32 to vector<8x90xf32>
    %701 = arith.maximumf %699, %700 : vector<8x90xf32>
    %702 = tpu.concatenate %701, %431 in 1 : vector<8x90xf32>, vector<8x38xf32> -> vector<8x128xf32>
    %703 = arith.truncf %702 : vector<8x128xf32> to vector<8x128xbf16>
    %c0_202 = arith.constant 0 : index
    %c256 = arith.constant 256 : index
    %704 = vector.load %arg12[%c0_202, %c256] : memref<8x1024xbf16, #tpu.memory_space<vmem>>, vector<8x128xbf16>
    tpu.vector_store %arg12[%c0_202, %c256], %703 {strides = array<i32>} : memref<8x1024xbf16, #tpu.memory_space<vmem>>, vector<8x128xbf16>,
    %c36 = arith.constant 36 : index
    %705 = memref.load %arg3[%c36] : memref<96xf32, #tpu.memory_space<smem>>
    %706 = vector.broadcast %705 : f32 to vector<8x90xf32>
    %707 = arith.mulf %706, %400 : vector<8x90xf32>
    %708 = vector.broadcast %705 : f32 to vector<8x90xf32>
    %709 = arith.mulf %708, %402 : vector<8x90xf32>
    %c37 = arith.constant 37 : index
    %710 = memref.load %arg3[%c37] : memref<96xf32, #tpu.memory_space<smem>>
    %711 = vector.broadcast %710 : f32 to vector<8x90xf32>
    %712 = arith.mulf %711, %402 : vector<8x90xf32>
    %713 = vector.broadcast %710 : f32 to vector<8x90xf32>
    %714 = arith.mulf %713, %404 : vector<8x90xf32>
    %c38 = arith.constant 38 : index
    %715 = memref.load %arg3[%c38] : memref<96xf32, #tpu.memory_space<smem>>
    %716 = vector.broadcast %715 : f32 to vector<8x90xf32>
    %717 = arith.mulf %716, %404 : vector<8x90xf32>
    %718 = vector.broadcast %715 : f32 to vector<8x90xf32>
    %719 = arith.mulf %718, %406 : vector<8x90xf32>
    %c39 = arith.constant 39 : index
    %720 = memref.load %arg3[%c39] : memref<96xf32, #tpu.memory_space<smem>>
    %721 = vector.broadcast %720 : f32 to vector<8x90xf32>
    %722 = arith.mulf %721, %408 : vector<8x90xf32>
    %723 = vector.broadcast %720 : f32 to vector<8x90xf32>
    %724 = arith.mulf %723, %410 : vector<8x90xf32>
    %c40 = arith.constant 40 : index
    %725 = memref.load %arg3[%c40] : memref<96xf32, #tpu.memory_space<smem>>
    %726 = vector.broadcast %725 : f32 to vector<8x90xf32>
    %727 = arith.mulf %726, %410 : vector<8x90xf32>
    %728 = vector.broadcast %725 : f32 to vector<8x90xf32>
    %729 = arith.mulf %728, %412 : vector<8x90xf32>
    %c41 = arith.constant 41 : index
    %730 = memref.load %arg3[%c41] : memref<96xf32, #tpu.memory_space<smem>>
    %731 = vector.broadcast %730 : f32 to vector<8x90xf32>
    %732 = arith.mulf %731, %412 : vector<8x90xf32>
    %733 = vector.broadcast %730 : f32 to vector<8x90xf32>
    %734 = arith.mulf %733, %414 : vector<8x90xf32>
    %c42 = arith.constant 42 : index
    %735 = memref.load %arg3[%c42] : memref<96xf32, #tpu.memory_space<smem>>
    %736 = vector.broadcast %735 : f32 to vector<8x90xf32>
    %737 = arith.mulf %736, %416 : vector<8x90xf32>
    %738 = vector.broadcast %735 : f32 to vector<8x90xf32>
    %739 = arith.mulf %738, %418 : vector<8x90xf32>
    %c43 = arith.constant 43 : index
    %740 = memref.load %arg3[%c43] : memref<96xf32, #tpu.memory_space<smem>>
    %741 = vector.broadcast %740 : f32 to vector<8x90xf32>
    %742 = arith.mulf %741, %418 : vector<8x90xf32>
    %743 = vector.broadcast %740 : f32 to vector<8x90xf32>
    %744 = arith.mulf %743, %420 : vector<8x90xf32>
    %c44 = arith.constant 44 : index
    %745 = memref.load %arg3[%c44] : memref<96xf32, #tpu.memory_space<smem>>
    %746 = vector.broadcast %745 : f32 to vector<8x90xf32>
    %747 = arith.mulf %746, %420 : vector<8x90xf32>
    %748 = vector.broadcast %745 : f32 to vector<8x90xf32>
    %749 = arith.mulf %748, %422 : vector<8x90xf32>
    %c45 = arith.constant 45 : index
    %750 = memref.load %arg3[%c45] : memref<96xf32, #tpu.memory_space<smem>>
    %751 = vector.broadcast %750 : f32 to vector<8x90xf32>
    %752 = arith.mulf %751, %424 : vector<8x90xf32>
    %753 = vector.broadcast %750 : f32 to vector<8x90xf32>
    %754 = arith.mulf %753, %426 : vector<8x90xf32>
    %c46 = arith.constant 46 : index
    %755 = memref.load %arg3[%c46] : memref<96xf32, #tpu.memory_space<smem>>
    %756 = vector.broadcast %755 : f32 to vector<8x90xf32>
    %757 = arith.mulf %756, %426 : vector<8x90xf32>
    %758 = vector.broadcast %755 : f32 to vector<8x90xf32>
    %759 = arith.mulf %758, %428 : vector<8x90xf32>
    %c47 = arith.constant 47 : index
    %760 = memref.load %arg3[%c47] : memref<96xf32, #tpu.memory_space<smem>>
    %761 = vector.broadcast %760 : f32 to vector<8x90xf32>
    %762 = arith.mulf %761, %428 : vector<8x90xf32>
    %763 = vector.broadcast %760 : f32 to vector<8x90xf32>
    %764 = arith.mulf %763, %430 : vector<8x90xf32>
    %c3_203 = arith.constant 3 : index
    %765 = memref.load %arg4[%c3_203] : memref<8xf32, #tpu.memory_space<smem>>
    %766 = arith.addf %707, %712 : vector<8x90xf32>
    %767 = arith.addf %717, %722 : vector<8x90xf32>
    %768 = arith.addf %727, %732 : vector<8x90xf32>
    %769 = arith.addf %737, %742 : vector<8x90xf32>
    %770 = arith.addf %747, %752 : vector<8x90xf32>
    %771 = arith.addf %757, %762 : vector<8x90xf32>
    %772 = arith.addf %766, %767 : vector<8x90xf32>
    %773 = arith.addf %768, %769 : vector<8x90xf32>
    %774 = arith.addf %770, %771 : vector<8x90xf32>
    %775 = arith.addf %772, %773 : vector<8x90xf32>
    %776 = arith.addf %775, %774 : vector<8x90xf32>
    %777 = arith.addf %709, %714 : vector<8x90xf32>
    %778 = arith.addf %719, %724 : vector<8x90xf32>
    %779 = arith.addf %729, %734 : vector<8x90xf32>
    %780 = arith.addf %739, %744 : vector<8x90xf32>
    %781 = arith.addf %749, %754 : vector<8x90xf32>
    %782 = arith.addf %759, %764 : vector<8x90xf32>
    %783 = arith.addf %777, %778 : vector<8x90xf32>
    %784 = arith.addf %779, %780 : vector<8x90xf32>
    %785 = arith.addf %781, %782 : vector<8x90xf32>
    %786 = arith.addf %783, %784 : vector<8x90xf32>
    %787 = arith.addf %786, %785 : vector<8x90xf32>
    %788 = arith.maximumf %776, %787 : vector<8x90xf32>
    %789 = vector.broadcast %765 : f32 to vector<8x90xf32>
    %790 = arith.addf %788, %789 : vector<8x90xf32>
    %cst_204 = arith.constant 0.000000e+00 : f32
    %791 = vector.broadcast %cst_204 : f32 to vector<8x90xf32>
    %792 = arith.maximumf %790, %791 : vector<8x90xf32>
    %793 = tpu.concatenate %792, %431 in 1 : vector<8x90xf32>, vector<8x38xf32> -> vector<8x128xf32>
    %794 = arith.truncf %793 : vector<8x128xf32> to vector<8x128xbf16>
    %c0_205 = arith.constant 0 : index
    %c384 = arith.constant 384 : index
    %795 = vector.load %arg12[%c0_205, %c384] : memref<8x1024xbf16, #tpu.memory_space<vmem>>, vector<8x128xbf16>
    tpu.vector_store %arg12[%c0_205, %c384], %794 {strides = array<i32>} : memref<8x1024xbf16, #tpu.memory_space<vmem>>, vector<8x128xbf16>,
    %c48 = arith.constant 48 : index
    %796 = memref.load %arg3[%c48] : memref<96xf32, #tpu.memory_space<smem>>
    %797 = vector.broadcast %796 : f32 to vector<8x90xf32>
    %798 = arith.mulf %797, %400 : vector<8x90xf32>
    %799 = vector.broadcast %796 : f32 to vector<8x90xf32>
    %800 = arith.mulf %799, %402 : vector<8x90xf32>
    %c49 = arith.constant 49 : index
    %801 = memref.load %arg3[%c49] : memref<96xf32, #tpu.memory_space<smem>>
    %802 = vector.broadcast %801 : f32 to vector<8x90xf32>
    %803 = arith.mulf %802, %402 : vector<8x90xf32>
    %804 = vector.broadcast %801 : f32 to vector<8x90xf32>
    %805 = arith.mulf %804, %404 : vector<8x90xf32>
    %c50 = arith.constant 50 : index
    %806 = memref.load %arg3[%c50] : memref<96xf32, #tpu.memory_space<smem>>
    %807 = vector.broadcast %806 : f32 to vector<8x90xf32>
    %808 = arith.mulf %807, %404 : vector<8x90xf32>
    %809 = vector.broadcast %806 : f32 to vector<8x90xf32>
    %810 = arith.mulf %809, %406 : vector<8x90xf32>
    %c51 = arith.constant 51 : index
    %811 = memref.load %arg3[%c51] : memref<96xf32, #tpu.memory_space<smem>>
    %812 = vector.broadcast %811 : f32 to vector<8x90xf32>
    %813 = arith.mulf %812, %408 : vector<8x90xf32>
    %814 = vector.broadcast %811 : f32 to vector<8x90xf32>
    %815 = arith.mulf %814, %410 : vector<8x90xf32>
    %c52 = arith.constant 52 : index
    %816 = memref.load %arg3[%c52] : memref<96xf32, #tpu.memory_space<smem>>
    %817 = vector.broadcast %816 : f32 to vector<8x90xf32>
    %818 = arith.mulf %817, %410 : vector<8x90xf32>
    %819 = vector.broadcast %816 : f32 to vector<8x90xf32>
    %820 = arith.mulf %819, %412 : vector<8x90xf32>
    %c53 = arith.constant 53 : index
    %821 = memref.load %arg3[%c53] : memref<96xf32, #tpu.memory_space<smem>>
    %822 = vector.broadcast %821 : f32 to vector<8x90xf32>
    %823 = arith.mulf %822, %412 : vector<8x90xf32>
    %824 = vector.broadcast %821 : f32 to vector<8x90xf32>
    %825 = arith.mulf %824, %414 : vector<8x90xf32>
    %c54 = arith.constant 54 : index
    %826 = memref.load %arg3[%c54] : memref<96xf32, #tpu.memory_space<smem>>
    %827 = vector.broadcast %826 : f32 to vector<8x90xf32>
    %828 = arith.mulf %827, %416 : vector<8x90xf32>
    %829 = vector.broadcast %826 : f32 to vector<8x90xf32>
    %830 = arith.mulf %829, %418 : vector<8x90xf32>
    %c55 = arith.constant 55 : index
    %831 = memref.load %arg3[%c55] : memref<96xf32, #tpu.memory_space<smem>>
    %832 = vector.broadcast %831 : f32 to vector<8x90xf32>
    %833 = arith.mulf %832, %418 : vector<8x90xf32>
    %834 = vector.broadcast %831 : f32 to vector<8x90xf32>
    %835 = arith.mulf %834, %420 : vector<8x90xf32>
    %c56 = arith.constant 56 : index
    %836 = memref.load %arg3[%c56] : memref<96xf32, #tpu.memory_space<smem>>
    %837 = vector.broadcast %836 : f32 to vector<8x90xf32>
    %838 = arith.mulf %837, %420 : vector<8x90xf32>
    %839 = vector.broadcast %836 : f32 to vector<8x90xf32>
    %840 = arith.mulf %839, %422 : vector<8x90xf32>
    %c57 = arith.constant 57 : index
    %841 = memref.load %arg3[%c57] : memref<96xf32, #tpu.memory_space<smem>>
    %842 = vector.broadcast %841 : f32 to vector<8x90xf32>
    %843 = arith.mulf %842, %424 : vector<8x90xf32>
    %844 = vector.broadcast %841 : f32 to vector<8x90xf32>
    %845 = arith.mulf %844, %426 : vector<8x90xf32>
    %c58 = arith.constant 58 : index
    %846 = memref.load %arg3[%c58] : memref<96xf32, #tpu.memory_space<smem>>
    %847 = vector.broadcast %846 : f32 to vector<8x90xf32>
    %848 = arith.mulf %847, %426 : vector<8x90xf32>
    %849 = vector.broadcast %846 : f32 to vector<8x90xf32>
    %850 = arith.mulf %849, %428 : vector<8x90xf32>
    %c59 = arith.constant 59 : index
    %851 = memref.load %arg3[%c59] : memref<96xf32, #tpu.memory_space<smem>>
    %852 = vector.broadcast %851 : f32 to vector<8x90xf32>
    %853 = arith.mulf %852, %428 : vector<8x90xf32>
    %854 = vector.broadcast %851 : f32 to vector<8x90xf32>
    %855 = arith.mulf %854, %430 : vector<8x90xf32>
    %c4_206 = arith.constant 4 : index
    %856 = memref.load %arg4[%c4_206] : memref<8xf32, #tpu.memory_space<smem>>
    %857 = arith.addf %798, %803 : vector<8x90xf32>
    %858 = arith.addf %808, %813 : vector<8x90xf32>
    %859 = arith.addf %818, %823 : vector<8x90xf32>
    %860 = arith.addf %828, %833 : vector<8x90xf32>
    %861 = arith.addf %838, %843 : vector<8x90xf32>
    %862 = arith.addf %848, %853 : vector<8x90xf32>
    %863 = arith.addf %857, %858 : vector<8x90xf32>
    %864 = arith.addf %859, %860 : vector<8x90xf32>
    %865 = arith.addf %861, %862 : vector<8x90xf32>
    %866 = arith.addf %863, %864 : vector<8x90xf32>
    %867 = arith.addf %866, %865 : vector<8x90xf32>
    %868 = arith.addf %800, %805 : vector<8x90xf32>
    %869 = arith.addf %810, %815 : vector<8x90xf32>
    %870 = arith.addf %820, %825 : vector<8x90xf32>
    %871 = arith.addf %830, %835 : vector<8x90xf32>
    %872 = arith.addf %840, %845 : vector<8x90xf32>
    %873 = arith.addf %850, %855 : vector<8x90xf32>
    %874 = arith.addf %868, %869 : vector<8x90xf32>
    %875 = arith.addf %870, %871 : vector<8x90xf32>
    %876 = arith.addf %872, %873 : vector<8x90xf32>
    %877 = arith.addf %874, %875 : vector<8x90xf32>
    %878 = arith.addf %877, %876 : vector<8x90xf32>
    %879 = arith.maximumf %867, %878 : vector<8x90xf32>
    %880 = vector.broadcast %856 : f32 to vector<8x90xf32>
    %881 = arith.addf %879, %880 : vector<8x90xf32>
    %cst_207 = arith.constant 0.000000e+00 : f32
    %882 = vector.broadcast %cst_207 : f32 to vector<8x90xf32>
    %883 = arith.maximumf %881, %882 : vector<8x90xf32>
    %884 = tpu.concatenate %883, %431 in 1 : vector<8x90xf32>, vector<8x38xf32> -> vector<8x128xf32>
    %885 = arith.truncf %884 : vector<8x128xf32> to vector<8x128xbf16>
    %c0_208 = arith.constant 0 : index
    %c512 = arith.constant 512 : index
    %886 = vector.load %arg12[%c0_208, %c512] : memref<8x1024xbf16, #tpu.memory_space<vmem>>, vector<8x128xbf16>
    tpu.vector_store %arg12[%c0_208, %c512], %885 {strides = array<i32>} : memref<8x1024xbf16, #tpu.memory_space<vmem>>, vector<8x128xbf16>,
    %c60 = arith.constant 60 : index
    %887 = memref.load %arg3[%c60] : memref<96xf32, #tpu.memory_space<smem>>
    %888 = vector.broadcast %887 : f32 to vector<8x90xf32>
    %889 = arith.mulf %888, %400 : vector<8x90xf32>
    %890 = vector.broadcast %887 : f32 to vector<8x90xf32>
    %891 = arith.mulf %890, %402 : vector<8x90xf32>
    %c61 = arith.constant 61 : index
    %892 = memref.load %arg3[%c61] : memref<96xf32, #tpu.memory_space<smem>>
    %893 = vector.broadcast %892 : f32 to vector<8x90xf32>
    %894 = arith.mulf %893, %402 : vector<8x90xf32>
    %895 = vector.broadcast %892 : f32 to vector<8x90xf32>
    %896 = arith.mulf %895, %404 : vector<8x90xf32>
    %c62 = arith.constant 62 : index
    %897 = memref.load %arg3[%c62] : memref<96xf32, #tpu.memory_space<smem>>
    %898 = vector.broadcast %897 : f32 to vector<8x90xf32>
    %899 = arith.mulf %898, %404 : vector<8x90xf32>
    %900 = vector.broadcast %897 : f32 to vector<8x90xf32>
    %901 = arith.mulf %900, %406 : vector<8x90xf32>
    %c63 = arith.constant 63 : index
    %902 = memref.load %arg3[%c63] : memref<96xf32, #tpu.memory_space<smem>>
    %903 = vector.broadcast %902 : f32 to vector<8x90xf32>
    %904 = arith.mulf %903, %408 : vector<8x90xf32>
    %905 = vector.broadcast %902 : f32 to vector<8x90xf32>
    %906 = arith.mulf %905, %410 : vector<8x90xf32>
    %c64 = arith.constant 64 : index
    %907 = memref.load %arg3[%c64] : memref<96xf32, #tpu.memory_space<smem>>
    %908 = vector.broadcast %907 : f32 to vector<8x90xf32>
    %909 = arith.mulf %908, %410 : vector<8x90xf32>
    %910 = vector.broadcast %907 : f32 to vector<8x90xf32>
    %911 = arith.mulf %910, %412 : vector<8x90xf32>
    %c65 = arith.constant 65 : index
    %912 = memref.load %arg3[%c65] : memref<96xf32, #tpu.memory_space<smem>>
    %913 = vector.broadcast %912 : f32 to vector<8x90xf32>
    %914 = arith.mulf %913, %412 : vector<8x90xf32>
    %915 = vector.broadcast %912 : f32 to vector<8x90xf32>
    %916 = arith.mulf %915, %414 : vector<8x90xf32>
    %c66 = arith.constant 66 : index
    %917 = memref.load %arg3[%c66] : memref<96xf32, #tpu.memory_space<smem>>
    %918 = vector.broadcast %917 : f32 to vector<8x90xf32>
    %919 = arith.mulf %918, %416 : vector<8x90xf32>
    %920 = vector.broadcast %917 : f32 to vector<8x90xf32>
    %921 = arith.mulf %920, %418 : vector<8x90xf32>
    %c67 = arith.constant 67 : index
    %922 = memref.load %arg3[%c67] : memref<96xf32, #tpu.memory_space<smem>>
    %923 = vector.broadcast %922 : f32 to vector<8x90xf32>
    %924 = arith.mulf %923, %418 : vector<8x90xf32>
    %925 = vector.broadcast %922 : f32 to vector<8x90xf32>
    %926 = arith.mulf %925, %420 : vector<8x90xf32>
    %c68 = arith.constant 68 : index
    %927 = memref.load %arg3[%c68] : memref<96xf32, #tpu.memory_space<smem>>
    %928 = vector.broadcast %927 : f32 to vector<8x90xf32>
    %929 = arith.mulf %928, %420 : vector<8x90xf32>
    %930 = vector.broadcast %927 : f32 to vector<8x90xf32>
    %931 = arith.mulf %930, %422 : vector<8x90xf32>
    %c69 = arith.constant 69 : index
    %932 = memref.load %arg3[%c69] : memref<96xf32, #tpu.memory_space<smem>>
    %933 = vector.broadcast %932 : f32 to vector<8x90xf32>
    %934 = arith.mulf %933, %424 : vector<8x90xf32>
    %935 = vector.broadcast %932 : f32 to vector<8x90xf32>
    %936 = arith.mulf %935, %426 : vector<8x90xf32>
    %c70 = arith.constant 70 : index
    %937 = memref.load %arg3[%c70] : memref<96xf32, #tpu.memory_space<smem>>
    %938 = vector.broadcast %937 : f32 to vector<8x90xf32>
    %939 = arith.mulf %938, %426 : vector<8x90xf32>
    %940 = vector.broadcast %937 : f32 to vector<8x90xf32>
    %941 = arith.mulf %940, %428 : vector<8x90xf32>
    %c71 = arith.constant 71 : index
    %942 = memref.load %arg3[%c71] : memref<96xf32, #tpu.memory_space<smem>>
    %943 = vector.broadcast %942 : f32 to vector<8x90xf32>
    %944 = arith.mulf %943, %428 : vector<8x90xf32>
    %945 = vector.broadcast %942 : f32 to vector<8x90xf32>
    %946 = arith.mulf %945, %430 : vector<8x90xf32>
    %c5_209 = arith.constant 5 : index
    %947 = memref.load %arg4[%c5_209] : memref<8xf32, #tpu.memory_space<smem>>
    %948 = arith.addf %889, %894 : vector<8x90xf32>
    %949 = arith.addf %899, %904 : vector<8x90xf32>
    %950 = arith.addf %909, %914 : vector<8x90xf32>
    %951 = arith.addf %919, %924 : vector<8x90xf32>
    %952 = arith.addf %929, %934 : vector<8x90xf32>
    %953 = arith.addf %939, %944 : vector<8x90xf32>
    %954 = arith.addf %948, %949 : vector<8x90xf32>
    %955 = arith.addf %950, %951 : vector<8x90xf32>
    %956 = arith.addf %952, %953 : vector<8x90xf32>
    %957 = arith.addf %954, %955 : vector<8x90xf32>
    %958 = arith.addf %957, %956 : vector<8x90xf32>
    %959 = arith.addf %891, %896 : vector<8x90xf32>
    %960 = arith.addf %901, %906 : vector<8x90xf32>
    %961 = arith.addf %911, %916 : vector<8x90xf32>
    %962 = arith.addf %921, %926 : vector<8x90xf32>
    %963 = arith.addf %931, %936 : vector<8x90xf32>
    %964 = arith.addf %941, %946 : vector<8x90xf32>
    %965 = arith.addf %959, %960 : vector<8x90xf32>
    %966 = arith.addf %961, %962 : vector<8x90xf32>
    %967 = arith.addf %963, %964 : vector<8x90xf32>
    %968 = arith.addf %965, %966 : vector<8x90xf32>
    %969 = arith.addf %968, %967 : vector<8x90xf32>
    %970 = arith.maximumf %958, %969 : vector<8x90xf32>
    %971 = vector.broadcast %947 : f32 to vector<8x90xf32>
    %972 = arith.addf %970, %971 : vector<8x90xf32>
    %cst_210 = arith.constant 0.000000e+00 : f32
    %973 = vector.broadcast %cst_210 : f32 to vector<8x90xf32>
    %974 = arith.maximumf %972, %973 : vector<8x90xf32>
    %975 = tpu.concatenate %974, %431 in 1 : vector<8x90xf32>, vector<8x38xf32> -> vector<8x128xf32>
    %976 = arith.truncf %975 : vector<8x128xf32> to vector<8x128xbf16>
    %c0_211 = arith.constant 0 : index
    %c640 = arith.constant 640 : index
    %977 = vector.load %arg12[%c0_211, %c640] : memref<8x1024xbf16, #tpu.memory_space<vmem>>, vector<8x128xbf16>
    tpu.vector_store %arg12[%c0_211, %c640], %976 {strides = array<i32>} : memref<8x1024xbf16, #tpu.memory_space<vmem>>, vector<8x128xbf16>,
    %c72 = arith.constant 72 : index
    %978 = memref.load %arg3[%c72] : memref<96xf32, #tpu.memory_space<smem>>
    %979 = vector.broadcast %978 : f32 to vector<8x90xf32>
    %980 = arith.mulf %979, %400 : vector<8x90xf32>
    %981 = vector.broadcast %978 : f32 to vector<8x90xf32>
    %982 = arith.mulf %981, %402 : vector<8x90xf32>
    %c73 = arith.constant 73 : index
    %983 = memref.load %arg3[%c73] : memref<96xf32, #tpu.memory_space<smem>>
    %984 = vector.broadcast %983 : f32 to vector<8x90xf32>
    %985 = arith.mulf %984, %402 : vector<8x90xf32>
    %986 = vector.broadcast %983 : f32 to vector<8x90xf32>
    %987 = arith.mulf %986, %404 : vector<8x90xf32>
    %c74 = arith.constant 74 : index
    %988 = memref.load %arg3[%c74] : memref<96xf32, #tpu.memory_space<smem>>
    %989 = vector.broadcast %988 : f32 to vector<8x90xf32>
    %990 = arith.mulf %989, %404 : vector<8x90xf32>
    %991 = vector.broadcast %988 : f32 to vector<8x90xf32>
    %992 = arith.mulf %991, %406 : vector<8x90xf32>
    %c75 = arith.constant 75 : index
    %993 = memref.load %arg3[%c75] : memref<96xf32, #tpu.memory_space<smem>>
    %994 = vector.broadcast %993 : f32 to vector<8x90xf32>
    %995 = arith.mulf %994, %408 : vector<8x90xf32>
    %996 = vector.broadcast %993 : f32 to vector<8x90xf32>
    %997 = arith.mulf %996, %410 : vector<8x90xf32>
    %c76 = arith.constant 76 : index
    %998 = memref.load %arg3[%c76] : memref<96xf32, #tpu.memory_space<smem>>
    %999 = vector.broadcast %998 : f32 to vector<8x90xf32>
    %1000 = arith.mulf %999, %410 : vector<8x90xf32>
    %1001 = vector.broadcast %998 : f32 to vector<8x90xf32>
    %1002 = arith.mulf %1001, %412 : vector<8x90xf32>
    %c77 = arith.constant 77 : index
    %1003 = memref.load %arg3[%c77] : memref<96xf32, #tpu.memory_space<smem>>
    %1004 = vector.broadcast %1003 : f32 to vector<8x90xf32>
    %1005 = arith.mulf %1004, %412 : vector<8x90xf32>
    %1006 = vector.broadcast %1003 : f32 to vector<8x90xf32>
    %1007 = arith.mulf %1006, %414 : vector<8x90xf32>
    %c78 = arith.constant 78 : index
    %1008 = memref.load %arg3[%c78] : memref<96xf32, #tpu.memory_space<smem>>
    %1009 = vector.broadcast %1008 : f32 to vector<8x90xf32>
    %1010 = arith.mulf %1009, %416 : vector<8x90xf32>
    %1011 = vector.broadcast %1008 : f32 to vector<8x90xf32>
    %1012 = arith.mulf %1011, %418 : vector<8x90xf32>
    %c79 = arith.constant 79 : index
    %1013 = memref.load %arg3[%c79] : memref<96xf32, #tpu.memory_space<smem>>
    %1014 = vector.broadcast %1013 : f32 to vector<8x90xf32>
    %1015 = arith.mulf %1014, %418 : vector<8x90xf32>
    %1016 = vector.broadcast %1013 : f32 to vector<8x90xf32>
    %1017 = arith.mulf %1016, %420 : vector<8x90xf32>
    %c80 = arith.constant 80 : index
    %1018 = memref.load %arg3[%c80] : memref<96xf32, #tpu.memory_space<smem>>
    %1019 = vector.broadcast %1018 : f32 to vector<8x90xf32>
    %1020 = arith.mulf %1019, %420 : vector<8x90xf32>
    %1021 = vector.broadcast %1018 : f32 to vector<8x90xf32>
    %1022 = arith.mulf %1021, %422 : vector<8x90xf32>
    %c81 = arith.constant 81 : index
    %1023 = memref.load %arg3[%c81] : memref<96xf32, #tpu.memory_space<smem>>
    %1024 = vector.broadcast %1023 : f32 to vector<8x90xf32>
    %1025 = arith.mulf %1024, %424 : vector<8x90xf32>
    %1026 = vector.broadcast %1023 : f32 to vector<8x90xf32>
    %1027 = arith.mulf %1026, %426 : vector<8x90xf32>
    %c82 = arith.constant 82 : index
    %1028 = memref.load %arg3[%c82] : memref<96xf32, #tpu.memory_space<smem>>
    %1029 = vector.broadcast %1028 : f32 to vector<8x90xf32>
    %1030 = arith.mulf %1029, %426 : vector<8x90xf32>
    %1031 = vector.broadcast %1028 : f32 to vector<8x90xf32>
    %1032 = arith.mulf %1031, %428 : vector<8x90xf32>
    %c83 = arith.constant 83 : index
    %1033 = memref.load %arg3[%c83] : memref<96xf32, #tpu.memory_space<smem>>
    %1034 = vector.broadcast %1033 : f32 to vector<8x90xf32>
    %1035 = arith.mulf %1034, %428 : vector<8x90xf32>
    %1036 = vector.broadcast %1033 : f32 to vector<8x90xf32>
    %1037 = arith.mulf %1036, %430 : vector<8x90xf32>
    %c6_212 = arith.constant 6 : index
    %1038 = memref.load %arg4[%c6_212] : memref<8xf32, #tpu.memory_space<smem>>
    %1039 = arith.addf %980, %985 : vector<8x90xf32>
    %1040 = arith.addf %990, %995 : vector<8x90xf32>
    %1041 = arith.addf %1000, %1005 : vector<8x90xf32>
    %1042 = arith.addf %1010, %1015 : vector<8x90xf32>
    %1043 = arith.addf %1020, %1025 : vector<8x90xf32>
    %1044 = arith.addf %1030, %1035 : vector<8x90xf32>
    %1045 = arith.addf %1039, %1040 : vector<8x90xf32>
    %1046 = arith.addf %1041, %1042 : vector<8x90xf32>
    %1047 = arith.addf %1043, %1044 : vector<8x90xf32>
    %1048 = arith.addf %1045, %1046 : vector<8x90xf32>
    %1049 = arith.addf %1048, %1047 : vector<8x90xf32>
    %1050 = arith.addf %982, %987 : vector<8x90xf32>
    %1051 = arith.addf %992, %997 : vector<8x90xf32>
    %1052 = arith.addf %1002, %1007 : vector<8x90xf32>
    %1053 = arith.addf %1012, %1017 : vector<8x90xf32>
    %1054 = arith.addf %1022, %1027 : vector<8x90xf32>
    %1055 = arith.addf %1032, %1037 : vector<8x90xf32>
    %1056 = arith.addf %1050, %1051 : vector<8x90xf32>
    %1057 = arith.addf %1052, %1053 : vector<8x90xf32>
    %1058 = arith.addf %1054, %1055 : vector<8x90xf32>
    %1059 = arith.addf %1056, %1057 : vector<8x90xf32>
    %1060 = arith.addf %1059, %1058 : vector<8x90xf32>
    %1061 = arith.maximumf %1049, %1060 : vector<8x90xf32>
    %1062 = vector.broadcast %1038 : f32 to vector<8x90xf32>
    %1063 = arith.addf %1061, %1062 : vector<8x90xf32>
    %cst_213 = arith.constant 0.000000e+00 : f32
    %1064 = vector.broadcast %cst_213 : f32 to vector<8x90xf32>
    %1065 = arith.maximumf %1063, %1064 : vector<8x90xf32>
    %1066 = tpu.concatenate %1065, %431 in 1 : vector<8x90xf32>, vector<8x38xf32> -> vector<8x128xf32>
    %1067 = arith.truncf %1066 : vector<8x128xf32> to vector<8x128xbf16>
    %c0_214 = arith.constant 0 : index
    %c768 = arith.constant 768 : index
    %1068 = vector.load %arg12[%c0_214, %c768] : memref<8x1024xbf16, #tpu.memory_space<vmem>>, vector<8x128xbf16>
    tpu.vector_store %arg12[%c0_214, %c768], %1067 {strides = array<i32>} : memref<8x1024xbf16, #tpu.memory_space<vmem>>, vector<8x128xbf16>,
    %c84 = arith.constant 84 : index
    %1069 = memref.load %arg3[%c84] : memref<96xf32, #tpu.memory_space<smem>>
    %1070 = vector.broadcast %1069 : f32 to vector<8x90xf32>
    %1071 = arith.mulf %1070, %400 : vector<8x90xf32>
    %1072 = vector.broadcast %1069 : f32 to vector<8x90xf32>
    %1073 = arith.mulf %1072, %402 : vector<8x90xf32>
    %c85 = arith.constant 85 : index
    %1074 = memref.load %arg3[%c85] : memref<96xf32, #tpu.memory_space<smem>>
    %1075 = vector.broadcast %1074 : f32 to vector<8x90xf32>
    %1076 = arith.mulf %1075, %402 : vector<8x90xf32>
    %1077 = vector.broadcast %1074 : f32 to vector<8x90xf32>
    %1078 = arith.mulf %1077, %404 : vector<8x90xf32>
    %c86 = arith.constant 86 : index
    %1079 = memref.load %arg3[%c86] : memref<96xf32, #tpu.memory_space<smem>>
    %1080 = vector.broadcast %1079 : f32 to vector<8x90xf32>
    %1081 = arith.mulf %1080, %404 : vector<8x90xf32>
    %1082 = vector.broadcast %1079 : f32 to vector<8x90xf32>
    %1083 = arith.mulf %1082, %406 : vector<8x90xf32>
    %c87 = arith.constant 87 : index
    %1084 = memref.load %arg3[%c87] : memref<96xf32, #tpu.memory_space<smem>>
    %1085 = vector.broadcast %1084 : f32 to vector<8x90xf32>
    %1086 = arith.mulf %1085, %408 : vector<8x90xf32>
    %1087 = vector.broadcast %1084 : f32 to vector<8x90xf32>
    %1088 = arith.mulf %1087, %410 : vector<8x90xf32>
    %c88 = arith.constant 88 : index
    %1089 = memref.load %arg3[%c88] : memref<96xf32, #tpu.memory_space<smem>>
    %1090 = vector.broadcast %1089 : f32 to vector<8x90xf32>
    %1091 = arith.mulf %1090, %410 : vector<8x90xf32>
    %1092 = vector.broadcast %1089 : f32 to vector<8x90xf32>
    %1093 = arith.mulf %1092, %412 : vector<8x90xf32>
    %c89 = arith.constant 89 : index
    %1094 = memref.load %arg3[%c89] : memref<96xf32, #tpu.memory_space<smem>>
    %1095 = vector.broadcast %1094 : f32 to vector<8x90xf32>
    %1096 = arith.mulf %1095, %412 : vector<8x90xf32>
    %1097 = vector.broadcast %1094 : f32 to vector<8x90xf32>
    %1098 = arith.mulf %1097, %414 : vector<8x90xf32>
    %c90 = arith.constant 90 : index
    %1099 = memref.load %arg3[%c90] : memref<96xf32, #tpu.memory_space<smem>>
    %1100 = vector.broadcast %1099 : f32 to vector<8x90xf32>
    %1101 = arith.mulf %1100, %416 : vector<8x90xf32>
    %1102 = vector.broadcast %1099 : f32 to vector<8x90xf32>
    %1103 = arith.mulf %1102, %418 : vector<8x90xf32>
    %c91 = arith.constant 91 : index
    %1104 = memref.load %arg3[%c91] : memref<96xf32, #tpu.memory_space<smem>>
    %1105 = vector.broadcast %1104 : f32 to vector<8x90xf32>
    %1106 = arith.mulf %1105, %418 : vector<8x90xf32>
    %1107 = vector.broadcast %1104 : f32 to vector<8x90xf32>
    %1108 = arith.mulf %1107, %420 : vector<8x90xf32>
    %c92 = arith.constant 92 : index
    %1109 = memref.load %arg3[%c92] : memref<96xf32, #tpu.memory_space<smem>>
    %1110 = vector.broadcast %1109 : f32 to vector<8x90xf32>
    %1111 = arith.mulf %1110, %420 : vector<8x90xf32>
    %1112 = vector.broadcast %1109 : f32 to vector<8x90xf32>
    %1113 = arith.mulf %1112, %422 : vector<8x90xf32>
    %c93 = arith.constant 93 : index
    %1114 = memref.load %arg3[%c93] : memref<96xf32, #tpu.memory_space<smem>>
    %1115 = vector.broadcast %1114 : f32 to vector<8x90xf32>
    %1116 = arith.mulf %1115, %424 : vector<8x90xf32>
    %1117 = vector.broadcast %1114 : f32 to vector<8x90xf32>
    %1118 = arith.mulf %1117, %426 : vector<8x90xf32>
    %c94 = arith.constant 94 : index
    %1119 = memref.load %arg3[%c94] : memref<96xf32, #tpu.memory_space<smem>>
    %1120 = vector.broadcast %1119 : f32 to vector<8x90xf32>
    %1121 = arith.mulf %1120, %426 : vector<8x90xf32>
    %1122 = vector.broadcast %1119 : f32 to vector<8x90xf32>
    %1123 = arith.mulf %1122, %428 : vector<8x90xf32>
    %c95 = arith.constant 95 : index
    %1124 = memref.load %arg3[%c95] : memref<96xf32, #tpu.memory_space<smem>>
    %1125 = vector.broadcast %1124 : f32 to vector<8x90xf32>
    %1126 = arith.mulf %1125, %428 : vector<8x90xf32>
    %1127 = vector.broadcast %1124 : f32 to vector<8x90xf32>
    %1128 = arith.mulf %1127, %430 : vector<8x90xf32>
    %c7_215 = arith.constant 7 : index
    %1129 = memref.load %arg4[%c7_215] : memref<8xf32, #tpu.memory_space<smem>>
    %1130 = arith.addf %1071, %1076 : vector<8x90xf32>
    %1131 = arith.addf %1081, %1086 : vector<8x90xf32>
    %1132 = arith.addf %1091, %1096 : vector<8x90xf32>
    %1133 = arith.addf %1101, %1106 : vector<8x90xf32>
    %1134 = arith.addf %1111, %1116 : vector<8x90xf32>
    %1135 = arith.addf %1121, %1126 : vector<8x90xf32>
    %1136 = arith.addf %1130, %1131 : vector<8x90xf32>
    %1137 = arith.addf %1132, %1133 : vector<8x90xf32>
    %1138 = arith.addf %1134, %1135 : vector<8x90xf32>
    %1139 = arith.addf %1136, %1137 : vector<8x90xf32>
    %1140 = arith.addf %1139, %1138 : vector<8x90xf32>
    %1141 = arith.addf %1073, %1078 : vector<8x90xf32>
    %1142 = arith.addf %1083, %1088 : vector<8x90xf32>
    %1143 = arith.addf %1093, %1098 : vector<8x90xf32>
    %1144 = arith.addf %1103, %1108 : vector<8x90xf32>
    %1145 = arith.addf %1113, %1118 : vector<8x90xf32>
    %1146 = arith.addf %1123, %1128 : vector<8x90xf32>
    %1147 = arith.addf %1141, %1142 : vector<8x90xf32>
    %1148 = arith.addf %1143, %1144 : vector<8x90xf32>
    %1149 = arith.addf %1145, %1146 : vector<8x90xf32>
    %1150 = arith.addf %1147, %1148 : vector<8x90xf32>
    %1151 = arith.addf %1150, %1149 : vector<8x90xf32>
    %1152 = arith.maximumf %1140, %1151 : vector<8x90xf32>
    %1153 = vector.broadcast %1129 : f32 to vector<8x90xf32>
    %1154 = arith.addf %1152, %1153 : vector<8x90xf32>
    %cst_216 = arith.constant 0.000000e+00 : f32
    %1155 = vector.broadcast %cst_216 : f32 to vector<8x90xf32>
    %1156 = arith.maximumf %1154, %1155 : vector<8x90xf32>
    %1157 = tpu.concatenate %1156, %431 in 1 : vector<8x90xf32>, vector<8x38xf32> -> vector<8x128xf32>
    %1158 = arith.truncf %1157 : vector<8x128xf32> to vector<8x128xbf16>
    %c0_217 = arith.constant 0 : index
    %c896 = arith.constant 896 : index
    %1159 = vector.load %arg12[%c0_217, %c896] : memref<8x1024xbf16, #tpu.memory_space<vmem>>, vector<8x128xbf16>
    tpu.vector_store %arg12[%c0_217, %c896], %1158 {strides = array<i32>} : memref<8x1024xbf16, #tpu.memory_space<vmem>>, vector<8x128xbf16>,
    %c0_218 = arith.constant 0 : index
    %c0_219 = arith.constant 0 : index
    %1160 = vector.load %arg12[%c0_218, %c0_219] : memref<8x1024xbf16, #tpu.memory_space<vmem>>, vector<8x1024xbf16>
    %c0_220 = arith.constant 0 : index
    %c0_221 = arith.constant 0 : index
    %1161 = vector.load %arg5[%c0_220, %c0_221] : memref<1024x128xbf16, #tpu.memory_space<vmem>>, vector<1024x128xbf16>
    %cst_222 = arith.constant dense<0.000000e+00> : vector<8x128xf32>
    %1162 = tpu.matmul %1160, %1161, %cst_222 {dimension_numbers = #tpu.dot_dimension_numbers<[1], [0], [0], [1], [0, 0, 1, 1], [], []>} : vector<8x1024xbf16>, vector<1024x128xbf16>, vector<8x128xf32> -> vector<8x128xf32>
    %c0_223 = arith.constant 0 : index
    %c0_224 = arith.constant 0 : index
    %1163 = vector.load %arg7[%c0_223, %c0_224] : memref<1x128xf32, #tpu.memory_space<vmem>>, vector<1x128xf32>
    %1164 = vector.broadcast %1163 : vector<1x128xf32> to vector<8x128xf32>
    %1165 = arith.addf %1162, %1164 : vector<8x128xf32>
    %c0_225 = arith.constant 0 : index
    %c0_226 = arith.constant 0 : index
    %1166 = vector.load %arg6[%c0_225, %c0_226] : memref<32x128xbf16, #tpu.memory_space<vmem>>, vector<32x128xbf16>
    %cst_227 = arith.constant 0.000000e+00 : f32
    %1167 = vector.broadcast %cst_227 : f32 to vector<2x32xf32>
    %cst_228 = arith.constant 0.000000e+00 : f32
    %1168 = vector.broadcast %cst_228 : f32 to vector<2x32xf32>
    %1169 = vector.extract_strided_slice %1165 {offsets = [0, 0], sizes = [2, 128], strides = [1, 1]} : vector<8x128xf32> to vector<2x128xf32>
    %1170 = arith.truncf %1167 : vector<2x32xf32> to vector<2x32xbf16>
    %cst_229 = arith.constant dense<0.000000e+00> : vector<2x128xf32>
    %1171 = tpu.matmul %1170, %1166, %cst_229 {dimension_numbers = #tpu.dot_dimension_numbers<[1], [0], [0], [1], [0, 0, 1, 1], [], []>} : vector<2x32xbf16>, vector<32x128xbf16>, vector<2x128xf32> -> vector<2x128xf32>
    %1172 = arith.addf %1169, %1171 : vector<2x128xf32>
    %1173 = vector.extract_strided_slice %1172 {offsets = [0, 0], sizes = [2, 96], strides = [1, 1]} : vector<2x128xf32> to vector<2x96xf32>
    %1174 = arith.negf %1173 : vector<2x96xf32>
    %1175 = math.exp %1174 : vector<2x96xf32>
    %cst_230 = arith.constant 1.000000e+00 : f32
    %1176 = vector.broadcast %cst_230 : f32 to vector<2x96xf32>
    %1177 = arith.addf %1176, %1175 : vector<2x96xf32>
    %1178 = arith.divf %1176, %1177 : vector<2x96xf32>
    %1179 = vector.extract_strided_slice %1178 {offsets = [0, 0], sizes = [2, 32], strides = [1, 1]} : vector<2x96xf32> to vector<2x32xf32>
    %1180 = vector.extract_strided_slice %1178 {offsets = [0, 32], sizes = [2, 32], strides = [1, 1]} : vector<2x96xf32> to vector<2x32xf32>
    %1181 = vector.extract_strided_slice %1178 {offsets = [0, 64], sizes = [2, 32], strides = [1, 1]} : vector<2x96xf32> to vector<2x32xf32>
    %1182 = vector.extract_strided_slice %1172 {offsets = [0, 96], sizes = [2, 32], strides = [1, 1]} : vector<2x128xf32> to vector<2x32xf32>
    %1183 = math.tanh %1182 : vector<2x32xf32>
    %1184 = arith.mulf %1180, %1168 : vector<2x32xf32>
    %1185 = arith.mulf %1179, %1183 : vector<2x32xf32>
    %1186 = arith.addf %1184, %1185 : vector<2x32xf32>
    %1187 = math.tanh %1186 : vector<2x32xf32>
    %1188 = arith.mulf %1181, %1187 : vector<2x32xf32>
    %1189 = vector.extract_strided_slice %1165 {offsets = [2, 0], sizes = [2, 128], strides = [1, 1]} : vector<8x128xf32> to vector<2x128xf32>
    %1190 = arith.truncf %1188 : vector<2x32xf32> to vector<2x32xbf16>
    %cst_231 = arith.constant dense<0.000000e+00> : vector<2x128xf32>
    %1191 = tpu.matmul %1190, %1166, %cst_231 {dimension_numbers = #tpu.dot_dimension_numbers<[1], [0], [0], [1], [0, 0, 1, 1], [], []>} : vector<2x32xbf16>, vector<32x128xbf16>, vector<2x128xf32> -> vector<2x128xf32>
    %1192 = arith.addf %1189, %1191 : vector<2x128xf32>
    %1193 = vector.extract_strided_slice %1192 {offsets = [0, 0], sizes = [2, 96], strides = [1, 1]} : vector<2x128xf32> to vector<2x96xf32>
    %1194 = arith.negf %1193 : vector<2x96xf32>
    %1195 = math.exp %1194 : vector<2x96xf32>
    %cst_232 = arith.constant 1.000000e+00 : f32
    %1196 = vector.broadcast %cst_232 : f32 to vector<2x96xf32>
    %1197 = arith.addf %1196, %1195 : vector<2x96xf32>
    %1198 = arith.divf %1196, %1197 : vector<2x96xf32>
    %1199 = vector.extract_strided_slice %1198 {offsets = [0, 0], sizes = [2, 32], strides = [1, 1]} : vector<2x96xf32> to vector<2x32xf32>
    %1200 = vector.extract_strided_slice %1198 {offsets = [0, 32], sizes = [2, 32], strides = [1, 1]} : vector<2x96xf32> to vector<2x32xf32>
    %1201 = vector.extract_strided_slice %1198 {offsets = [0, 64], sizes = [2, 32], strides = [1, 1]} : vector<2x96xf32> to vector<2x32xf32>
    %1202 = vector.extract_strided_slice %1192 {offsets = [0, 96], sizes = [2, 32], strides = [1, 1]} : vector<2x128xf32> to vector<2x32xf32>
    %1203 = math.tanh %1202 : vector<2x32xf32>
    %1204 = arith.mulf %1200, %1186 : vector<2x32xf32>
    %1205 = arith.mulf %1199, %1203 : vector<2x32xf32>
    %1206 = arith.addf %1204, %1205 : vector<2x32xf32>
    %1207 = math.tanh %1206 : vector<2x32xf32>
    %1208 = arith.mulf %1201, %1207 : vector<2x32xf32>
    %1209 = vector.extract_strided_slice %1165 {offsets = [4, 0], sizes = [2, 128], strides = [1, 1]} : vector<8x128xf32> to vector<2x128xf32>
    %1210 = arith.truncf %1208 : vector<2x32xf32> to vector<2x32xbf16>
    %cst_233 = arith.constant dense<0.000000e+00> : vector<2x128xf32>
    %1211 = tpu.matmul %1210, %1166, %cst_233 {dimension_numbers = #tpu.dot_dimension_numbers<[1], [0], [0], [1], [0, 0, 1, 1], [], []>} : vector<2x32xbf16>, vector<32x128xbf16>, vector<2x128xf32> -> vector<2x128xf32>
    %1212 = arith.addf %1209, %1211 : vector<2x128xf32>
    %1213 = vector.extract_strided_slice %1212 {offsets = [0, 0], sizes = [2, 96], strides = [1, 1]} : vector<2x128xf32> to vector<2x96xf32>
    %1214 = arith.negf %1213 : vector<2x96xf32>
    %1215 = math.exp %1214 : vector<2x96xf32>
    %cst_234 = arith.constant 1.000000e+00 : f32
    %1216 = vector.broadcast %cst_234 : f32 to vector<2x96xf32>
    %1217 = arith.addf %1216, %1215 : vector<2x96xf32>
    %1218 = arith.divf %1216, %1217 : vector<2x96xf32>
    %1219 = vector.extract_strided_slice %1218 {offsets = [0, 0], sizes = [2, 32], strides = [1, 1]} : vector<2x96xf32> to vector<2x32xf32>
    %1220 = vector.extract_strided_slice %1218 {offsets = [0, 32], sizes = [2, 32], strides = [1, 1]} : vector<2x96xf32> to vector<2x32xf32>
    %1221 = vector.extract_strided_slice %1218 {offsets = [0, 64], sizes = [2, 32], strides = [1, 1]} : vector<2x96xf32> to vector<2x32xf32>
    %1222 = vector.extract_strided_slice %1212 {offsets = [0, 96], sizes = [2, 32], strides = [1, 1]} : vector<2x128xf32> to vector<2x32xf32>
    %1223 = math.tanh %1222 : vector<2x32xf32>
    %1224 = arith.mulf %1220, %1206 : vector<2x32xf32>
    %1225 = arith.mulf %1219, %1223 : vector<2x32xf32>
    %1226 = arith.addf %1224, %1225 : vector<2x32xf32>
    %1227 = math.tanh %1226 : vector<2x32xf32>
    %1228 = arith.mulf %1221, %1227 : vector<2x32xf32>
    %1229 = vector.extract_strided_slice %1165 {offsets = [6, 0], sizes = [2, 128], strides = [1, 1]} : vector<8x128xf32> to vector<2x128xf32>
    %1230 = arith.truncf %1228 : vector<2x32xf32> to vector<2x32xbf16>
    %cst_235 = arith.constant dense<0.000000e+00> : vector<2x128xf32>
    %1231 = tpu.matmul %1230, %1166, %cst_235 {dimension_numbers = #tpu.dot_dimension_numbers<[1], [0], [0], [1], [0, 0, 1, 1], [], []>} : vector<2x32xbf16>, vector<32x128xbf16>, vector<2x128xf32> -> vector<2x128xf32>
    %1232 = arith.addf %1229, %1231 : vector<2x128xf32>
    %1233 = vector.extract_strided_slice %1232 {offsets = [0, 0], sizes = [2, 96], strides = [1, 1]} : vector<2x128xf32> to vector<2x96xf32>
    %1234 = arith.negf %1233 : vector<2x96xf32>
    %1235 = math.exp %1234 : vector<2x96xf32>
    %cst_236 = arith.constant 1.000000e+00 : f32
    %1236 = vector.broadcast %cst_236 : f32 to vector<2x96xf32>
    %1237 = arith.addf %1236, %1235 : vector<2x96xf32>
    %1238 = arith.divf %1236, %1237 : vector<2x96xf32>
    %1239 = vector.extract_strided_slice %1238 {offsets = [0, 0], sizes = [2, 32], strides = [1, 1]} : vector<2x96xf32> to vector<2x32xf32>
    %1240 = vector.extract_strided_slice %1238 {offsets = [0, 32], sizes = [2, 32], strides = [1, 1]} : vector<2x96xf32> to vector<2x32xf32>
    %1241 = vector.extract_strided_slice %1238 {offsets = [0, 64], sizes = [2, 32], strides = [1, 1]} : vector<2x96xf32> to vector<2x32xf32>
    %1242 = vector.extract_strided_slice %1232 {offsets = [0, 96], sizes = [2, 32], strides = [1, 1]} : vector<2x128xf32> to vector<2x32xf32>
    %1243 = math.tanh %1242 : vector<2x32xf32>
    %1244 = arith.mulf %1240, %1226 : vector<2x32xf32>
    %1245 = arith.mulf %1239, %1243 : vector<2x32xf32>
    %1246 = arith.addf %1244, %1245 : vector<2x32xf32>
    %1247 = math.tanh %1246 : vector<2x32xf32>
    %1248 = arith.mulf %1241, %1247 : vector<2x32xf32>
    %1249 = arith.truncf %1248 : vector<2x32xf32> to vector<2x32xbf16>
    %c0_237 = arith.constant 0 : index
    %c0_238 = arith.constant 0 : index
    %1250 = vector.load %arg8[%c0_237, %c0_238] : memref<32x3xbf16, #tpu.memory_space<vmem>>, vector<32x3xbf16>
    %cst_239 = arith.constant dense<0.000000e+00> : vector<2x3xf32>
    %1251 = tpu.matmul %1249, %1250, %cst_239 {dimension_numbers = #tpu.dot_dimension_numbers<[1], [0], [0], [1], [0, 0, 1, 1], [], []>} : vector<2x32xbf16>, vector<32x3xbf16>, vector<2x3xf32> -> vector<2x3xf32>
    %c0_240 = arith.constant 0 : index
    %c0_241 = arith.constant 0 : index
    %1252 = vector.load %arg9[%c0_240, %c0_241] : memref<1x3xf32, #tpu.memory_space<vmem>>, vector<1x3xf32>
    %1253 = vector.broadcast %1252 : vector<1x3xf32> to vector<2x3xf32>
    %1254 = arith.addf %1251, %1253 : vector<2x3xf32>
    %c0_242 = arith.constant 0 : index
    %c0_243 = arith.constant 0 : index
    %1255 = vector.load %arg10[%c0_242, %c0_243] : memref<2x3xf32, #tpu.memory_space<vmem>>, vector<2x3xf32>
    tpu.vector_store %arg10[%c0_242, %c0_243], %1254 {strides = array<i32>} : memref<2x3xf32, #tpu.memory_space<vmem>>, vector<2x3xf32>,
    return
  }
}

</mosaic_0001>

<llo_original>
// kernel: forward.1
$region0: #{forward.1}
  #allocation0 [shape = 'u32[]', space=smem, size = 0x4, offset = 0x4, fixed_abs, tag = 'smem constant byte address 0x4 - core index']
  #allocation1 [shape = 'u32[144,128]{1,0:T(1,128)}', space=vmem, size = 0x12000, scoped, tag = 'internal scratch']
  #allocation2 [shape = 'f32[2,4,8,128]{3,2,1,0:T(8,128)}', space=vmem, size = 0x8000, scoped, tag = 'scratch operand']
  #allocation3 [shape = 'bf16[8,1024]{1,0:T(8,128)(2,1)}', space=vmem, size = 0x4000, scoped, tag = 'scratch operand']
  %s0 = inlined_call_operand.vmem [shape: f32[4,8,91], index: 0, kind: input, shape index: {}]
  %s1 = inlined_call_operand.vmem [shape: f32[20], index: 1, kind: input, shape index: {}]
  %s2 = inlined_call_operand.vmem [shape: f32[4], index: 2, kind: input, shape index: {}]
  %s3 = inlined_call_operand.vmem [shape: f32[96], index: 3, kind: input, shape index: {}]
  %s4 = inlined_call_operand.vmem [shape: f32[8], index: 4, kind: input, shape index: {}]
  %s5 = inlined_call_operand.vmem [shape: bf16[1024,128], index: 5, kind: input, shape index: {}]
  %s6 = inlined_call_operand.vmem [shape: bf16[32,128], index: 6, kind: input, shape index: {}]
  %s7 = inlined_call_operand.vmem [shape: f32[1,128], index: 7, kind: input, shape index: {}]
  %s8 = inlined_call_operand.vmem [shape: bf16[32,3], index: 8, kind: input, shape index: {}]
  %s9 = inlined_call_operand.vmem [shape: f32[1,3], index: 9, kind: input, shape index: {}]
  %s10 = inlined_call_operand.hbm [shape: f32[2,3], index: 10, kind: output, shape index: {}]
  %s11 = sld [smem:[#allocation0]]
  $region66: #{forward.1} parent=0
    _
  %s13 = ssub.s32 1, %s11
  %s14 = scalar_select 0, %s13, %s11
  $region1: #{forward.1} parent=0
    #allocation4 [shape = 'u8[512]{0}', space=smem, size = 0x200, scoped, tag = 'input window, operand 1, single buffered']
    #allocation5 [shape = 's32[1]{0}', space=sflag, size = 0x4, scoped, tag = 'scoped memory for forward.1']
    #allocation6 [shape = 's32[1]{0}', space=sflag, size = 0x4, scoped, tag = 'scoped memory for forward.1']
    #allocation7 [shape = 'u8[512]{0}', space=smem, size = 0x200, scoped, tag = 'input window, operand 2, single buffered']
    #allocation8 [shape = 's32[1]{0}', space=sflag, size = 0x4, scoped, tag = 'scoped memory for forward.1']
    #allocation9 [shape = 'u8[512]{0}', space=smem, size = 0x200, scoped, tag = 'input window, operand 3, single buffered']
    #allocation10 [shape = 'u8[512]{0}', space=smem, size = 0x200, scoped, tag = 'input window, operand 4, single buffered']
    #allocation11 [shape = 's32[1]{0}', space=sflag, size = 0x4, scoped, tag = 'scoped memory for forward.1']
    #allocation12 [shape = 'u8[1024]{0}', space=vmem, size = 0x400, scoped, tag = 'output window, operand 0, single buffered']
    %15 = vsyncpa [#allocation6], 0
    %16 = vsyncpa [#allocation8], 0
    %17 = vsyncpa [#allocation11], 0
    %18 = vsyncpa [#allocation5], 0
    // Predicated region
    $region2: #{forward.1} parent=1 // pred_check
      _
    $region3: #{forward.1} parent=1 // pred_check_branch
      %20 = sbr.rel (0) target = $region5
    $region4: #{forward.1} parent=1 // pred_region
      _
    $region5: #{forward.1} parent=1 // pred_fallthru
      _
    // Predicated region
    $region6: #{forward.1} parent=1 // pred_check
      _
    $region7: #{forward.1} parent=1 // pred_check_branch
      %22 = sbr.rel (0) target = $region9
    $region8: #{forward.1} parent=1 // pred_region
      %s24 = ssub.s32 16, 16
      %25 = vsyncadd [#allocation6], %s24
      %s27 = sshll.u32 %s1, 4
      %s28 = int_to_ptr.vmem [resolvable:$true] %s27
      %30 = dma.vmem_to_smem %s28, 16, [#allocation4], [#allocation6]
    $region9: #{forward.1} parent=1 // pred_fallthru
      _
    // Predicated region
    $region10: #{forward.1} parent=1 // pred_check
      _
    $region11: #{forward.1} parent=1 // pred_check_branch
      %32 = sbr.rel (0) target = $region13
    $region12: #{forward.1} parent=1 // pred_region
      %s34 = ssub.s32 16, 16
      %35 = vsyncadd [#allocation8], %s34
      %s37 = sshll.u32 %s2, 4
      %s38 = int_to_ptr.vmem [resolvable:$true] %s37
      %40 = dma.vmem_to_smem %s38, 16, [#allocation7], [#allocation8]
    $region13: #{forward.1} parent=1 // pred_fallthru
      _
    // Predicated region
    $region14: #{forward.1} parent=1 // pred_check
      _
    $region15: #{forward.1} parent=1 // pred_check_branch
      %42 = sbr.rel (0) target = $region17
    $region16: #{forward.1} parent=1 // pred_region
      %s44 = ssub.s32 16, 16
      %45 = vsyncadd [#allocation8], %s44
      %s47 = sshll.u32 %s3, 4
      %s48 = int_to_ptr.vmem [resolvable:$true] %s47
      %50 = dma.vmem_to_smem %s48, 16, [#allocation9], [#allocation8]
    $region17: #{forward.1} parent=1 // pred_fallthru
      _
    // Predicated region
    $region18: #{forward.1} parent=1 // pred_check
      _
    $region19: #{forward.1} parent=1 // pred_check_branch
      %52 = sbr.rel (0) target = $region21
    $region20: #{forward.1} parent=1 // pred_region
      %s54 = ssub.s32 16, 16
      %55 = vsyncadd [#allocation11], %s54
      %s57 = sshll.u32 %s4, 4
      %s58 = int_to_ptr.vmem [resolvable:$true] %s57
      %60 = dma.vmem_to_smem %s58, 16, [#allocation10], [#allocation11]
    $region21: #{forward.1} parent=1 // pred_fallthru
      _
    // Predicated region
    $region22: #{forward.1} parent=1 // pred_check
      _
    $region23: #{forward.1} parent=1 // pred_check_branch
      %62 = sbr.rel (0) target = $region25
    $region24: #{forward.1} parent=1 // pred_region
      _
    $region25: #{forward.1} parent=1 // pred_fallthru
      _
    // Predicated region
    $region26: #{forward.1} parent=1 // pred_check
      _
    $region27: #{forward.1} parent=1 // pred_check_branch
      %64 = sbr.rel (0) target = $region29
    $region28: #{forward.1} parent=1 // pred_region
      _
    $region29: #{forward.1} parent=1 // pred_fallthru
      _
    // Predicated region
    $region30: #{forward.1} parent=1 // pred_check
      _
    $region31: #{forward.1} parent=1 // pred_check_branch
      %66 = sbr.rel (0) target = $region33
    $region32: #{forward.1} parent=1 // pred_region
      _
    $region33: #{forward.1} parent=1 // pred_fallthru
      _
    // Predicated region
    $region34: #{forward.1} parent=1 // pred_check
      _
    $region35: #{forward.1} parent=1 // pred_check_branch
      %68 = sbr.rel (0) target = $region37
    $region36: #{forward.1} parent=1 // pred_region
      _
    $region37: #{forward.1} parent=1 // pred_fallthru
      _
    // Predicated region
    $region38: #{forward.1} parent=1 // pred_check
      _
    $region39: #{forward.1} parent=1 // pred_check_branch
      %70 = sbr.rel (0) target = $region41
    $region40: #{forward.1} parent=1 // pred_region
      _
    $region41: #{forward.1} parent=1 // pred_fallthru
      _
    // Predicated region
    $region42: #{forward.1} parent=1 // pred_check
      _
    $region43: #{forward.1} parent=1 // pred_check_branch
      %72 = sbr.rel (0) target = $region45
    $region44: #{forward.1} parent=1 // pred_region
      %73 = dma.done [#allocation6], 16
    $region45: #{forward.1} parent=1 // pred_fallthru
      _
    // Predicated region
    $region46: #{forward.1} parent=1 // pred_check
      _
    $region47: #{forward.1} parent=1 // pred_check_branch
      %75 = sbr.rel (0) target = $region49
    $region48: #{forward.1} parent=1 // pred_region
      %76 = dma.done [#allocation8], 16
    $region49: #{forward.1} parent=1 // pred_fallthru
      _
    // Predicated region
    $region50: #{forward.1} parent=1 // pred_check
      _
    $region51: #{forward.1} parent=1 // pred_check_branch
      %78 = sbr.rel (0) target = $region53
    $region52: #{forward.1} parent=1 // pred_region
      %79 = dma.done [#allocation8], 16
    $region53: #{forward.1} parent=1 // pred_fallthru
      _
    // Predicated region
    $region54: #{forward.1} parent=1 // pred_check
      _
    $region55: #{forward.1} parent=1 // pred_check_branch
      %81 = sbr.rel (0) target = $region57
    $region56: #{forward.1} parent=1 // pred_region
      %82 = dma.done [#allocation11], 16
    $region57: #{forward.1} parent=1 // pred_fallthru
      _
    %83 = sfence
    %v85 = vld [vmem:[%s0] sm:$0xff]
    %v86 = vld [vmem:[%s0 + $0x8] sm:$0xff]
    %v87 = vld [vmem:[%s0 + $0x10] sm:$0xff]
    %v88 = vld [vmem:[%s0 + $0x18] sm:$0xff]
    %s89 = sld [smem:[#allocation4]]
    %v90 = vstv %s89
    %v91 = vmul.f32 %v90, %v85
    %s92 = sld [smem:[#allocation4 + $0x1]]
    %v93 = vstv %s92
    %v94 = vmul.f32 %v93, %v86
    %s95 = sld [smem:[#allocation4 + $0x2]]
    %v96 = vstv %s95
    %v97 = vmul.f32 %v96, %v87
    %s98 = sld [smem:[#allocation4 + $0x3]]
    %v99 = vstv %s98
    %v100 = vmul.f32 %v99, %v88
    %s101 = sld [smem:[#allocation4 + $0x4]]
    %v102 = vstv %s101
    %v103 = vmul.f32 %v102, %v85
    %v104 = vadd.f32 %v91, %v94
    %v105 = vadd.f32 %v97, %v100
    %v106 = vadd.f32 %v104, %v105
    %108 = vrot.lane.b32.xlu0 %v103, 127
    %v109 = vpop.permute.xlu0 %108
    %v111 = vadd.f32 %v106, %v109
    %v112 = vmul.f32 %v90, %v86
    %v113 = vmul.f32 %v93, %v87
    %v114 = vmul.f32 %v96, %v88
    %v115 = vmul.f32 %v99, %v85
    %v116 = vmul.f32 %v102, %v86
    %v117 = vadd.f32 %v112, %v113
    %119 = vrot.lane.b32.xlu0 %v115, 127
    %v120 = vpop.permute.xlu0 %119
    %v122 = vadd.f32 %v114, %v120
    %v123 = vadd.f32 %v117, %v122
    %125 = vrot.lane.b32.xlu0 %v116, 127
    %v126 = vpop.permute.xlu0 %125
    %v128 = vadd.f32 %v123, %v126
    %v129 = vmul.f32 %v90, %v87
    %v130 = vmul.f32 %v93, %v88
    %v131 = vmul.f32 %v96, %v85
    %v132 = vmul.f32 %v99, %v86
    %v133 = vmul.f32 %v102, %v87
    %v134 = vadd.f32 %v129, %v130
    %v135 = vadd.f32 %v131, %v132
    %137 = vrot.lane.b32.xlu0 %v135, 127
    %v138 = vpop.permute.xlu0 %137
    %v140 = vadd.f32 %v134, %v138
    %142 = vrot.lane.b32.xlu0 %v133, 127
    %v143 = vpop.permute.xlu0 %142
    %v145 = vadd.f32 %v140, %v143
    %v146 = vmul.f32 %v90, %v88
    %v147 = vmul.f32 %v93, %v85
    %v148 = vmul.f32 %v96, %v86
    %v149 = vmul.f32 %v99, %v87
    %v150 = vmul.f32 %v102, %v88
    %152 = vrot.lane.b32.xlu0 %v147, 127
    %v153 = vpop.permute.xlu0 %152
    %v155 = vadd.f32 %v146, %v153
    %v156 = vadd.f32 %v148, %v149
    %158 = vrot.lane.b32.xlu0 %v156, 127
    %v159 = vpop.permute.xlu0 %158
    %v161 = vadd.f32 %v155, %v159
    %163 = vrot.lane.b32.xlu0 %v150, 127
    %v164 = vpop.permute.xlu0 %163
    %v166 = vadd.f32 %v161, %v164
    %s167 = sld [smem:[#allocation7]]
    %v168 = vmax.f32 %v111, %v128
    %v169 = vstv %s167
    %v170 = vadd.f32 %v168, %v169
    %v171 = vmax.f32 %v170, 0.0
    %v172 = vmax.f32 %v145, %v166
    %v173 = vadd.f32 %v172, %v169
    %v174 = vmax.f32 %v173, 0.0
    %176 = vrot.lane.b32.xlu0 %v171, 2
    %v177 = vpop.permute.xlu0 %176
    %vm179 = vcmask 15360
    %v180 = vsel %vm179, 0.0, %v177
    %vm181 = vcmask 752640
    %v182 = vsel %vm181, %v180, 0.0
    %183 = vst [vmem:[#allocation2] sm:$0xff] %v182
    %185 = vrot.lane.b32.xlu0 %v174, 2
    %v186 = vpop.permute.xlu0 %185
    %v188 = vsel %vm179, 0.0, %v186
    %v189 = vsel %vm181, %v188, 0.0
    %s190 = scalar_lea.vmem [#allocation2], 32
    %191 = vst [vmem:[%s190] sm:$0xff] %v189
    %s192 = sld [smem:[#allocation4 + $0x5]]
    %v193 = vstv %s192
    %v194 = vmul.f32 %v193, %v85
    %s195 = sld [smem:[#allocation4 + $0x6]]
    %v196 = vstv %s195
    %v197 = vmul.f32 %v196, %v86
    %s198 = sld [smem:[#allocation4 + $0x7]]
    %v199 = vstv %s198
    %v200 = vmul.f32 %v199, %v87
    %s201 = sld [smem:[#allocation4 + $0x8]]
    %v202 = vstv %s201
    %v203 = vmul.f32 %v202, %v88
    %s204 = sld [smem:[#allocation4 + $0x9]]
    %v205 = vstv %s204
    %v206 = vmul.f32 %v205, %v85
    %v207 = vadd.f32 %v194, %v197
    %v208 = vadd.f32 %v200, %v203
    %v209 = vadd.f32 %v207, %v208
    %211 = vrot.lane.b32.xlu0 %v206, 127
    %v212 = vpop.permute.xlu0 %211
    %v214 = vadd.f32 %v209, %v212
    %v215 = vmul.f32 %v193, %v86
    %v216 = vmul.f32 %v196, %v87
    %v217 = vmul.f32 %v199, %v88
    %v218 = vmul.f32 %v202, %v85
    %v219 = vmul.f32 %v205, %v86
    %v220 = vadd.f32 %v215, %v216
    %222 = vrot.lane.b32.xlu0 %v218, 127
    %v223 = vpop.permute.xlu0 %222
    %v225 = vadd.f32 %v217, %v223
    %v226 = vadd.f32 %v220, %v225
    %228 = vrot.lane.b32.xlu0 %v219, 127
    %v229 = vpop.permute.xlu0 %228
    %v231 = vadd.f32 %v226, %v229
    %v232 = vmul.f32 %v193, %v87
    %v233 = vmul.f32 %v196, %v88
    %v234 = vmul.f32 %v199, %v85
    %v235 = vmul.f32 %v202, %v86
    %v236 = vmul.f32 %v205, %v87
    %v237 = vadd.f32 %v232, %v233
    %v238 = vadd.f32 %v234, %v235
    %240 = vrot.lane.b32.xlu0 %v238, 127
    %v241 = vpop.permute.xlu0 %240
    %v243 = vadd.f32 %v237, %v241
    %245 = vrot.lane.b32.xlu0 %v236, 127
    %v246 = vpop.permute.xlu0 %245
    %v248 = vadd.f32 %v243, %v246
    %v249 = vmul.f32 %v193, %v88
    %v250 = vmul.f32 %v196, %v85
    %v251 = vmul.f32 %v199, %v86
    %v252 = vmul.f32 %v202, %v87
    %v253 = vmul.f32 %v205, %v88
    %255 = vrot.lane.b32.xlu0 %v250, 127
    %v256 = vpop.permute.xlu0 %255
    %v258 = vadd.f32 %v249, %v256
    %v259 = vadd.f32 %v251, %v252
    %261 = vrot.lane.b32.xlu0 %v259, 127
    %v262 = vpop.permute.xlu0 %261
    %v264 = vadd.f32 %v258, %v262
    %266 = vrot.lane.b32.xlu0 %v253, 127
    %v267 = vpop.permute.xlu0 %266
    %v269 = vadd.f32 %v264, %v267
    %s270 = sld [smem:[#allocation7 + $0x1]]
    %v271 = vmax.f32 %v214, %v231
    %v272 = vstv %s270
    %v273 = vadd.f32 %v271, %v272
    %v274 = vmax.f32 %v273, 0.0
    %v275 = vmax.f32 %v248, %v269
    %v276 = vadd.f32 %v275, %v272
    %v277 = vmax.f32 %v276, 0.0
    %279 = vrot.lane.b32.xlu0 %v274, 2
    %v280 = vpop.permute.xlu0 %279
    %v282 = vsel %vm179, 0.0, %v280
    %v283 = vsel %vm181, %v282, 0.0
    %s284 = scalar_lea.vmem [#allocation2], 8
    %285 = vst [vmem:[%s284] sm:$0xff] %v283
    %287 = vrot.lane.b32.xlu0 %v277, 2
    %v288 = vpop.permute.xlu0 %287
    %v290 = vsel %vm179, 0.0, %v288
    %v291 = vsel %vm181, %v290, 0.0
    %s292 = scalar_lea.vmem [#allocation2], 40
    %293 = vst [vmem:[%s292] sm:$0xff] %v291
    %s294 = sld [smem:[#allocation4 + $0xa]]
    %v295 = vstv %s294
    %v296 = vmul.f32 %v295, %v85
    %s297 = sld [smem:[#allocation4 + $0xb]]
    %v298 = vstv %s297
    %v299 = vmul.f32 %v298, %v86
    %s300 = sld [smem:[#allocation4 + $0xc]]
    %v301 = vstv %s300
    %v302 = vmul.f32 %v301, %v87
    %s303 = sld [smem:[#allocation4 + $0xd]]
    %v304 = vstv %s303
    %v305 = vmul.f32 %v304, %v88
    %s306 = sld [smem:[#allocation4 + $0xe]]
    %v307 = vstv %s306
    %v308 = vmul.f32 %v307, %v85
    %v309 = vadd.f32 %v296, %v299
    %v310 = vadd.f32 %v302, %v305
    %v311 = vadd.f32 %v309, %v310
    %313 = vrot.lane.b32.xlu0 %v308, 127
    %v314 = vpop.permute.xlu0 %313
    %v316 = vadd.f32 %v311, %v314
    %v317 = vmul.f32 %v295, %v86
    %v318 = vmul.f32 %v298, %v87
    %v319 = vmul.f32 %v301, %v88
    %v320 = vmul.f32 %v304, %v85
    %v321 = vmul.f32 %v307, %v86
    %v322 = vadd.f32 %v317, %v318
    %324 = vrot.lane.b32.xlu0 %v320, 127
    %v325 = vpop.permute.xlu0 %324
    %v327 = vadd.f32 %v319, %v325
    %v328 = vadd.f32 %v322, %v327
    %330 = vrot.lane.b32.xlu0 %v321, 127
    %v331 = vpop.permute.xlu0 %330
    %v333 = vadd.f32 %v328, %v331
    %v334 = vmul.f32 %v295, %v87
    %v335 = vmul.f32 %v298, %v88
    %v336 = vmul.f32 %v301, %v85
    %v337 = vmul.f32 %v304, %v86
    %v338 = vmul.f32 %v307, %v87
    %v339 = vadd.f32 %v334, %v335
    %v340 = vadd.f32 %v336, %v337
    %342 = vrot.lane.b32.xlu0 %v340, 127
    %v343 = vpop.permute.xlu0 %342
    %v345 = vadd.f32 %v339, %v343
    %347 = vrot.lane.b32.xlu0 %v338, 127
    %v348 = vpop.permute.xlu0 %347
    %v350 = vadd.f32 %v345, %v348
    %v351 = vmul.f32 %v295, %v88
    %v352 = vmul.f32 %v298, %v85
    %v353 = vmul.f32 %v301, %v86
    %v354 = vmul.f32 %v304, %v87
    %v355 = vmul.f32 %v307, %v88
    %357 = vrot.lane.b32.xlu0 %v352, 127
    %v358 = vpop.permute.xlu0 %357
    %v360 = vadd.f32 %v351, %v358
    %v361 = vadd.f32 %v353, %v354
    %363 = vrot.lane.b32.xlu0 %v361, 127
    %v364 = vpop.permute.xlu0 %363
    %v366 = vadd.f32 %v360, %v364
    %368 = vrot.lane.b32.xlu0 %v355, 127
    %v369 = vpop.permute.xlu0 %368
    %v371 = vadd.f32 %v366, %v369
    %s372 = sld [smem:[#allocation7 + $0x2]]
    %v373 = vmax.f32 %v316, %v333
    %v374 = vstv %s372
    %v375 = vadd.f32 %v373, %v374
    %v376 = vmax.f32 %v375, 0.0
    %v377 = vmax.f32 %v350, %v371
    %v378 = vadd.f32 %v377, %v374
    %v379 = vmax.f32 %v378, 0.0
    %381 = vrot.lane.b32.xlu0 %v376, 2
    %v382 = vpop.permute.xlu0 %381
    %v384 = vsel %vm179, 0.0, %v382
    %v385 = vsel %vm181, %v384, 0.0
    %s386 = scalar_lea.vmem [#allocation2], 16
    %387 = vst [vmem:[%s386] sm:$0xff] %v385
    %389 = vrot.lane.b32.xlu0 %v379, 2
    %v390 = vpop.permute.xlu0 %389
    %v392 = vsel %vm179, 0.0, %v390
    %v393 = vsel %vm181, %v392, 0.0
    %s394 = scalar_lea.vmem [#allocation2], 48
    %395 = vst [vmem:[%s394] sm:$0xff] %v393
    %s396 = sld [smem:[#allocation4 + $0xf]]
    %v397 = vstv %s396
    %v398 = vmul.f32 %v397, %v85
    %s399 = sld [smem:[#allocation4 + $0x10]]
    %v400 = vstv %s399
    %v401 = vmul.f32 %v400, %v86
    %s402 = sld [smem:[#allocation4 + $0x11]]
    %v403 = vstv %s402
    %v404 = vmul.f32 %v403, %v87
    %s405 = sld [smem:[#allocation4 + $0x12]]
    %v406 = vstv %s405
    %v407 = vmul.f32 %v406, %v88
    %s408 = sld [smem:[#allocation4 + $0x13]]
    %v409 = vstv %s408
    %v410 = vmul.f32 %v409, %v85
    %v411 = vadd.f32 %v398, %v401
    %v412 = vadd.f32 %v404, %v407
    %v413 = vadd.f32 %v411, %v412
    %415 = vrot.lane.b32.xlu0 %v410, 127
    %v416 = vpop.permute.xlu0 %415
    %v418 = vadd.f32 %v413, %v416
    %v419 = vmul.f32 %v397, %v86
    %v420 = vmul.f32 %v400, %v87
    %v421 = vmul.f32 %v403, %v88
    %v422 = vmul.f32 %v406, %v85
    %v423 = vmul.f32 %v409, %v86
    %v424 = vadd.f32 %v419, %v420
    %426 = vrot.lane.b32.xlu0 %v422, 127
    %v427 = vpop.permute.xlu0 %426
    %v429 = vadd.f32 %v421, %v427
    %v430 = vadd.f32 %v424, %v429
    %432 = vrot.lane.b32.xlu0 %v423, 127
    %v433 = vpop.permute.xlu0 %432
    %v435 = vadd.f32 %v430, %v433
    %v436 = vmul.f32 %v397, %v87
    %v437 = vmul.f32 %v400, %v88
    %v438 = vmul.f32 %v403, %v85
    %v439 = vmul.f32 %v406, %v86
    %v440 = vmul.f32 %v409, %v87
    %v441 = vadd.f32 %v436, %v437
    %v442 = vadd.f32 %v438, %v439
    %444 = vrot.lane.b32.xlu0 %v442, 127
    %v445 = vpop.permute.xlu0 %444
    %v447 = vadd.f32 %v441, %v445
    %449 = vrot.lane.b32.xlu0 %v440, 127
    %v450 = vpop.permute.xlu0 %449
    %v452 = vadd.f32 %v447, %v450
    %v453 = vmul.f32 %v397, %v88
    %v454 = vmul.f32 %v400, %v85
    %v455 = vmul.f32 %v403, %v86
    %v456 = vmul.f32 %v406, %v87
    %v457 = vmul.f32 %v409, %v88
    %459 = vrot.lane.b32.xlu0 %v454, 127
    %v460 = vpop.permute.xlu0 %459
    %v462 = vadd.f32 %v453, %v460
    %v463 = vadd.f32 %v455, %v456
    %465 = vrot.lane.b32.xlu0 %v463, 127
    %v466 = vpop.permute.xlu0 %465
    %v468 = vadd.f32 %v462, %v466
    %470 = vrot.lane.b32.xlu0 %v457, 127
    %v471 = vpop.permute.xlu0 %470
    %v473 = vadd.f32 %v468, %v471
    %s474 = sld [smem:[#allocation7 + $0x3]]
    %v475 = vmax.f32 %v418, %v435
    %v476 = vstv %s474
    %v477 = vadd.f32 %v475, %v476
    %v478 = vmax.f32 %v477, 0.0
    %v479 = vmax.f32 %v452, %v473
    %v480 = vadd.f32 %v479, %v476
    %v481 = vmax.f32 %v480, 0.0
    %483 = vrot.lane.b32.xlu0 %v478, 2
    %v484 = vpop.permute.xlu0 %483
    %v486 = vsel %vm179, 0.0, %v484
    %v487 = vsel %vm181, %v486, 0.0
    %s488 = scalar_lea.vmem [#allocation2], 24
    %489 = vst [vmem:[%s488] sm:$0xff] %v487
    %491 = vrot.lane.b32.xlu0 %v481, 2
    %v492 = vpop.permute.xlu0 %491
    %v494 = vsel %vm179, 0.0, %v492
    %v495 = vsel %vm181, %v494, 0.0
    %s496 = scalar_lea.vmem [#allocation2], 56
    %497 = vst [vmem:[%s496] sm:$0xff] %v495
    %v498 = vld [vmem:[%s190] sm:$0xff]
    %v499 = vld [vmem:[#allocation2] sm:$0xff]
    %v500 = vld [vmem:[%s292] sm:$0xff]
    %v501 = vld [vmem:[%s284] sm:$0xff]
    %v502 = vld [vmem:[%s394] sm:$0xff]
    %v503 = vld [vmem:[%s386] sm:$0xff]
    %v504 = vld [vmem:[%s496] sm:$0xff]
    %v505 = vld [vmem:[%s488] sm:$0xff]
    %s506 = sld [smem:[#allocation9]]
    %v507 = vstv %s506
    %v508 = vmul.f32 %v507, %v498
    %v509 = vmul.f32 %v507, %v499
    %s510 = sld [smem:[#allocation9 + $0x1]]
    %v511 = vstv %s510
    %v512 = vmul.f32 %v511, %v499
    %v513 = vmul.f32 %v511, %v498
    %s514 = sld [smem:[#allocation9 + $0x2]]
    %v515 = vstv %s514
    %v516 = vmul.f32 %v515, %v498
    %v517 = vmul.f32 %v515, %v499
    %s518 = sld [smem:[#allocation9 + $0x3]]
    %v519 = vstv %s518
    %v520 = vmul.f32 %v519, %v500
    %v521 = vmul.f32 %v519, %v501
    %s522 = sld [smem:[#allocation9 + $0x4]]
    %v523 = vstv %s522
    %v524 = vmul.f32 %v523, %v501
    %v525 = vmul.f32 %v523, %v500
    %s526 = sld [smem:[#allocation9 + $0x5]]
    %v527 = vstv %s526
    %v528 = vmul.f32 %v527, %v500
    %v529 = vmul.f32 %v527, %v501
    %s530 = sld [smem:[#allocation9 + $0x6]]
    %v531 = vstv %s530
    %v532 = vmul.f32 %v531, %v502
    %v533 = vmul.f32 %v531, %v503
    %s534 = sld [smem:[#allocation9 + $0x7]]
    %v535 = vstv %s534
    %v536 = vmul.f32 %v535, %v503
    %v537 = vmul.f32 %v535, %v502
    %s538 = sld [smem:[#allocation9 + $0x8]]
    %v539 = vstv %s538
    %v540 = vmul.f32 %v539, %v502
    %v541 = vmul.f32 %v539, %v503
    %s542 = sld [smem:[#allocation9 + $0x9]]
    %v543 = vstv %s542
    %v544 = vmul.f32 %v543, %v504
    %v545 = vmul.f32 %v543, %v505
    %s546 = sld [smem:[#allocation9 + $0xa]]
    %v547 = vstv %s546
    %v548 = vmul.f32 %v547, %v505
    %v549 = vmul.f32 %v547, %v504
    %s550 = sld [smem:[#allocation9 + $0xb]]
    %v551 = vstv %s550
    %v552 = vmul.f32 %v551, %v504
    %v553 = vmul.f32 %v551, %v505
    %s554 = sld [smem:[#allocation10]]
    %556 = vrot.lane.b32.xlu0 %v512, 127
    %v557 = vpop.permute.xlu0 %556
    %v559 = vadd.f32 %v508, %v557
    %561 = vrot.lane.b32.xlu0 %v520, 1
    %v562 = vpop.permute.xlu0 %561
    %v564 = vadd.f32 %v516, %v562
    %v565 = vadd.f32 %v524, %v528
    %567 = vrot.lane.b32.xlu0 %v536, 127
    %v568 = vpop.permute.xlu0 %567
    %v570 = vadd.f32 %v532, %v568
    %572 = vrot.lane.b32.xlu0 %v544, 1
    %v573 = vpop.permute.xlu0 %572
    %v575 = vadd.f32 %v540, %v573
    %v576 = vadd.f32 %v548, %v552
    %578 = vrot.lane.b32.xlu0 %v564, 127
    %v579 = vpop.permute.xlu0 %578
    %v581 = vadd.f32 %v559, %v579
    %583 = vrot.lane.b32.xlu0 %v570, 1
    %v584 = vpop.permute.xlu0 %583
    %v586 = vadd.f32 %v565, %v584
    %v587 = vadd.f32 %v575, %v576
    %589 = vrot.lane.b32.xlu0 %v586, 127
    %v590 = vpop.permute.xlu0 %589
    %v592 = vadd.f32 %v581, %v590
    %594 = vrot.lane.b32.xlu0 %v587, 127
    %v595 = vpop.permute.xlu0 %594
    %v597 = vadd.f32 %v592, %v595
    %v598 = vadd.f32 %v509, %v513
    %600 = vrot.lane.b32.xlu0 %v521, 1
    %v601 = vpop.permute.xlu0 %600
    %v603 = vadd.f32 %v517, %v601
    %605 = vrot.lane.b32.xlu0 %v529, 127
    %v606 = vpop.permute.xlu0 %605
    %v608 = vadd.f32 %v525, %v606
    %v609 = vadd.f32 %v533, %v537
    %611 = vrot.lane.b32.xlu0 %v545, 1
    %v612 = vpop.permute.xlu0 %611
    %v614 = vadd.f32 %v541, %v612
    %616 = vrot.lane.b32.xlu0 %v553, 127
    %v617 = vpop.permute.xlu0 %616
    %v619 = vadd.f32 %v549, %v617
    %621 = vrot.lane.b32.xlu0 %v603, 127
    %v622 = vpop.permute.xlu0 %621
    %v624 = vadd.f32 %v598, %v622
    %v625 = vadd.f32 %v608, %v609
    %627 = vrot.lane.b32.xlu0 %v619, 1
    %v628 = vpop.permute.xlu0 %627
    %v630 = vadd.f32 %v614, %v628
    %v631 = vadd.f32 %v624, %v625
    %633 = vrot.lane.b32.xlu0 %v630, 127
    %v634 = vpop.permute.xlu0 %633
    %v636 = vadd.f32 %v631, %v634
    %638 = vrot.lane.b32.xlu0 %v636, 127
    %v639 = vpop.permute.xlu0 %638
    %v641 = vmax.f32 %v597, %v639
    %v642 = vstv %s554
    %v643 = vadd.f32 %v641, %v642
    %v644 = vmax.f32 %v643, 0.0
    %646 = vrot.lane.b32.xlu0 %v644, 127
    %v647 = vpop.permute.xlu0 %646
    %vm649 = vcmask 736256
    %v650 = vsel %vm649, %v647, 0.0
    %v651 = vpack.c.bf16 %v650, %v650
    %652 = vst [vmem:[#allocation3] sm:$0xf] %v651
    %s653 = sld [smem:[#allocation9 + $0xc]]
    %v654 = vstv %s653
    %v655 = vmul.f32 %v654, %v498
    %v656 = vmul.f32 %v654, %v499
    %s657 = sld [smem:[#allocation9 + $0xd]]
    %v658 = vstv %s657
    %v659 = vmul.f32 %v658, %v499
    %v660 = vmul.f32 %v658, %v498
    %s661 = sld [smem:[#allocation9 + $0xe]]
    %v662 = vstv %s661
    %v663 = vmul.f32 %v662, %v498
    %v664 = vmul.f32 %v662, %v499
    %s665 = sld [smem:[#allocation9 + $0xf]]
    %v666 = vstv %s665
    %v667 = vmul.f32 %v666, %v500
    %v668 = vmul.f32 %v666, %v501
    %s669 = sld [smem:[#allocation9 + $0x10]]
    %v670 = vstv %s669
    %v671 = vmul.f32 %v670, %v501
    %v672 = vmul.f32 %v670, %v500
    %s673 = sld [smem:[#allocation9 + $0x11]]
    %v674 = vstv %s673
    %v675 = vmul.f32 %v674, %v500
    %v676 = vmul.f32 %v674, %v501
    %s677 = sld [smem:[#allocation9 + $0x12]]
    %v678 = vstv %s677
    %v679 = vmul.f32 %v678, %v502
    %v680 = vmul.f32 %v678, %v503
    %s681 = sld [smem:[#allocation9 + $0x13]]
    %v682 = vstv %s681
    %v683 = vmul.f32 %v682, %v503
    %v684 = vmul.f32 %v682, %v502
    %s685 = sld [smem:[#allocation9 + $0x14]]
    %v686 = vstv %s685
    %v687 = vmul.f32 %v686, %v502
    %v688 = vmul.f32 %v686, %v503
    %s689 = sld [smem:[#allocation9 + $0x15]]
    %v690 = vstv %s689
    %v691 = vmul.f32 %v690, %v504
    %v692 = vmul.f32 %v690, %v505
    %s693 = sld [smem:[#allocation9 + $0x16]]
    %v694 = vstv %s693
    %v695 = vmul.f32 %v694, %v505
    %v696 = vmul.f32 %v694, %v504
    %s697 = sld [smem:[#allocation9 + $0x17]]
    %v698 = vstv %s697
    %v699 = vmul.f32 %v698, %v504
    %v700 = vmul.f32 %v698, %v505
    %s701 = sld [smem:[#allocation10 + $0x1]]
    %703 = vrot.lane.b32.xlu0 %v659, 127
    %v704 = vpop.permute.xlu0 %703
    %v706 = vadd.f32 %v655, %v704
    %708 = vrot.lane.b32.xlu0 %v667, 1
    %v709 = vpop.permute.xlu0 %708
    %v711 = vadd.f32 %v663, %v709
    %v712 = vadd.f32 %v671, %v675
    %714 = vrot.lane.b32.xlu0 %v683, 127
    %v715 = vpop.permute.xlu0 %714
    %v717 = vadd.f32 %v679, %v715
    %719 = vrot.lane.b32.xlu0 %v691, 1
    %v720 = vpop.permute.xlu0 %719
    %v722 = vadd.f32 %v687, %v720
    %v723 = vadd.f32 %v695, %v699
    %725 = vrot.lane.b32.xlu0 %v711, 127
    %v726 = vpop.permute.xlu0 %725
    %v728 = vadd.f32 %v706, %v726
    %730 = vrot.lane.b32.xlu0 %v717, 1
    %v731 = vpop.permute.xlu0 %730
    %v733 = vadd.f32 %v712, %v731
    %v734 = vadd.f32 %v722, %v723
    %736 = vrot.lane.b32.xlu0 %v733, 127
    %v737 = vpop.permute.xlu0 %736
    %v739 = vadd.f32 %v728, %v737
    %741 = vrot.lane.b32.xlu0 %v734, 127
    %v742 = vpop.permute.xlu0 %741
    %v744 = vadd.f32 %v739, %v742
    %v745 = vadd.f32 %v656, %v660
    %747 = vrot.lane.b32.xlu0 %v668, 1
    %v748 = vpop.permute.xlu0 %747
    %v750 = vadd.f32 %v664, %v748
    %752 = vrot.lane.b32.xlu0 %v676, 127
    %v753 = vpop.permute.xlu0 %752
    %v755 = vadd.f32 %v672, %v753
    %v756 = vadd.f32 %v680, %v684
    %758 = vrot.lane.b32.xlu0 %v692, 1
    %v759 = vpop.permute.xlu0 %758
    %v761 = vadd.f32 %v688, %v759
    %763 = vrot.lane.b32.xlu0 %v700, 127
    %v764 = vpop.permute.xlu0 %763
    %v766 = vadd.f32 %v696, %v764
    %768 = vrot.lane.b32.xlu0 %v750, 127
    %v769 = vpop.permute.xlu0 %768
    %v771 = vadd.f32 %v745, %v769
    %v772 = vadd.f32 %v755, %v756
    %774 = vrot.lane.b32.xlu0 %v766, 1
    %v775 = vpop.permute.xlu0 %774
    %v777 = vadd.f32 %v761, %v775
    %v778 = vadd.f32 %v771, %v772
    %780 = vrot.lane.b32.xlu0 %v777, 127
    %v781 = vpop.permute.xlu0 %780
    %v783 = vadd.f32 %v778, %v781
    %785 = vrot.lane.b32.xlu0 %v783, 127
    %v786 = vpop.permute.xlu0 %785
    %v788 = vmax.f32 %v744, %v786
    %v789 = vstv %s701
    %v790 = vadd.f32 %v788, %v789
    %v791 = vmax.f32 %v790, 0.0
    %793 = vrot.lane.b32.xlu0 %v791, 127
    %v794 = vpop.permute.xlu0 %793
    %v796 = vsel %vm649, %v794, 0.0
    %v797 = vpack.c.bf16 %v796, %v796
    %798 = vst [vmem:[#allocation3 + $0x4] sm:$0xf] %v797
    %s799 = sld [smem:[#allocation9 + $0x18]]
    %v800 = vstv %s799
    %v801 = vmul.f32 %v800, %v498
    %v802 = vmul.f32 %v800, %v499
    %s803 = sld [smem:[#allocation9 + $0x19]]
    %v804 = vstv %s803
    %v805 = vmul.f32 %v804, %v499
    %v806 = vmul.f32 %v804, %v498
    %s807 = sld [smem:[#allocation9 + $0x1a]]
    %v808 = vstv %s807
    %v809 = vmul.f32 %v808, %v498
    %v810 = vmul.f32 %v808, %v499
    %s811 = sld [smem:[#allocation9 + $0x1b]]
    %v812 = vstv %s811
    %v813 = vmul.f32 %v812, %v500
    %v814 = vmul.f32 %v812, %v501
    %s815 = sld [smem:[#allocation9 + $0x1c]]
    %v816 = vstv %s815
    %v817 = vmul.f32 %v816, %v501
    %v818 = vmul.f32 %v816, %v500
    %s819 = sld [smem:[#allocation9 + $0x1d]]
    %v820 = vstv %s819
    %v821 = vmul.f32 %v820, %v500
    %v822 = vmul.f32 %v820, %v501
    %s823 = sld [smem:[#allocation9 + $0x1e]]
    %v824 = vstv %s823
    %v825 = vmul.f32 %v824, %v502
    %v826 = vmul.f32 %v824, %v503
    %s827 = sld [smem:[#allocation9 + $0x1f]]
    %v828 = vstv %s827
    %v829 = vmul.f32 %v828, %v503
    %v830 = vmul.f32 %v828, %v502
    %s831 = sld [smem:[#allocation9 + $0x20]]
    %v832 = vstv %s831
    %v833 = vmul.f32 %v832, %v502
    %v834 = vmul.f32 %v832, %v503
    %s835 = sld [smem:[#allocation9 + $0x21]]
    %v836 = vstv %s835
    %v837 = vmul.f32 %v836, %v504
    %v838 = vmul.f32 %v836, %v505
    %s839 = sld [smem:[#allocation9 + $0x22]]
    %v840 = vstv %s839
    %v841 = vmul.f32 %v840, %v505
    %v842 = vmul.f32 %v840, %v504
    %s843 = sld [smem:[#allocation9 + $0x23]]
    %v844 = vstv %s843
    %v845 = vmul.f32 %v844, %v504
    %v846 = vmul.f32 %v844, %v505
    %s847 = sld [smem:[#allocation10 + $0x2]]
    %849 = vrot.lane.b32.xlu0 %v805, 127
    %v850 = vpop.permute.xlu0 %849
    %v852 = vadd.f32 %v801, %v850
    %854 = vrot.lane.b32.xlu0 %v813, 1
    %v855 = vpop.permute.xlu0 %854
    %v857 = vadd.f32 %v809, %v855
    %v858 = vadd.f32 %v817, %v821
    %860 = vrot.lane.b32.xlu0 %v829, 127
    %v861 = vpop.permute.xlu0 %860
    %v863 = vadd.f32 %v825, %v861
    %865 = vrot.lane.b32.xlu0 %v837, 1
    %v866 = vpop.permute.xlu0 %865
    %v868 = vadd.f32 %v833, %v866
    %v869 = vadd.f32 %v841, %v845
    %871 = vrot.lane.b32.xlu0 %v857, 127
    %v872 = vpop.permute.xlu0 %871
    %v874 = vadd.f32 %v852, %v872
    %876 = vrot.lane.b32.xlu0 %v863, 1
    %v877 = vpop.permute.xlu0 %876
    %v879 = vadd.f32 %v858, %v877
    %v880 = vadd.f32 %v868, %v869
    %882 = vrot.lane.b32.xlu0 %v879, 127
    %v883 = vpop.permute.xlu0 %882
    %v885 = vadd.f32 %v874, %v883
    %887 = vrot.lane.b32.xlu0 %v880, 127
    %v888 = vpop.permute.xlu0 %887
    %v890 = vadd.f32 %v885, %v888
    %v891 = vadd.f32 %v802, %v806
    %893 = vrot.lane.b32.xlu0 %v814, 1
    %v894 = vpop.permute.xlu0 %893
    %v896 = vadd.f32 %v810, %v894
    %898 = vrot.lane.b32.xlu0 %v822, 127
    %v899 = vpop.permute.xlu0 %898
    %v901 = vadd.f32 %v818, %v899
    %v902 = vadd.f32 %v826, %v830
    %904 = vrot.lane.b32.xlu0 %v838, 1
    %v905 = vpop.permute.xlu0 %904
    %v907 = vadd.f32 %v834, %v905
    %909 = vrot.lane.b32.xlu0 %v846, 127
    %v910 = vpop.permute.xlu0 %909
    %v912 = vadd.f32 %v842, %v910
    %914 = vrot.lane.b32.xlu0 %v896, 127
    %v915 = vpop.permute.xlu0 %914
    %v917 = vadd.f32 %v891, %v915
    %v918 = vadd.f32 %v901, %v902
    %920 = vrot.lane.b32.xlu0 %v912, 1
    %v921 = vpop.permute.xlu0 %920
    %v923 = vadd.f32 %v907, %v921
    %v924 = vadd.f32 %v917, %v918
    %926 = vrot.lane.b32.xlu0 %v923, 127
    %v927 = vpop.permute.xlu0 %926
    %v929 = vadd.f32 %v924, %v927
    %931 = vrot.lane.b32.xlu0 %v929, 127
    %v932 = vpop.permute.xlu0 %931
    %v934 = vmax.f32 %v890, %v932
    %v935 = vstv %s847
    %v936 = vadd.f32 %v934, %v935
    %v937 = vmax.f32 %v936, 0.0
    %939 = vrot.lane.b32.xlu0 %v937, 127
    %v940 = vpop.permute.xlu0 %939
    %v942 = vsel %vm649, %v940, 0.0
    %v943 = vpack.c.bf16 %v942, %v942
    %944 = vst [vmem:[#allocation3 + $0x8] sm:$0xf] %v943
    %s945 = sld [smem:[#allocation9 + $0x24]]
    %v946 = vstv %s945
    %v947 = vmul.f32 %v946, %v498
    %v948 = vmul.f32 %v946, %v499
    %s949 = sld [smem:[#allocation9 + $0x25]]
    %v950 = vstv %s949
    %v951 = vmul.f32 %v950, %v499
    %v952 = vmul.f32 %v950, %v498
    %s953 = sld [smem:[#allocation9 + $0x26]]
    %v954 = vstv %s953
    %v955 = vmul.f32 %v954, %v498
    %v956 = vmul.f32 %v954, %v499
    %s957 = sld [smem:[#allocation9 + $0x27]]
    %v958 = vstv %s957
    %v959 = vmul.f32 %v958, %v500
    %v960 = vmul.f32 %v958, %v501
    %s961 = sld [smem:[#allocation9 + $0x28]]
    %v962 = vstv %s961
    %v963 = vmul.f32 %v962, %v501
    %v964 = vmul.f32 %v962, %v500
    %s965 = sld [smem:[#allocation9 + $0x29]]
    %v966 = vstv %s965
    %v967 = vmul.f32 %v966, %v500
    %v968 = vmul.f32 %v966, %v501
    %s969 = sld [smem:[#allocation9 + $0x2a]]
    %v970 = vstv %s969
    %v971 = vmul.f32 %v970, %v502
    %v972 = vmul.f32 %v970, %v503
    %s973 = sld [smem:[#allocation9 + $0x2b]]
    %v974 = vstv %s973
    %v975 = vmul.f32 %v974, %v503
    %v976 = vmul.f32 %v974, %v502
    %s977 = sld [smem:[#allocation9 + $0x2c]]
    %v978 = vstv %s977
    %v979 = vmul.f32 %v978, %v502
    %v980 = vmul.f32 %v978, %v503
    %s981 = sld [smem:[#allocation9 + $0x2d]]
    %v982 = vstv %s981
    %v983 = vmul.f32 %v982, %v504
    %v984 = vmul.f32 %v982, %v505
    %s985 = sld [smem:[#allocation9 + $0x2e]]
    %v986 = vstv %s985
    %v987 = vmul.f32 %v986, %v505
    %v988 = vmul.f32 %v986, %v504
    %s989 = sld [smem:[#allocation9 + $0x2f]]
    %v990 = vstv %s989
    %v991 = vmul.f32 %v990, %v504
    %v992 = vmul.f32 %v990, %v505
    %s993 = sld [smem:[#allocation10 + $0x3]]
    %995 = vrot.lane.b32.xlu0 %v951, 127
    %v996 = vpop.permute.xlu0 %995
    %v998 = vadd.f32 %v947, %v996
    %1000 = vrot.lane.b32.xlu0 %v959, 1
    %v1001 = vpop.permute.xlu0 %1000
    %v1003 = vadd.f32 %v955, %v1001
    %v1004 = vadd.f32 %v963, %v967
    %1006 = vrot.lane.b32.xlu0 %v975, 127
    %v1007 = vpop.permute.xlu0 %1006
    %v1009 = vadd.f32 %v971, %v1007
    %1011 = vrot.lane.b32.xlu0 %v983, 1
    %v1012 = vpop.permute.xlu0 %1011
    %v1014 = vadd.f32 %v979, %v1012
    %v1015 = vadd.f32 %v987, %v991
    %1017 = vrot.lane.b32.xlu0 %v1003, 127
    %v1018 = vpop.permute.xlu0 %1017
    %v1020 = vadd.f32 %v998, %v1018
    %1022 = vrot.lane.b32.xlu0 %v1009, 1
    %v1023 = vpop.permute.xlu0 %1022
    %v1025 = vadd.f32 %v1004, %v1023
    %v1026 = vadd.f32 %v1014, %v1015
    %1028 = vrot.lane.b32.xlu0 %v1025, 127
    %v1029 = vpop.permute.xlu0 %1028
    %v1031 = vadd.f32 %v1020, %v1029
    %1033 = vrot.lane.b32.xlu0 %v1026, 127
    %v1034 = vpop.permute.xlu0 %1033
    %v1036 = vadd.f32 %v1031, %v1034
    %v1037 = vadd.f32 %v948, %v952
    %1039 = vrot.lane.b32.xlu0 %v960, 1
    %v1040 = vpop.permute.xlu0 %1039
    %v1042 = vadd.f32 %v956, %v1040
    %1044 = vrot.lane.b32.xlu0 %v968, 127
    %v1045 = vpop.permute.xlu0 %1044
    %v1047 = vadd.f32 %v964, %v1045
    %v1048 = vadd.f32 %v972, %v976
    %1050 = vrot.lane.b32.xlu0 %v984, 1
    %v1051 = vpop.permute.xlu0 %1050
    %v1053 = vadd.f32 %v980, %v1051
    %1055 = vrot.lane.b32.xlu0 %v992, 127
    %v1056 = vpop.permute.xlu0 %1055
    %v1058 = vadd.f32 %v988, %v1056
    %1060 = vrot.lane.b32.xlu0 %v1042, 127
    %v1061 = vpop.permute.xlu0 %1060
    %v1063 = vadd.f32 %v1037, %v1061
    %v1064 = vadd.f32 %v1047, %v1048
    %1066 = vrot.lane.b32.xlu0 %v1058, 1
    %v1067 = vpop.permute.xlu0 %1066
    %v1069 = vadd.f32 %v1053, %v1067
    %v1070 = vadd.f32 %v1063, %v1064
    %1072 = vrot.lane.b32.xlu0 %v1069, 127
    %v1073 = vpop.permute.xlu0 %1072
    %v1075 = vadd.f32 %v1070, %v1073
    %1077 = vrot.lane.b32.xlu0 %v1075, 127
    %v1078 = vpop.permute.xlu0 %1077
    %v1080 = vmax.f32 %v1036, %v1078
    %v1081 = vstv %s993
    %v1082 = vadd.f32 %v1080, %v1081
    %v1083 = vmax.f32 %v1082, 0.0
    %1085 = vrot.lane.b32.xlu0 %v1083, 127
    %v1086 = vpop.permute.xlu0 %1085
    %v1088 = vsel %vm649, %v1086, 0.0
    %v1089 = vpack.c.bf16 %v1088, %v1088
    %1090 = vst [vmem:[#allocation3 + $0xc] sm:$0xf] %v1089
    %s1091 = sld [smem:[#allocation9 + $0x30]]
    %v1092 = vstv %s1091
    %v1093 = vmul.f32 %v1092, %v498
    %v1094 = vmul.f32 %v1092, %v499
    %s1095 = sld [smem:[#allocation9 + $0x31]]
    %v1096 = vstv %s1095
    %v1097 = vmul.f32 %v1096, %v499
    %v1098 = vmul.f32 %v1096, %v498
    %s1099 = sld [smem:[#allocation9 + $0x32]]
    %v1100 = vstv %s1099
    %v1101 = vmul.f32 %v1100, %v498
    %v1102 = vmul.f32 %v1100, %v499
    %s1103 = sld [smem:[#allocation9 + $0x33]]
    %v1104 = vstv %s1103
    %v1105 = vmul.f32 %v1104, %v500
    %v1106 = vmul.f32 %v1104, %v501
    %s1107 = sld [smem:[#allocation9 + $0x34]]
    %v1108 = vstv %s1107
    %v1109 = vmul.f32 %v1108, %v501
    %v1110 = vmul.f32 %v1108, %v500
    %s1111 = sld [smem:[#allocation9 + $0x35]]
    %v1112 = vstv %s1111
    %v1113 = vmul.f32 %v1112, %v500
    %v1114 = vmul.f32 %v1112, %v501
    %s1115 = sld [smem:[#allocation9 + $0x36]]
    %v1116 = vstv %s1115
    %v1117 = vmul.f32 %v1116, %v502
    %v1118 = vmul.f32 %v1116, %v503
    %s1119 = sld [smem:[#allocation9 + $0x37]]
    %v1120 = vstv %s1119
    %v1121 = vmul.f32 %v1120, %v503
    %v1122 = vmul.f32 %v1120, %v502
    %s1123 = sld [smem:[#allocation9 + $0x38]]
    %v1124 = vstv %s1123
    %v1125 = vmul.f32 %v1124, %v502
    %v1126 = vmul.f32 %v1124, %v503
    %s1127 = sld [smem:[#allocation9 + $0x39]]
    %v1128 = vstv %s1127
    %v1129 = vmul.f32 %v1128, %v504
    %v1130 = vmul.f32 %v1128, %v505
    %s1131 = sld [smem:[#allocation9 + $0x3a]]
    %v1132 = vstv %s1131
    %v1133 = vmul.f32 %v1132, %v505
    %v1134 = vmul.f32 %v1132, %v504
    %s1135 = sld [smem:[#allocation9 + $0x3b]]
    %v1136 = vstv %s1135
    %v1137 = vmul.f32 %v1136, %v504
    %v1138 = vmul.f32 %v1136, %v505
    %s1139 = sld [smem:[#allocation10 + $0x4]]
    %1141 = vrot.lane.b32.xlu0 %v1097, 127
    %v1142 = vpop.permute.xlu0 %1141
    %v1144 = vadd.f32 %v1093, %v1142
    %1146 = vrot.lane.b32.xlu0 %v1105, 1
    %v1147 = vpop.permute.xlu0 %1146
    %v1149 = vadd.f32 %v1101, %v1147
    %v1150 = vadd.f32 %v1109, %v1113
    %1152 = vrot.lane.b32.xlu0 %v1121, 127
    %v1153 = vpop.permute.xlu0 %1152
    %v1155 = vadd.f32 %v1117, %v1153
    %1157 = vrot.lane.b32.xlu0 %v1129, 1
    %v1158 = vpop.permute.xlu0 %1157
    %v1160 = vadd.f32 %v1125, %v1158
    %v1161 = vadd.f32 %v1133, %v1137
    %1163 = vrot.lane.b32.xlu0 %v1149, 127
    %v1164 = vpop.permute.xlu0 %1163
    %v1166 = vadd.f32 %v1144, %v1164
    %1168 = vrot.lane.b32.xlu0 %v1155, 1
    %v1169 = vpop.permute.xlu0 %1168
    %v1171 = vadd.f32 %v1150, %v1169
    %v1172 = vadd.f32 %v1160, %v1161
    %1174 = vrot.lane.b32.xlu0 %v1171, 127
    %v1175 = vpop.permute.xlu0 %1174
    %v1177 = vadd.f32 %v1166, %v1175
    %1179 = vrot.lane.b32.xlu0 %v1172, 127
    %v1180 = vpop.permute.xlu0 %1179
    %v1182 = vadd.f32 %v1177, %v1180
    %v1183 = vadd.f32 %v1094, %v1098
    %1185 = vrot.lane.b32.xlu0 %v1106, 1
    %v1186 = vpop.permute.xlu0 %1185
    %v1188 = vadd.f32 %v1102, %v1186
    %1190 = vrot.lane.b32.xlu0 %v1114, 127
    %v1191 = vpop.permute.xlu0 %1190
    %v1193 = vadd.f32 %v1110, %v1191
    %v1194 = vadd.f32 %v1118, %v1122
    %1196 = vrot.lane.b32.xlu0 %v1130, 1
    %v1197 = vpop.permute.xlu0 %1196
    %v1199 = vadd.f32 %v1126, %v1197
    %1201 = vrot.lane.b32.xlu0 %v1138, 127
    %v1202 = vpop.permute.xlu0 %1201
    %v1204 = vadd.f32 %v1134, %v1202
    %1206 = vrot.lane.b32.xlu0 %v1188, 127
    %v1207 = vpop.permute.xlu0 %1206
    %v1209 = vadd.f32 %v1183, %v1207
    %v1210 = vadd.f32 %v1193, %v1194
    %1212 = vrot.lane.b32.xlu0 %v1204, 1
    %v1213 = vpop.permute.xlu0 %1212
    %v1215 = vadd.f32 %v1199, %v1213
    %v1216 = vadd.f32 %v1209, %v1210
    %1218 = vrot.lane.b32.xlu0 %v1215, 127
    %v1219 = vpop.permute.xlu0 %1218
    %v1221 = vadd.f32 %v1216, %v1219
    %1223 = vrot.lane.b32.xlu0 %v1221, 127
    %v1224 = vpop.permute.xlu0 %1223
    %v1226 = vmax.f32 %v1182, %v1224
    %v1227 = vstv %s1139
    %v1228 = vadd.f32 %v1226, %v1227
    %v1229 = vmax.f32 %v1228, 0.0
    %1231 = vrot.lane.b32.xlu0 %v1229, 127
    %v1232 = vpop.permute.xlu0 %1231
    %v1234 = vsel %vm649, %v1232, 0.0
    %v1235 = vpack.c.bf16 %v1234, %v1234
    %1236 = vst [vmem:[#allocation3 + $0x10] sm:$0xf] %v1235
    %s1237 = sld [smem:[#allocation9 + $0x3c]]
    %v1238 = vstv %s1237
    %v1239 = vmul.f32 %v1238, %v498
    %v1240 = vmul.f32 %v1238, %v499
    %s1241 = sld [smem:[#allocation9 + $0x3d]]
    %v1242 = vstv %s1241
    %v1243 = vmul.f32 %v1242, %v499
    %v1244 = vmul.f32 %v1242, %v498
    %s1245 = sld [smem:[#allocation9 + $0x3e]]
    %v1246 = vstv %s1245
    %v1247 = vmul.f32 %v1246, %v498
    %v1248 = vmul.f32 %v1246, %v499
    %s1249 = sld [smem:[#allocation9 + $0x3f]]
    %v1250 = vstv %s1249
    %v1251 = vmul.f32 %v1250, %v500
    %v1252 = vmul.f32 %v1250, %v501
    %s1253 = sld [smem:[#allocation9 + $0x40]]
    %v1254 = vstv %s1253
    %v1255 = vmul.f32 %v1254, %v501
    %v1256 = vmul.f32 %v1254, %v500
    %s1257 = sld [smem:[#allocation9 + $0x41]]
    %v1258 = vstv %s1257
    %v1259 = vmul.f32 %v1258, %v500
    %v1260 = vmul.f32 %v1258, %v501
    %s1261 = sld [smem:[#allocation9 + $0x42]]
    %v1262 = vstv %s1261
    %v1263 = vmul.f32 %v1262, %v502
    %v1264 = vmul.f32 %v1262, %v503
    %s1265 = sld [smem:[#allocation9 + $0x43]]
    %v1266 = vstv %s1265
    %v1267 = vmul.f32 %v1266, %v503
    %v1268 = vmul.f32 %v1266, %v502
    %s1269 = sld [smem:[#allocation9 + $0x44]]
    %v1270 = vstv %s1269
    %v1271 = vmul.f32 %v1270, %v502
    %v1272 = vmul.f32 %v1270, %v503
    %s1273 = sld [smem:[#allocation9 + $0x45]]
    %v1274 = vstv %s1273
    %v1275 = vmul.f32 %v1274, %v504
    %v1276 = vmul.f32 %v1274, %v505
    %s1277 = sld [smem:[#allocation9 + $0x46]]
    %v1278 = vstv %s1277
    %v1279 = vmul.f32 %v1278, %v505
    %v1280 = vmul.f32 %v1278, %v504
    %s1281 = sld [smem:[#allocation9 + $0x47]]
    %v1282 = vstv %s1281
    %v1283 = vmul.f32 %v1282, %v504
    %v1284 = vmul.f32 %v1282, %v505
    %s1285 = sld [smem:[#allocation10 + $0x5]]
    %1287 = vrot.lane.b32.xlu0 %v1243, 127
    %v1288 = vpop.permute.xlu0 %1287
    %v1290 = vadd.f32 %v1239, %v1288
    %1292 = vrot.lane.b32.xlu0 %v1251, 1
    %v1293 = vpop.permute.xlu0 %1292
    %v1295 = vadd.f32 %v1247, %v1293
    %v1296 = vadd.f32 %v1255, %v1259
    %1298 = vrot.lane.b32.xlu0 %v1267, 127
    %v1299 = vpop.permute.xlu0 %1298
    %v1301 = vadd.f32 %v1263, %v1299
    %1303 = vrot.lane.b32.xlu0 %v1275, 1
    %v1304 = vpop.permute.xlu0 %1303
    %v1306 = vadd.f32 %v1271, %v1304
    %v1307 = vadd.f32 %v1279, %v1283
    %1309 = vrot.lane.b32.xlu0 %v1295, 127
    %v1310 = vpop.permute.xlu0 %1309
    %v1312 = vadd.f32 %v1290, %v1310
    %1314 = vrot.lane.b32.xlu0 %v1301, 1
    %v1315 = vpop.permute.xlu0 %1314
    %v1317 = vadd.f32 %v1296, %v1315
    %v1318 = vadd.f32 %v1306, %v1307
    %1320 = vrot.lane.b32.xlu0 %v1317, 127
    %v1321 = vpop.permute.xlu0 %1320
    %v1323 = vadd.f32 %v1312, %v1321
    %1325 = vrot.lane.b32.xlu0 %v1318, 127
    %v1326 = vpop.permute.xlu0 %1325
    %v1328 = vadd.f32 %v1323, %v1326
    %v1329 = vadd.f32 %v1240, %v1244
    %1331 = vrot.lane.b32.xlu0 %v1252, 1
    %v1332 = vpop.permute.xlu0 %1331
    %v1334 = vadd.f32 %v1248, %v1332
    %1336 = vrot.lane.b32.xlu0 %v1260, 127
    %v1337 = vpop.permute.xlu0 %1336
    %v1339 = vadd.f32 %v1256, %v1337
    %v1340 = vadd.f32 %v1264, %v1268
    %1342 = vrot.lane.b32.xlu0 %v1276, 1
    %v1343 = vpop.permute.xlu0 %1342
    %v1345 = vadd.f32 %v1272, %v1343
    %1347 = vrot.lane.b32.xlu0 %v1284, 127
    %v1348 = vpop.permute.xlu0 %1347
    %v1350 = vadd.f32 %v1280, %v1348
    %1352 = vrot.lane.b32.xlu0 %v1334, 127
    %v1353 = vpop.permute.xlu0 %1352
    %v1355 = vadd.f32 %v1329, %v1353
    %v1356 = vadd.f32 %v1339, %v1340
    %1358 = vrot.lane.b32.xlu0 %v1350, 1
    %v1359 = vpop.permute.xlu0 %1358
    %v1361 = vadd.f32 %v1345, %v1359
    %v1362 = vadd.f32 %v1355, %v1356
    %1364 = vrot.lane.b32.xlu0 %v1361, 127
    %v1365 = vpop.permute.xlu0 %1364
    %v1367 = vadd.f32 %v1362, %v1365
    %1369 = vrot.lane.b32.xlu0 %v1367, 127
    %v1370 = vpop.permute.xlu0 %1369
    %v1372 = vmax.f32 %v1328, %v1370
    %v1373 = vstv %s1285
    %v1374 = vadd.f32 %v1372, %v1373
    %v1375 = vmax.f32 %v1374, 0.0
    %1377 = vrot.lane.b32.xlu0 %v1375, 127
    %v1378 = vpop.permute.xlu0 %1377
    %v1380 = vsel %vm649, %v1378, 0.0
    %v1381 = vpack.c.bf16 %v1380, %v1380
    %1382 = vst [vmem:[#allocation3 + $0x14] sm:$0xf] %v1381
    %s1383 = sld [smem:[#allocation9 + $0x48]]
    %v1384 = vstv %s1383
    %v1385 = vmul.f32 %v1384, %v498
    %v1386 = vmul.f32 %v1384, %v499
    %s1387 = sld [smem:[#allocation9 + $0x49]]
    %v1388 = vstv %s1387
    %v1389 = vmul.f32 %v1388, %v499
    %v1390 = vmul.f32 %v1388, %v498
    %s1391 = sld [smem:[#allocation9 + $0x4a]]
    %v1392 = vstv %s1391
    %v1393 = vmul.f32 %v1392, %v498
    %v1394 = vmul.f32 %v1392, %v499
    %s1395 = sld [smem:[#allocation9 + $0x4b]]
    %v1396 = vstv %s1395
    %v1397 = vmul.f32 %v1396, %v500
    %v1398 = vmul.f32 %v1396, %v501
    %s1399 = sld [smem:[#allocation9 + $0x4c]]
    %v1400 = vstv %s1399
    %v1401 = vmul.f32 %v1400, %v501
    %v1402 = vmul.f32 %v1400, %v500
    %s1403 = sld [smem:[#allocation9 + $0x4d]]
    %v1404 = vstv %s1403
    %v1405 = vmul.f32 %v1404, %v500
    %v1406 = vmul.f32 %v1404, %v501
    %s1407 = sld [smem:[#allocation9 + $0x4e]]
    %v1408 = vstv %s1407
    %v1409 = vmul.f32 %v1408, %v502
    %v1410 = vmul.f32 %v1408, %v503
    %s1411 = sld [smem:[#allocation9 + $0x4f]]
    %v1412 = vstv %s1411
    %v1413 = vmul.f32 %v1412, %v503
    %v1414 = vmul.f32 %v1412, %v502
    %s1415 = sld [smem:[#allocation9 + $0x50]]
    %v1416 = vstv %s1415
    %v1417 = vmul.f32 %v1416, %v502
    %v1418 = vmul.f32 %v1416, %v503
    %s1419 = sld [smem:[#allocation9 + $0x51]]
    %v1420 = vstv %s1419
    %v1421 = vmul.f32 %v1420, %v504
    %v1422 = vmul.f32 %v1420, %v505
    %s1423 = sld [smem:[#allocation9 + $0x52]]
    %v1424 = vstv %s1423
    %v1425 = vmul.f32 %v1424, %v505
    %v1426 = vmul.f32 %v1424, %v504
    %s1427 = sld [smem:[#allocation9 + $0x53]]
    %v1428 = vstv %s1427
    %v1429 = vmul.f32 %v1428, %v504
    %v1430 = vmul.f32 %v1428, %v505
    %s1431 = sld [smem:[#allocation10 + $0x6]]
    %1433 = vrot.lane.b32.xlu0 %v1389, 127
    %v1434 = vpop.permute.xlu0 %1433
    %v1436 = vadd.f32 %v1385, %v1434
    %1438 = vrot.lane.b32.xlu0 %v1397, 1
    %v1439 = vpop.permute.xlu0 %1438
    %v1441 = vadd.f32 %v1393, %v1439
    %v1442 = vadd.f32 %v1401, %v1405
    %1444 = vrot.lane.b32.xlu0 %v1413, 127
    %v1445 = vpop.permute.xlu0 %1444
    %v1447 = vadd.f32 %v1409, %v1445
    %1449 = vrot.lane.b32.xlu0 %v1421, 1
    %v1450 = vpop.permute.xlu0 %1449
    %v1452 = vadd.f32 %v1417, %v1450
    %v1453 = vadd.f32 %v1425, %v1429
    %1455 = vrot.lane.b32.xlu0 %v1441, 127
    %v1456 = vpop.permute.xlu0 %1455
    %v1458 = vadd.f32 %v1436, %v1456
    %1460 = vrot.lane.b32.xlu0 %v1447, 1
    %v1461 = vpop.permute.xlu0 %1460
    %v1463 = vadd.f32 %v1442, %v1461
    %v1464 = vadd.f32 %v1452, %v1453
    %1466 = vrot.lane.b32.xlu0 %v1463, 127
    %v1467 = vpop.permute.xlu0 %1466
    %v1469 = vadd.f32 %v1458, %v1467
    %1471 = vrot.lane.b32.xlu0 %v1464, 127
    %v1472 = vpop.permute.xlu0 %1471
    %v1474 = vadd.f32 %v1469, %v1472
    %v1475 = vadd.f32 %v1386, %v1390
    %1477 = vrot.lane.b32.xlu0 %v1398, 1
    %v1478 = vpop.permute.xlu0 %1477
    %v1480 = vadd.f32 %v1394, %v1478
    %1482 = vrot.lane.b32.xlu0 %v1406, 127
    %v1483 = vpop.permute.xlu0 %1482
    %v1485 = vadd.f32 %v1402, %v1483
    %v1486 = vadd.f32 %v1410, %v1414
    %1488 = vrot.lane.b32.xlu0 %v1422, 1
    %v1489 = vpop.permute.xlu0 %1488
    %v1491 = vadd.f32 %v1418, %v1489
    %1493 = vrot.lane.b32.xlu0 %v1430, 127
    %v1494 = vpop.permute.xlu0 %1493
    %v1496 = vadd.f32 %v1426, %v1494
    %1498 = vrot.lane.b32.xlu0 %v1480, 127
    %v1499 = vpop.permute.xlu0 %1498
    %v1501 = vadd.f32 %v1475, %v1499
    %v1502 = vadd.f32 %v1485, %v1486
    %1504 = vrot.lane.b32.xlu0 %v1496, 1
    %v1505 = vpop.permute.xlu0 %1504
    %v1507 = vadd.f32 %v1491, %v1505
    %v1508 = vadd.f32 %v1501, %v1502
    %1510 = vrot.lane.b32.xlu0 %v1507, 127
    %v1511 = vpop.permute.xlu0 %1510
    %v1513 = vadd.f32 %v1508, %v1511
    %1515 = vrot.lane.b32.xlu0 %v1513, 127
    %v1516 = vpop.permute.xlu0 %1515
    %v1518 = vmax.f32 %v1474, %v1516
    %v1519 = vstv %s1431
    %v1520 = vadd.f32 %v1518, %v1519
    %v1521 = vmax.f32 %v1520, 0.0
    %1523 = vrot.lane.b32.xlu0 %v1521, 127
    %v1524 = vpop.permute.xlu0 %1523
    %v1526 = vsel %vm649, %v1524, 0.0
    %v1527 = vpack.c.bf16 %v1526, %v1526
    %1528 = vst [vmem:[#allocation3 + $0x18] sm:$0xf] %v1527
    %s1529 = sld [smem:[#allocation9 + $0x54]]
    %v1530 = vstv %s1529
    %v1531 = vmul.f32 %v1530, %v498
    %v1532 = vmul.f32 %v1530, %v499
    %s1533 = sld [smem:[#allocation9 + $0x55]]
    %v1534 = vstv %s1533
    %v1535 = vmul.f32 %v1534, %v499
    %v1536 = vmul.f32 %v1534, %v498
    %s1537 = sld [smem:[#allocation9 + $0x56]]
    %v1538 = vstv %s1537
    %v1539 = vmul.f32 %v1538, %v498
    %v1540 = vmul.f32 %v1538, %v499
    %s1541 = sld [smem:[#allocation9 + $0x57]]
    %v1542 = vstv %s1541
    %v1543 = vmul.f32 %v1542, %v500
    %v1544 = vmul.f32 %v1542, %v501
    %s1545 = sld [smem:[#allocation9 + $0x58]]
    %v1546 = vstv %s1545
    %v1547 = vmul.f32 %v1546, %v501
    %v1548 = vmul.f32 %v1546, %v500
    %s1549 = sld [smem:[#allocation9 + $0x59]]
    %v1550 = vstv %s1549
    %v1551 = vmul.f32 %v1550, %v500
    %v1552 = vmul.f32 %v1550, %v501
    %s1553 = sld [smem:[#allocation9 + $0x5a]]
    %v1554 = vstv %s1553
    %v1555 = vmul.f32 %v1554, %v502
    %v1556 = vmul.f32 %v1554, %v503
    %s1557 = sld [smem:[#allocation9 + $0x5b]]
    %v1558 = vstv %s1557
    %v1559 = vmul.f32 %v1558, %v503
    %v1560 = vmul.f32 %v1558, %v502
    %s1561 = sld [smem:[#allocation9 + $0x5c]]
    %v1562 = vstv %s1561
    %v1563 = vmul.f32 %v1562, %v502
    %v1564 = vmul.f32 %v1562, %v503
    %s1565 = sld [smem:[#allocation9 + $0x5d]]
    %v1566 = vstv %s1565
    %v1567 = vmul.f32 %v1566, %v504
    %v1568 = vmul.f32 %v1566, %v505
    %s1569 = sld [smem:[#allocation9 + $0x5e]]
    %v1570 = vstv %s1569
    %v1571 = vmul.f32 %v1570, %v505
    %v1572 = vmul.f32 %v1570, %v504
    %s1573 = sld [smem:[#allocation9 + $0x5f]]
    %v1574 = vstv %s1573
    %v1575 = vmul.f32 %v1574, %v504
    %v1576 = vmul.f32 %v1574, %v505
    %s1577 = sld [smem:[#allocation10 + $0x7]]
    %1579 = vrot.lane.b32.xlu0 %v1535, 127
    %v1580 = vpop.permute.xlu0 %1579
    %v1582 = vadd.f32 %v1531, %v1580
    %1584 = vrot.lane.b32.xlu0 %v1543, 1
    %v1585 = vpop.permute.xlu0 %1584
    %v1587 = vadd.f32 %v1539, %v1585
    %v1588 = vadd.f32 %v1547, %v1551
    %1590 = vrot.lane.b32.xlu0 %v1559, 127
    %v1591 = vpop.permute.xlu0 %1590
    %v1593 = vadd.f32 %v1555, %v1591
    %1595 = vrot.lane.b32.xlu0 %v1567, 1
    %v1596 = vpop.permute.xlu0 %1595
    %v1598 = vadd.f32 %v1563, %v1596
    %v1599 = vadd.f32 %v1571, %v1575
    %1601 = vrot.lane.b32.xlu0 %v1587, 127
    %v1602 = vpop.permute.xlu0 %1601
    %v1604 = vadd.f32 %v1582, %v1602
    %1606 = vrot.lane.b32.xlu0 %v1593, 1
    %v1607 = vpop.permute.xlu0 %1606
    %v1609 = vadd.f32 %v1588, %v1607
    %v1610 = vadd.f32 %v1598, %v1599
    %1612 = vrot.lane.b32.xlu0 %v1609, 127
    %v1613 = vpop.permute.xlu0 %1612
    %v1615 = vadd.f32 %v1604, %v1613
    %1617 = vrot.lane.b32.xlu0 %v1610, 127
    %v1618 = vpop.permute.xlu0 %1617
    %v1620 = vadd.f32 %v1615, %v1618
    %v1621 = vadd.f32 %v1532, %v1536
    %1623 = vrot.lane.b32.xlu0 %v1544, 1
    %v1624 = vpop.permute.xlu0 %1623
    %v1626 = vadd.f32 %v1540, %v1624
    %1628 = vrot.lane.b32.xlu0 %v1552, 127
    %v1629 = vpop.permute.xlu0 %1628
    %v1631 = vadd.f32 %v1548, %v1629
    %v1632 = vadd.f32 %v1556, %v1560
    %1634 = vrot.lane.b32.xlu0 %v1568, 1
    %v1635 = vpop.permute.xlu0 %1634
    %v1637 = vadd.f32 %v1564, %v1635
    %1639 = vrot.lane.b32.xlu0 %v1576, 127
    %v1640 = vpop.permute.xlu0 %1639
    %v1642 = vadd.f32 %v1572, %v1640
    %1644 = vrot.lane.b32.xlu0 %v1626, 127
    %v1645 = vpop.permute.xlu0 %1644
    %v1647 = vadd.f32 %v1621, %v1645
    %v1648 = vadd.f32 %v1631, %v1632
    %1650 = vrot.lane.b32.xlu0 %v1642, 1
    %v1651 = vpop.permute.xlu0 %1650
    %v1653 = vadd.f32 %v1637, %v1651
    %v1654 = vadd.f32 %v1647, %v1648
    %1656 = vrot.lane.b32.xlu0 %v1653, 127
    %v1657 = vpop.permute.xlu0 %1656
    %v1659 = vadd.f32 %v1654, %v1657
    %1661 = vrot.lane.b32.xlu0 %v1659, 127
    %v1662 = vpop.permute.xlu0 %1661
    %v1664 = vmax.f32 %v1620, %v1662
    %v1665 = vstv %s1577
    %v1666 = vadd.f32 %v1664, %v1665
    %v1667 = vmax.f32 %v1666, 0.0
    %1669 = vrot.lane.b32.xlu0 %v1667, 127
    %v1670 = vpop.permute.xlu0 %1669
    %v1672 = vsel %vm649, %v1670, 0.0
    %v1673 = vpack.c.bf16 %v1672, %v1672
    %1674 = vst [vmem:[#allocation3 + $0x1c] sm:$0xf] %v1673
    %v1675 = vld [vmem:[#allocation3] sm:$0xff]
    %v1676 = vld [vmem:[#allocation3 + $0x8] sm:$0xff]
    %v1677 = vld [vmem:[#allocation3 + $0x10] sm:$0xff]
    %v1678 = vld [vmem:[#allocation3 + $0x18] sm:$0xff]
    %v1679 = vld [vmem:[%s5] sm:$0xf]
    %v1680 = vld [vmem:[%s5 + $0x4] sm:$0xf]
    %v1681 = vld [vmem:[%s5 + $0x8] sm:$0xf]
    %v1682 = vld [vmem:[%s5 + $0xc] sm:$0xf]
    %v1683 = vld [vmem:[%s5 + $0x10] sm:$0xf]
    %v1684 = vld [vmem:[%s5 + $0x14] sm:$0xf]
    %v1685 = vld [vmem:[%s5 + $0x18] sm:$0xf]
    %v1686 = vld [vmem:[%s5 + $0x1c] sm:$0xf]
    %v1687 = vld [vmem:[%s5 + $0x20] sm:$0xf]
    %v1688 = vld [vmem:[%s5 + $0x24] sm:$0xf]
    %v1689 = vld [vmem:[%s5 + $0x28] sm:$0xf]
    %v1690 = vld [vmem:[%s5 + $0x2c] sm:$0xf]
    %v1691 = vld [vmem:[%s5 + $0x30] sm:$0xf]
    %v1692 = vld [vmem:[%s5 + $0x34] sm:$0xf]
    %v1693 = vld [vmem:[%s5 + $0x38] sm:$0xf]
    %v1694 = vld [vmem:[%s5 + $0x3c] sm:$0xf]
    %v1695 = vld [vmem:[%s5 + $0x40] sm:$0xf]
    %v1696 = vld [vmem:[%s5 + $0x44] sm:$0xf]
    %v1697 = vld [vmem:[%s5 + $0x48] sm:$0xf]
    %v1698 = vld [vmem:[%s5 + $0x4c] sm:$0xf]
    %v1699 = vld [vmem:[%s5 + $0x50] sm:$0xf]
    %v1700 = vld [vmem:[%s5 + $0x54] sm:$0xf]
    %v1701 = vld [vmem:[%s5 + $0x58] sm:$0xf]
    %v1702 = vld [vmem:[%s5 + $0x5c] sm:$0xf]
    %v1703 = vld [vmem:[%s5 + $0x60] sm:$0xf]
    %v1704 = vld [vmem:[%s5 + $0x64] sm:$0xf]
    %v1705 = vld [vmem:[%s5 + $0x68] sm:$0xf]
    %v1706 = vld [vmem:[%s5 + $0x6c] sm:$0xf]
    %v1707 = vld [vmem:[%s5 + $0x70] sm:$0xf]
    %v1708 = vld [vmem:[%s5 + $0x74] sm:$0xf]
    %v1709 = vld [vmem:[%s5 + $0x78] sm:$0xf]
    %v1710 = vld [vmem:[%s5 + $0x7c] sm:$0xf]
    %v1711 = vld [vmem:[%s5 + $0x80] sm:$0xf]
    %v1712 = vld [vmem:[%s5 + $0x84] sm:$0xf]
    %v1713 = vld [vmem:[%s5 + $0x88] sm:$0xf]
    %v1714 = vld [vmem:[%s5 + $0x8c] sm:$0xf]
    %v1715 = vld [vmem:[%s5 + $0x90] sm:$0xf]
    %v1716 = vld [vmem:[%s5 + $0x94] sm:$0xf]
    %v1717 = vld [vmem:[%s5 + $0x98] sm:$0xf]
    %v1718 = vld [vmem:[%s5 + $0x9c] sm:$0xf]
    %v1719 = vld [vmem:[%s5 + $0xa0] sm:$0xf]
    %v1720 = vld [vmem:[%s5 + $0xa4] sm:$0xf]
    %v1721 = vld [vmem:[%s5 + $0xa8] sm:$0xf]
    %v1722 = vld [vmem:[%s5 + $0xac] sm:$0xf]
    %v1723 = vld [vmem:[%s5 + $0xb0] sm:$0xf]
    %v1724 = vld [vmem:[%s5 + $0xb4] sm:$0xf]
    %v1725 = vld [vmem:[%s5 + $0xb8] sm:$0xf]
    %v1726 = vld [vmem:[%s5 + $0xbc] sm:$0xf]
    %v1727 = vld [vmem:[%s5 + $0xc0] sm:$0xf]
    %v1728 = vld [vmem:[%s5 + $0xc4] sm:$0xf]
    %v1729 = vld [vmem:[%s5 + $0xc8] sm:$0xf]
    %v1730 = vld [vmem:[%s5 + $0xcc] sm:$0xf]
    %v1731 = vld [vmem:[%s5 + $0xd0] sm:$0xf]
    %v1732 = vld [vmem:[%s5 + $0xd4] sm:$0xf]
    %v1733 = vld [vmem:[%s5 + $0xd8] sm:$0xf]
    %v1734 = vld [vmem:[%s5 + $0xdc] sm:$0xf]
    %v1735 = vld [vmem:[%s5 + $0xe0] sm:$0xf]
    %v1736 = vld [vmem:[%s5 + $0xe4] sm:$0xf]
    %v1737 = vld [vmem:[%s5 + $0xe8] sm:$0xf]
    %v1738 = vld [vmem:[%s5 + $0xec] sm:$0xf]
    %v1739 = vld [vmem:[%s5 + $0xf0] sm:$0xf]
    %v1740 = vld [vmem:[%s5 + $0xf4] sm:$0xf]
    %v1741 = vld [vmem:[%s5 + $0xf8] sm:$0xf]
    %v1742 = vld [vmem:[%s5 + $0xfc] sm:$0xf]
    %v1743 = vld [vmem:[%s5 + $0x100] sm:$0xf]
    %v1744 = vld [vmem:[%s5 + $0x104] sm:$0xf]
    %v1745 = vld [vmem:[%s5 + $0x108] sm:$0xf]
    %v1746 = vld [vmem:[%s5 + $0x10c] sm:$0xf]
    %v1747 = vld [vmem:[%s5 + $0x110] sm:$0xf]
    %v1748 = vld [vmem:[%s5 + $0x114] sm:$0xf]
    %v1749 = vld [vmem:[%s5 + $0x118] sm:$0xf]
    %v1750 = vld [vmem:[%s5 + $0x11c] sm:$0xf]
    %v1751 = vld [vmem:[%s5 + $0x120] sm:$0xf]
    %v1752 = vld [vmem:[%s5 + $0x124] sm:$0xf]
    %v1753 = vld [vmem:[%s5 + $0x128] sm:$0xf]
    %v1754 = vld [vmem:[%s5 + $0x12c] sm:$0xf]
    %v1755 = vld [vmem:[%s5 + $0x130] sm:$0xf]
    %v1756 = vld [vmem:[%s5 + $0x134] sm:$0xf]
    %v1757 = vld [vmem:[%s5 + $0x138] sm:$0xf]
    %v1758 = vld [vmem:[%s5 + $0x13c] sm:$0xf]
    %v1759 = vld [vmem:[%s5 + $0x140] sm:$0xf]
    %v1760 = vld [vmem:[%s5 + $0x144] sm:$0xf]
    %v1761 = vld [vmem:[%s5 + $0x148] sm:$0xf]
    %v1762 = vld [vmem:[%s5 + $0x14c] sm:$0xf]
    %v1763 = vld [vmem:[%s5 + $0x150] sm:$0xf]
    %v1764 = vld [vmem:[%s5 + $0x154] sm:$0xf]
    %v1765 = vld [vmem:[%s5 + $0x158] sm:$0xf]
    %v1766 = vld [vmem:[%s5 + $0x15c] sm:$0xf]
    %v1767 = vld [vmem:[%s5 + $0x160] sm:$0xf]
    %v1768 = vld [vmem:[%s5 + $0x164] sm:$0xf]
    %v1769 = vld [vmem:[%s5 + $0x168] sm:$0xf]
    %v1770 = vld [vmem:[%s5 + $0x16c] sm:$0xf]
    %v1771 = vld [vmem:[%s5 + $0x170] sm:$0xf]
    %v1772 = vld [vmem:[%s5 + $0x174] sm:$0xf]
    %v1773 = vld [vmem:[%s5 + $0x178] sm:$0xf]
    %v1774 = vld [vmem:[%s5 + $0x17c] sm:$0xf]
    %v1775 = vld [vmem:[%s5 + $0x180] sm:$0xf]
    %v1776 = vld [vmem:[%s5 + $0x184] sm:$0xf]
    %v1777 = vld [vmem:[%s5 + $0x188] sm:$0xf]
    %v1778 = vld [vmem:[%s5 + $0x18c] sm:$0xf]
    %v1779 = vld [vmem:[%s5 + $0x190] sm:$0xf]
    %v1780 = vld [vmem:[%s5 + $0x194] sm:$0xf]
    %v1781 = vld [vmem:[%s5 + $0x198] sm:$0xf]
    %v1782 = vld [vmem:[%s5 + $0x19c] sm:$0xf]
    %v1783 = vld [vmem:[%s5 + $0x1a0] sm:$0xf]
    %v1784 = vld [vmem:[%s5 + $0x1a4] sm:$0xf]
    %v1785 = vld [vmem:[%s5 + $0x1a8] sm:$0xf]
    %v1786 = vld [vmem:[%s5 + $0x1ac] sm:$0xf]
    %v1787 = vld [vmem:[%s5 + $0x1b0] sm:$0xf]
    %v1788 = vld [vmem:[%s5 + $0x1b4] sm:$0xf]
    %v1789 = vld [vmem:[%s5 + $0x1b8] sm:$0xf]
    %v1790 = vld [vmem:[%s5 + $0x1bc] sm:$0xf]
    %v1791 = vld [vmem:[%s5 + $0x1c0] sm:$0xf]
    %v1792 = vld [vmem:[%s5 + $0x1c4] sm:$0xf]
    %v1793 = vld [vmem:[%s5 + $0x1c8] sm:$0xf]
    %v1794 = vld [vmem:[%s5 + $0x1cc] sm:$0xf]
    %v1795 = vld [vmem:[%s5 + $0x1d0] sm:$0xf]
    %v1796 = vld [vmem:[%s5 + $0x1d4] sm:$0xf]
    %v1797 = vld [vmem:[%s5 + $0x1d8] sm:$0xf]
    %v1798 = vld [vmem:[%s5 + $0x1dc] sm:$0xf]
    %v1799 = vld [vmem:[%s5 + $0x1e0] sm:$0xf]
    %v1800 = vld [vmem:[%s5 + $0x1e4] sm:$0xf]
    %v1801 = vld [vmem:[%s5 + $0x1e8] sm:$0xf]
    %v1802 = vld [vmem:[%s5 + $0x1ec] sm:$0xf]
    %v1803 = vld [vmem:[%s5 + $0x1f0] sm:$0xf]
    %v1804 = vld [vmem:[%s5 + $0x1f4] sm:$0xf]
    %v1805 = vld [vmem:[%s5 + $0x1f8] sm:$0xf]
    %v1806 = vld [vmem:[%s5 + $0x1fc] sm:$0xf]
    %v1807 = vld [vmem:[%s7] sm:$0x1]
    %v1809 = vlaneseq
    %v1810 = vshrl.u32 %v1809, 7
    %v1811 = vsub.s32 0, %v1810
    %v1812 = vrot.slane %v1807, %v1811
    %v1818 = vunpack.c.l.b16 %v1675
    %v1819 = vunpack.c.h.b16 %v1675
    %v1820 = vunpack.c.l.b16 %v1676
    %v1821 = vunpack.c.h.b16 %v1676
    %v1822 = vunpack.c.l.b16 %v1677
    %v1823 = vunpack.c.h.b16 %v1677
    %v1824 = vunpack.c.l.b16 %v1678
    %v1825 = vunpack.c.h.b16 %v1678
    %v1826 = vpack.c.b16 %v1818, %v1818
    %v1827 = vpack.c.b16 %v1819, %v1819
    %v1828 = vpack.c.b16 %v1820, %v1820
    %v1829 = vpack.c.b16 %v1821, %v1821
    %v1830 = vpack.c.b16 %v1822, %v1822
    %v1831 = vpack.c.b16 %v1823, %v1823
    %v1832 = vpack.c.b16 %v1824, %v1824
    %v1833 = vpack.c.b16 %v1825, %v1825
    %v1970 = vunpack.c.l.b16 %v1679
    %v1971 = vunpack.c.l.b16 %v1680
    %v1972 = vunpack.c.l.b16 %v1681
    %v1973 = vunpack.c.l.b16 %v1682
    %v1974 = vunpack.c.l.b16 %v1683
    %v1975 = vunpack.c.l.b16 %v1684
    %v1976 = vunpack.c.l.b16 %v1685
    %v1977 = vunpack.c.l.b16 %v1686
    %v1978 = vunpack.c.l.b16 %v1687
    %v1979 = vunpack.c.l.b16 %v1688
    %v1980 = vunpack.c.l.b16 %v1689
    %v1981 = vunpack.c.l.b16 %v1690
    %v1982 = vunpack.c.l.b16 %v1691
    %v1983 = vunpack.c.l.b16 %v1692
    %v1984 = vunpack.c.l.b16 %v1693
    %v1985 = vunpack.c.l.b16 %v1694
    %v1986 = vunpack.c.l.b16 %v1695
    %v1987 = vunpack.c.l.b16 %v1696
    %v1988 = vunpack.c.l.b16 %v1697
    %v1989 = vunpack.c.l.b16 %v1698
    %v1990 = vunpack.c.l.b16 %v1699
    %v1991 = vunpack.c.l.b16 %v1700
    %v1992 = vunpack.c.l.b16 %v1701
    %v1993 = vunpack.c.l.b16 %v1702
    %v1994 = vunpack.c.l.b16 %v1703
    %v1995 = vunpack.c.l.b16 %v1704
    %v1996 = vunpack.c.l.b16 %v1705
    %v1997 = vunpack.c.l.b16 %v1706
    %v1998 = vunpack.c.l.b16 %v1707
    %v1999 = vunpack.c.l.b16 %v1708
    %v2000 = vunpack.c.l.b16 %v1709
    %v2001 = vunpack.c.l.b16 %v1710
    %v2002 = vunpack.c.l.b16 %v1711
    %v2003 = vunpack.c.l.b16 %v1712
    %v2004 = vunpack.c.l.b16 %v1713
    %v2005 = vunpack.c.l.b16 %v1714
    %v2006 = vunpack.c.l.b16 %v1715
    %v2007 = vunpack.c.l.b16 %v1716
    %v2008 = vunpack.c.l.b16 %v1717
    %v2009 = vunpack.c.l.b16 %v1718
    %v2010 = vunpack.c.l.b16 %v1719
    %v2011 = vunpack.c.l.b16 %v1720
    %v2012 = vunpack.c.l.b16 %v1721
    %v2013 = vunpack.c.l.b16 %v1722
    %v2014 = vunpack.c.l.b16 %v1723
    %v2015 = vunpack.c.l.b16 %v1724
    %v2016 = vunpack.c.l.b16 %v1725
    %v2017 = vunpack.c.l.b16 %v1726
    %v2018 = vunpack.c.l.b16 %v1727
    %v2019 = vunpack.c.l.b16 %v1728
    %v2020 = vunpack.c.l.b16 %v1729
    %v2021 = vunpack.c.l.b16 %v1730
    %v2022 = vunpack.c.l.b16 %v1731
    %v2023 = vunpack.c.l.b16 %v1732
    %v2024 = vunpack.c.l.b16 %v1733
    %v2025 = vunpack.c.l.b16 %v1734
    %v2026 = vunpack.c.l.b16 %v1735
    %v2027 = vunpack.c.l.b16 %v1736
    %v2028 = vunpack.c.l.b16 %v1737
    %v2029 = vunpack.c.l.b16 %v1738
    %v2030 = vunpack.c.l.b16 %v1739
    %v2031 = vunpack.c.l.b16 %v1740
    %v2032 = vunpack.c.l.b16 %v1741
    %v2033 = vunpack.c.l.b16 %v1742
    %v2034 = vunpack.c.l.b16 %v1743
    %v2035 = vunpack.c.l.b16 %v1744
    %v2036 = vunpack.c.l.b16 %v1745
    %v2037 = vunpack.c.l.b16 %v1746
    %v2038 = vunpack.c.l.b16 %v1747
    %v2039 = vunpack.c.l.b16 %v1748
    %v2040 = vunpack.c.l.b16 %v1749
    %v2041 = vunpack.c.l.b16 %v1750
    %v2042 = vunpack.c.l.b16 %v1751
    %v2043 = vunpack.c.l.b16 %v1752
    %v2044 = vunpack.c.l.b16 %v1753
    %v2045 = vunpack.c.l.b16 %v1754
    %v2046 = vunpack.c.l.b16 %v1755
    %v2047 = vunpack.c.l.b16 %v1756
    %v2048 = vunpack.c.l.b16 %v1757
    %v2049 = vunpack.c.l.b16 %v1758
    %v2050 = vunpack.c.l.b16 %v1759
    %v2051 = vunpack.c.l.b16 %v1760
    %v2052 = vunpack.c.l.b16 %v1761
    %v2053 = vunpack.c.l.b16 %v1762
    %v2054 = vunpack.c.l.b16 %v1763
    %v2055 = vunpack.c.l.b16 %v1764
    %v2056 = vunpack.c.l.b16 %v1765
    %v2057 = vunpack.c.l.b16 %v1766
    %v2058 = vunpack.c.l.b16 %v1767
    %v2059 = vunpack.c.l.b16 %v1768
    %v2060 = vunpack.c.l.b16 %v1769
    %v2061 = vunpack.c.l.b16 %v1770
    %v2062 = vunpack.c.l.b16 %v1771
    %v2063 = vunpack.c.l.b16 %v1772
    %v2064 = vunpack.c.l.b16 %v1773
    %v2065 = vunpack.c.l.b16 %v1774
    %v2066 = vunpack.c.l.b16 %v1775
    %v2067 = vunpack.c.l.b16 %v1776
    %v2068 = vunpack.c.l.b16 %v1777
    %v2069 = vunpack.c.l.b16 %v1778
    %v2070 = vunpack.c.l.b16 %v1779
    %v2071 = vunpack.c.l.b16 %v1780
    %v2072 = vunpack.c.l.b16 %v1781
    %v2073 = vunpack.c.l.b16 %v1782
    %v2074 = vunpack.c.l.b16 %v1783
    %v2075 = vunpack.c.l.b16 %v1784
    %v2076 = vunpack.c.l.b16 %v1785
    %v2077 = vunpack.c.l.b16 %v1786
    %v2078 = vunpack.c.l.b16 %v1787
    %v2079 = vunpack.c.l.b16 %v1788
    %v2080 = vunpack.c.l.b16 %v1789
    %v2081 = vunpack.c.l.b16 %v1790
    %v2082 = vunpack.c.l.b16 %v1791
    %v2083 = vunpack.c.l.b16 %v1792
    %v2084 = vunpack.c.l.b16 %v1793
    %v2085 = vunpack.c.l.b16 %v1794
    %v2086 = vunpack.c.l.b16 %v1795
    %v2087 = vunpack.c.l.b16 %v1796
    %v2088 = vunpack.c.l.b16 %v1797
    %v2089 = vunpack.c.l.b16 %v1798
    %v2090 = vunpack.c.l.b16 %v1799
    %v2091 = vunpack.c.l.b16 %v1800
    %v2092 = vunpack.c.l.b16 %v1801
    %v2093 = vunpack.c.l.b16 %v1802
    %v2094 = vunpack.c.l.b16 %v1803
    %v2095 = vunpack.c.l.b16 %v1804
    %v2096 = vunpack.c.l.b16 %v1805
    %v2097 = vunpack.c.l.b16 %v1806
    %v2098 = vpack.c.b16 %v1971, %v1970
    %v2099 = vpack.c.b16 %v1973, %v1972
    %v2100 = vpack.c.b16 %v1975, %v1974
    %v2101 = vpack.c.b16 %v1977, %v1976
    %v2102 = vpack.c.b16 %v1979, %v1978
    %v2103 = vpack.c.b16 %v1981, %v1980
    %v2104 = vpack.c.b16 %v1983, %v1982
    %v2105 = vpack.c.b16 %v1985, %v1984
    %v2106 = vpack.c.b16 %v1987, %v1986
    %v2107 = vpack.c.b16 %v1989, %v1988
    %v2108 = vpack.c.b16 %v1991, %v1990
    %v2109 = vpack.c.b16 %v1993, %v1992
    %v2110 = vpack.c.b16 %v1995, %v1994
    %v2111 = vpack.c.b16 %v1997, %v1996
    %v2112 = vpack.c.b16 %v1999, %v1998
    %v2113 = vpack.c.b16 %v2001, %v2000
    %v2114 = vpack.c.b16 %v2003, %v2002
    %v2115 = vpack.c.b16 %v2005, %v2004
    %v2116 = vpack.c.b16 %v2007, %v2006
    %v2117 = vpack.c.b16 %v2009, %v2008
    %v2118 = vpack.c.b16 %v2011, %v2010
    %v2119 = vpack.c.b16 %v2013, %v2012
    %v2120 = vpack.c.b16 %v2015, %v2014
    %v2121 = vpack.c.b16 %v2017, %v2016
    %v2122 = vpack.c.b16 %v2019, %v2018
    %v2123 = vpack.c.b16 %v2021, %v2020
    %v2124 = vpack.c.b16 %v2023, %v2022
    %v2125 = vpack.c.b16 %v2025, %v2024
    %v2126 = vpack.c.b16 %v2027, %v2026
    %v2127 = vpack.c.b16 %v2029, %v2028
    %v2128 = vpack.c.b16 %v2031, %v2030
    %v2129 = vpack.c.b16 %v2033, %v2032
    %v2130 = vpack.c.b16 %v2035, %v2034
    %v2131 = vpack.c.b16 %v2037, %v2036
    %v2132 = vpack.c.b16 %v2039, %v2038
    %v2133 = vpack.c.b16 %v2041, %v2040
    %v2134 = vpack.c.b16 %v2043, %v2042
    %v2135 = vpack.c.b16 %v2045, %v2044
    %v2136 = vpack.c.b16 %v2047, %v2046
    %v2137 = vpack.c.b16 %v2049, %v2048
    %v2138 = vpack.c.b16 %v2051, %v2050
    %v2139 = vpack.c.b16 %v2053, %v2052
    %v2140 = vpack.c.b16 %v2055, %v2054
    %v2141 = vpack.c.b16 %v2057, %v2056
    %v2142 = vpack.c.b16 %v2059, %v2058
    %v2143 = vpack.c.b16 %v2061, %v2060
    %v2144 = vpack.c.b16 %v2063, %v2062
    %v2145 = vpack.c.b16 %v2065, %v2064
    %v2146 = vpack.c.b16 %v2067, %v2066
    %v2147 = vpack.c.b16 %v2069, %v2068
    %v2148 = vpack.c.b16 %v2071, %v2070
    %v2149 = vpack.c.b16 %v2073, %v2072
    %v2150 = vpack.c.b16 %v2075, %v2074
    %v2151 = vpack.c.b16 %v2077, %v2076
    %v2152 = vpack.c.b16 %v2079, %v2078
    %v2153 = vpack.c.b16 %v2081, %v2080
    %v2154 = vpack.c.b16 %v2083, %v2082
    %v2155 = vpack.c.b16 %v2085, %v2084
    %v2156 = vpack.c.b16 %v2087, %v2086
    %v2157 = vpack.c.b16 %v2089, %v2088
    %v2158 = vpack.c.b16 %v2091, %v2090
    %v2159 = vpack.c.b16 %v2093, %v2092
    %v2160 = vpack.c.b16 %v2095, %v2094
    %v2161 = vpack.c.b16 %v2097, %v2096
    %2226 = vmatprep.subr.bf16.mxu0 0
    %2227 = vmatpush1.bf16.msra.mxu0 %v2098
    %2228 = vmatprep.subr.bf16.mxu0 0
    %2229 = vmatpush1.bf16.msra.mxu0 %v2099
    %2230 = vmatprep.subr.bf16.mxu0 0
    %2231 = vmatpush1.bf16.msra.mxu0 %v2100
    %2232 = vmatprep.subr.bf16.mxu0 0
    %2233 = vmatpush1.bf16.msra.mxu0 %v2101
    %2234 = vmatprep.subr.bf16.mxu0 0
    %2235 = vmatpush1.bf16.msra.mxu0 %v2102
    %2236 = vmatprep.subr.bf16.mxu0 0
    %2237 = vmatpush1.bf16.msra.mxu0 %v2103
    %2238 = vmatprep.subr.bf16.mxu0 0
    %2239 = vmatpush1.bf16.msra.mxu0 %v2104
    %2240 = vmatprep.subr.bf16.mxu0 0
    %2241 = vmatpush1.bf16.msra.mxu0 %v2105
    %2242 = vmatprep.subr.bf16.mxu0 0
    %2243 = vmatpush1.bf16.msra.mxu0 %v2106
    %2244 = vmatprep.subr.bf16.mxu0 0
    %2245 = vmatpush1.bf16.msra.mxu0 %v2107
    %2246 = vmatprep.subr.bf16.mxu0 0
    %2247 = vmatpush1.bf16.msra.mxu0 %v2108
    %2248 = vmatprep.subr.bf16.mxu0 0
    %2249 = vmatpush1.bf16.msra.mxu0 %v2109
    %2250 = vmatprep.subr.bf16.mxu0 0
    %2251 = vmatpush1.bf16.msra.mxu0 %v2110
    %2252 = vmatprep.subr.bf16.mxu0 0
    %2253 = vmatpush1.bf16.msra.mxu0 %v2111
    %2254 = vmatprep.subr.bf16.mxu0 0
    %2255 = vmatpush1.bf16.msra.mxu0 %v2112
    %2256 = vmatprep.subr.bf16.mxu0 0
    %2257 = vmatpush1.bf16.msra.mxu0 %v2113
    %2258 = vmatprep.mubr.bf16.mxu0 %v1827
    %2259 = vmatmul.mubr.bf16.gmra.mrb[0].mxu0 %v1826
    %v2260 = vpop.f32.mrb[0].mxu0
    %v2261 = vadd.f32 %v1812, %v2260
    %v2262 = vpop.f32.mrb[0].mxu0
    %v2263 = vpop.f32.mrb[0].mxu0
    %v2264 = vpop.f32.mrb[0].mxu0
    %2265 = vdwg.mxu0
    %2266 = vmatprep.subr.bf16.mxu0 0
    %2267 = vmatpush1.bf16.msra.mxu0 %v2114
    %2268 = vmatprep.subr.bf16.mxu0 0
    %2269 = vmatpush1.bf16.msra.mxu0 %v2115
    %2270 = vmatprep.subr.bf16.mxu0 0
    %2271 = vmatpush1.bf16.msra.mxu0 %v2116
    %2272 = vmatprep.subr.bf16.mxu0 0
    %2273 = vmatpush1.bf16.msra.mxu0 %v2117
    %2274 = vmatprep.subr.bf16.mxu0 0
    %2275 = vmatpush1.bf16.msra.mxu0 %v2118
    %2276 = vmatprep.subr.bf16.mxu0 0
    %2277 = vmatpush1.bf16.msra.mxu0 %v2119
    %2278 = vmatprep.subr.bf16.mxu0 0
    %2279 = vmatpush1.bf16.msra.mxu0 %v2120
    %2280 = vmatprep.subr.bf16.mxu0 0
    %2281 = vmatpush1.bf16.msra.mxu0 %v2121
    %2282 = vmatprep.subr.bf16.mxu0 0
    %2283 = vmatpush1.bf16.msra.mxu0 %v2122
    %2284 = vmatprep.subr.bf16.mxu0 0
    %2285 = vmatpush1.bf16.msra.mxu0 %v2123
    %2286 = vmatprep.subr.bf16.mxu0 0
    %2287 = vmatpush1.bf16.msra.mxu0 %v2124
    %2288 = vmatprep.subr.bf16.mxu0 0
    %2289 = vmatpush1.bf16.msra.mxu0 %v2125
    %2290 = vmatprep.subr.bf16.mxu0 0
    %2291 = vmatpush1.bf16.msra.mxu0 %v2126
    %2292 = vmatprep.subr.bf16.mxu0 0
    %2293 = vmatpush1.bf16.msra.mxu0 %v2127
    %2294 = vmatprep.subr.bf16.mxu0 0
    %2295 = vmatpush1.bf16.msra.mxu0 %v2128
    %2296 = vmatprep.subr.bf16.mxu0 0
    %2297 = vmatpush1.bf16.msra.mxu0 %v2129
    %2298 = vmatprep.mubr.bf16.mxu0 %v1829
    %2299 = vmatmul.mubr.bf16.gmra.mrb[0].mxu0 %v1828
    %v2300 = vpop.f32.mrb[0].mxu0
    %v2301 = vadd.f32 %v2261, %v2300
    %v2302 = vpop.f32.mrb[0].mxu0
    %v2303 = vpop.f32.mrb[0].mxu0
    %v2304 = vpop.f32.mrb[0].mxu0
    %2305 = vdwg.mxu0
    %2306 = vmatprep.subr.bf16.mxu0 0
    %2307 = vmatpush1.bf16.msra.mxu0 %v2130
    %2308 = vmatprep.subr.bf16.mxu0 0
    %2309 = vmatpush1.bf16.msra.mxu0 %v2131
    %2310 = vmatprep.subr.bf16.mxu0 0
    %2311 = vmatpush1.bf16.msra.mxu0 %v2132
    %2312 = vmatprep.subr.bf16.mxu0 0
    %2313 = vmatpush1.bf16.msra.mxu0 %v2133
    %2314 = vmatprep.subr.bf16.mxu0 0
    %2315 = vmatpush1.bf16.msra.mxu0 %v2134
    %2316 = vmatprep.subr.bf16.mxu0 0
    %2317 = vmatpush1.bf16.msra.mxu0 %v2135
    %2318 = vmatprep.subr.bf16.mxu0 0
    %2319 = vmatpush1.bf16.msra.mxu0 %v2136
    %2320 = vmatprep.subr.bf16.mxu0 0
    %2321 = vmatpush1.bf16.msra.mxu0 %v2137
    %2322 = vmatprep.subr.bf16.mxu0 0
    %2323 = vmatpush1.bf16.msra.mxu0 %v2138
    %2324 = vmatprep.subr.bf16.mxu0 0
    %2325 = vmatpush1.bf16.msra.mxu0 %v2139
    %2326 = vmatprep.subr.bf16.mxu0 0
    %2327 = vmatpush1.bf16.msra.mxu0 %v2140
    %2328 = vmatprep.subr.bf16.mxu0 0
    %2329 = vmatpush1.bf16.msra.mxu0 %v2141
    %2330 = vmatprep.subr.bf16.mxu0 0
    %2331 = vmatpush1.bf16.msra.mxu0 %v2142
    %2332 = vmatprep.subr.bf16.mxu0 0
    %2333 = vmatpush1.bf16.msra.mxu0 %v2143
    %2334 = vmatprep.subr.bf16.mxu0 0
    %2335 = vmatpush1.bf16.msra.mxu0 %v2144
    %2336 = vmatprep.subr.bf16.mxu0 0
    %2337 = vmatpush1.bf16.msra.mxu0 %v2145
    %2338 = vmatprep.mubr.bf16.mxu0 %v1831
    %2339 = vmatmul.mubr.bf16.gmra.mrb[0].mxu0 %v1830
    %v2340 = vpop.f32.mrb[0].mxu0
    %v2341 = vadd.f32 %v2301, %v2340
    %v2342 = vpop.f32.mrb[0].mxu0
    %v2343 = vpop.f32.mrb[0].mxu0
    %v2344 = vpop.f32.mrb[0].mxu0
    %2345 = vdwg.mxu0
    %2346 = vmatprep.subr.bf16.mxu0 0
    %2347 = vmatpush1.bf16.msra.mxu0 %v2146
    %2348 = vmatprep.subr.bf16.mxu0 0
    %2349 = vmatpush1.bf16.msra.mxu0 %v2147
    %2350 = vmatprep.subr.bf16.mxu0 0
    %2351 = vmatpush1.bf16.msra.mxu0 %v2148
    %2352 = vmatprep.subr.bf16.mxu0 0
    %2353 = vmatpush1.bf16.msra.mxu0 %v2149
    %2354 = vmatprep.subr.bf16.mxu0 0
    %2355 = vmatpush1.bf16.msra.mxu0 %v2150
    %2356 = vmatprep.subr.bf16.mxu0 0
    %2357 = vmatpush1.bf16.msra.mxu0 %v2151
    %2358 = vmatprep.subr.bf16.mxu0 0
    %2359 = vmatpush1.bf16.msra.mxu0 %v2152
    %2360 = vmatprep.subr.bf16.mxu0 0
    %2361 = vmatpush1.bf16.msra.mxu0 %v2153
    %2362 = vmatprep.subr.bf16.mxu0 0
    %2363 = vmatpush1.bf16.msra.mxu0 %v2154
    %2364 = vmatprep.subr.bf16.mxu0 0
    %2365 = vmatpush1.bf16.msra.mxu0 %v2155
    %2366 = vmatprep.subr.bf16.mxu0 0
    %2367 = vmatpush1.bf16.msra.mxu0 %v2156
    %2368 = vmatprep.subr.bf16.mxu0 0
    %2369 = vmatpush1.bf16.msra.mxu0 %v2157
    %2370 = vmatprep.subr.bf16.mxu0 0
    %2371 = vmatpush1.bf16.msra.mxu0 %v2158
    %2372 = vmatprep.subr.bf16.mxu0 0
    %2373 = vmatpush1.bf16.msra.mxu0 %v2159
    %2374 = vmatprep.subr.bf16.mxu0 0
    %2375 = vmatpush1.bf16.msra.mxu0 %v2160
    %2376 = vmatprep.subr.bf16.mxu0 0
    %2377 = vmatpush1.bf16.msra.mxu0 %v2161
    %2378 = vmatprep.mubr.bf16.mxu0 %v1833
    %2379 = vmatmul.mubr.bf16.gmra.mrb[0].mxu0 %v1832
    %v2380 = vpop.f32.mrb[0].mxu0
    %v2381 = vadd.f32 %v2341, %v2380
    %v2382 = vpop.f32.mrb[0].mxu0
    %v2383 = vpop.f32.mrb[0].mxu0
    %v2384 = vpop.f32.mrb[0].mxu0
    %2385 = vdwg.mxu0
    %v2386 = vld [vmem:[%s6] sm:$0xf]
    %v2387 = vld [vmem:[%s6 + $0x4] sm:$0xf]
    %v2388 = vld [vmem:[%s6 + $0x8] sm:$0xf]
    %v2389 = vld [vmem:[%s6 + $0xc] sm:$0xf]
    %v2394 = vunpack.c.l.b16 %v2386
    %v2395 = vunpack.c.l.b16 %v2387
    %v2396 = vunpack.c.l.b16 %v2388
    %v2397 = vunpack.c.l.b16 %v2389
    %v2398 = vpack.c.b16 %v2395, %v2394
    %v2399 = vpack.c.b16 %v2397, %v2396
    %vm2402 = vcmask 261120
    %v2404 = vsel %vm2402, 0, 0
    %2406 = vmatprep.subr.bf16.mxu0 0
    %2407 = vmatpush1.bf16.msra.mxu0 %v2398
    %2408 = vmatprep.subr.bf16.mxu0 0
    %2409 = vmatpush1.bf16.msra.mxu0 %v2399
    %2410 = vmatprep.subr.bf16.mxu0 0
    %2411 = vmatpush1.bf16.msra.mxu0 0
    %2412 = vmatprep.subr.bf16.mxu0 0
    %2413 = vmatpush1.bf16.msra.mxu0 0
    %2414 = vmatprep.subr.bf16.mxu0 0
    %2415 = vmatpush1.bf16.msra.mxu0 0
    %2416 = vmatprep.subr.bf16.mxu0 0
    %2417 = vmatpush1.bf16.msra.mxu0 0
    %2418 = vmatprep.subr.bf16.mxu0 0
    %2419 = vmatpush1.bf16.msra.mxu0 0
    %2420 = vmatprep.subr.bf16.mxu0 0
    %2421 = vmatpush1.bf16.msra.mxu0 0
    %2422 = vmatprep.subr.bf16.mxu0 0
    %2423 = vmatpush1.bf16.msra.mxu0 0
    %2424 = vmatprep.subr.bf16.mxu0 0
    %2425 = vmatpush1.bf16.msra.mxu0 0
    %2426 = vmatprep.subr.bf16.mxu0 0
    %2427 = vmatpush1.bf16.msra.mxu0 0
    %2428 = vmatprep.subr.bf16.mxu0 0
    %2429 = vmatpush1.bf16.msra.mxu0 0
    %2430 = vmatprep.subr.bf16.mxu0 0
    %2431 = vmatpush1.bf16.msra.mxu0 0
    %2432 = vmatprep.subr.bf16.mxu0 0
    %2433 = vmatpush1.bf16.msra.mxu0 0
    %2434 = vmatprep.subr.bf16.mxu0 0
    %2435 = vmatpush1.bf16.msra.mxu0 0
    %2436 = vmatprep.subr.bf16.mxu0 0
    %2437 = vmatpush1.bf16.msra.mxu0 0
    %2438 = vmatprep.mubr.bf16.mxu0 0
    %2439 = vmatmul.mubr.bf16.gmra.mrb[0].mxu0 %v2404
    %v2440 = vpop.f32.mrb[0].mxu0
    %v2441 = vadd.f32 0.0, %v2440
    %v2442 = vpop.f32.mrb[0].mxu0
    %v2443 = vpop.f32.mrb[0].mxu0
    %v2444 = vpop.f32.mrb[0].mxu0
    %2445 = vdwg.mxu0
    %v2446 = vadd.f32 %v2381, %v2441
    %v2447 = vxor.u32 %v2446, 2147483648
    %v2448 = vmul.f32 %v2447, 1.442695
    %v2449 = vpow.pop %v2448
    %v2450 = vadd.f32 %v2449, 1.0
    %v2451 = vrcp.pop %v2450
    %v2452 = vmul.f32 1.0, %v2451
    %v2453 = vtanh.pop %v2446
    %v2454 = vmul.f32 %v2452, 0.0
    %2456 = vrot.lane.b32.xlu0 %v2453, 32
    %v2457 = vpop.permute.xlu0 %2456
    %v2459 = vmul.f32 %v2452, %v2457
    %2461 = vrot.lane.b32.xlu0 %v2459, 32
    %v2462 = vpop.permute.xlu0 %2461
    %v2464 = vadd.f32 %v2454, %v2462
    %v2465 = vtanh.pop %v2464
    %2467 = vrot.lane.b32.xlu0 %v2465, 32
    %v2468 = vpop.permute.xlu0 %2467
    %v2470 = vmul.f32 %v2452, %v2468
    %v2471 = vpack.c.bf16 %v2470, %v2470
    %2473 = vrot.lane.b32.xlu0 %v2471, 64
    %v2474 = vpop.permute.xlu0 %2473
    %v2476 = vsel %vm2402, %v2474, 0
    %2478 = vmatprep.subr.bf16.mxu0 0
    %2479 = vmatpush1.bf16.msra.mxu0 %v2398
    %2480 = vmatprep.subr.bf16.mxu0 0
    %2481 = vmatpush1.bf16.msra.mxu0 %v2399
    %2482 = vmatprep.subr.bf16.mxu0 0
    %2483 = vmatpush1.bf16.msra.mxu0 0
    %2484 = vmatprep.subr.bf16.mxu0 0
    %2485 = vmatpush1.bf16.msra.mxu0 0
    %2486 = vmatprep.subr.bf16.mxu0 0
    %2487 = vmatpush1.bf16.msra.mxu0 0
    %2488 = vmatprep.subr.bf16.mxu0 0
    %2489 = vmatpush1.bf16.msra.mxu0 0
    %2490 = vmatprep.subr.bf16.mxu0 0
    %2491 = vmatpush1.bf16.msra.mxu0 0
    %2492 = vmatprep.subr.bf16.mxu0 0
    %2493 = vmatpush1.bf16.msra.mxu0 0
    %2494 = vmatprep.subr.bf16.mxu0 0
    %2495 = vmatpush1.bf16.msra.mxu0 0
    %2496 = vmatprep.subr.bf16.mxu0 0
    %2497 = vmatpush1.bf16.msra.mxu0 0
    %2498 = vmatprep.subr.bf16.mxu0 0
    %2499 = vmatpush1.bf16.msra.mxu0 0
    %2500 = vmatprep.subr.bf16.mxu0 0
    %2501 = vmatpush1.bf16.msra.mxu0 0
    %2502 = vmatprep.subr.bf16.mxu0 0
    %2503 = vmatpush1.bf16.msra.mxu0 0
    %2504 = vmatprep.subr.bf16.mxu0 0
    %2505 = vmatpush1.bf16.msra.mxu0 0
    %2506 = vmatprep.subr.bf16.mxu0 0
    %2507 = vmatpush1.bf16.msra.mxu0 0
    %2508 = vmatprep.subr.bf16.mxu0 0
    %2509 = vmatpush1.bf16.msra.mxu0 0
    %2510 = vmatprep.mubr.bf16.mxu0 0
    %2511 = vmatmul.mubr.bf16.gmra.mrb[0].mxu0 %v2476
    %v2512 = vpop.f32.mrb[0].mxu0
    %v2513 = vadd.f32 0.0, %v2512
    %v2514 = vpop.f32.mrb[0].mxu0
    %v2515 = vpop.f32.mrb[0].mxu0
    %v2516 = vpop.f32.mrb[0].mxu0
    %2517 = vdwg.mxu0
    %v2519 = vrot.slane %v2513, 6
    %v2521 = vadd.f32 %v2381, %v2519
    %v2522 = vxor.u32 %v2521, 2147483648
    %v2523 = vmul.f32 %v2522, 1.442695
    %v2524 = vpow.pop %v2523
    %v2525 = vadd.f32 %v2524, 1.0
    %v2526 = vrcp.pop %v2525
    %v2527 = vmul.f32 1.0, %v2526
    %v2528 = vtanh.pop %v2521
    %v2530 = vrot.slane %v2464, 6
    %v2532 = vmul.f32 %v2527, %v2530
    %2534 = vrot.lane.b32.xlu0 %v2528, 32
    %v2535 = vpop.permute.xlu0 %2534
    %v2537 = vmul.f32 %v2527, %v2535
    %2539 = vrot.lane.b32.xlu0 %v2537, 32
    %v2540 = vpop.permute.xlu0 %2539
    %v2542 = vadd.f32 %v2532, %v2540
    %v2543 = vtanh.pop %v2542
    %2545 = vrot.lane.b32.xlu0 %v2543, 32
    %v2546 = vpop.permute.xlu0 %2545
    %v2548 = vmul.f32 %v2527, %v2546
    %v2549 = vpack.c.bf16 %v2548, %v2548
    %v2551 = vrot.slane %v2549, 1
    %2552 = vrot.lane.b32.xlu0 %v2551, 64
    %v2553 = vpop.permute.xlu0 %2552
    %v2555 = vsel %vm2402, %v2553, 0
    %2557 = vmatprep.subr.bf16.mxu0 0
    %2558 = vmatpush1.bf16.msra.mxu0 %v2398
    %2559 = vmatprep.subr.bf16.mxu0 0
    %2560 = vmatpush1.bf16.msra.mxu0 %v2399
    %2561 = vmatprep.subr.bf16.mxu0 0
    %2562 = vmatpush1.bf16.msra.mxu0 0
    %2563 = vmatprep.subr.bf16.mxu0 0
    %2564 = vmatpush1.bf16.msra.mxu0 0
    %2565 = vmatprep.subr.bf16.mxu0 0
    %2566 = vmatpush1.bf16.msra.mxu0 0
    %2567 = vmatprep.subr.bf16.mxu0 0
    %2568 = vmatpush1.bf16.msra.mxu0 0
    %2569 = vmatprep.subr.bf16.mxu0 0
    %2570 = vmatpush1.bf16.msra.mxu0 0
    %2571 = vmatprep.subr.bf16.mxu0 0
    %2572 = vmatpush1.bf16.msra.mxu0 0
    %2573 = vmatprep.subr.bf16.mxu0 0
    %2574 = vmatpush1.bf16.msra.mxu0 0
    %2575 = vmatprep.subr.bf16.mxu0 0
    %2576 = vmatpush1.bf16.msra.mxu0 0
    %2577 = vmatprep.subr.bf16.mxu0 0
    %2578 = vmatpush1.bf16.msra.mxu0 0
    %2579 = vmatprep.subr.bf16.mxu0 0
    %2580 = vmatpush1.bf16.msra.mxu0 0
    %2581 = vmatprep.subr.bf16.mxu0 0
    %2582 = vmatpush1.bf16.msra.mxu0 0
    %2583 = vmatprep.subr.bf16.mxu0 0
    %2584 = vmatpush1.bf16.msra.mxu0 0
    %2585 = vmatprep.subr.bf16.mxu0 0
    %2586 = vmatpush1.bf16.msra.mxu0 0
    %2587 = vmatprep.subr.bf16.mxu0 0
    %2588 = vmatpush1.bf16.msra.mxu0 0
    %2589 = vmatprep.mubr.bf16.mxu0 0
    %2590 = vmatmul.mubr.bf16.gmra.mrb[0].mxu0 %v2555
    %v2591 = vpop.f32.mrb[0].mxu0
    %v2592 = vadd.f32 0.0, %v2591
    %v2593 = vpop.f32.mrb[0].mxu0
    %v2594 = vpop.f32.mrb[0].mxu0
    %v2595 = vpop.f32.mrb[0].mxu0
    %2596 = vdwg.mxu0
    %v2598 = vrot.slane %v2592, 4
    %v2600 = vadd.f32 %v2381, %v2598
    %v2601 = vxor.u32 %v2600, 2147483648
    %v2602 = vmul.f32 %v2601, 1.442695
    %v2603 = vpow.pop %v2602
    %v2604 = vadd.f32 %v2603, 1.0
    %v2605 = vrcp.pop %v2604
    %v2606 = vmul.f32 1.0, %v2605
    %v2607 = vtanh.pop %v2600
    %v2609 = vrot.slane %v2542, 6
    %v2611 = vmul.f32 %v2606, %v2609
    %2613 = vrot.lane.b32.xlu0 %v2607, 32
    %v2614 = vpop.permute.xlu0 %2613
    %v2616 = vmul.f32 %v2606, %v2614
    %2618 = vrot.lane.b32.xlu0 %v2616, 32
    %v2619 = vpop.permute.xlu0 %2618
    %v2621 = vadd.f32 %v2611, %v2619
    %v2622 = vtanh.pop %v2621
    %2624 = vrot.lane.b32.xlu0 %v2622, 32
    %v2625 = vpop.permute.xlu0 %2624
    %v2627 = vmul.f32 %v2606, %v2625
    %v2628 = vpack.c.bf16 %v2627, %v2627
    %v2630 = vrot.slane %v2628, 2
    %2631 = vrot.lane.b32.xlu0 %v2630, 64
    %v2632 = vpop.permute.xlu0 %2631
    %v2634 = vsel %vm2402, %v2632, 0
    %2636 = vmatprep.subr.bf16.mxu0 0
    %2637 = vmatpush1.bf16.msra.mxu0 %v2398
    %2638 = vmatprep.subr.bf16.mxu0 0
    %2639 = vmatpush1.bf16.msra.mxu0 %v2399
    %2640 = vmatprep.subr.bf16.mxu0 0
    %2641 = vmatpush1.bf16.msra.mxu0 0
    %2642 = vmatprep.subr.bf16.mxu0 0
    %2643 = vmatpush1.bf16.msra.mxu0 0
    %2644 = vmatprep.subr.bf16.mxu0 0
    %2645 = vmatpush1.bf16.msra.mxu0 0
    %2646 = vmatprep.subr.bf16.mxu0 0
    %2647 = vmatpush1.bf16.msra.mxu0 0
    %2648 = vmatprep.subr.bf16.mxu0 0
    %2649 = vmatpush1.bf16.msra.mxu0 0
    %2650 = vmatprep.subr.bf16.mxu0 0
    %2651 = vmatpush1.bf16.msra.mxu0 0
    %2652 = vmatprep.subr.bf16.mxu0 0
    %2653 = vmatpush1.bf16.msra.mxu0 0
    %2654 = vmatprep.subr.bf16.mxu0 0
    %2655 = vmatpush1.bf16.msra.mxu0 0
    %2656 = vmatprep.subr.bf16.mxu0 0
    %2657 = vmatpush1.bf16.msra.mxu0 0
    %2658 = vmatprep.subr.bf16.mxu0 0
    %2659 = vmatpush1.bf16.msra.mxu0 0
    %2660 = vmatprep.subr.bf16.mxu0 0
    %2661 = vmatpush1.bf16.msra.mxu0 0
    %2662 = vmatprep.subr.bf16.mxu0 0
    %2663 = vmatpush1.bf16.msra.mxu0 0
    %2664 = vmatprep.subr.bf16.mxu0 0
    %2665 = vmatpush1.bf16.msra.mxu0 0
    %2666 = vmatprep.subr.bf16.mxu0 0
    %2667 = vmatpush1.bf16.msra.mxu0 0
    %2668 = vmatprep.mubr.bf16.mxu0 0
    %2669 = vmatmul.mubr.bf16.gmra.mrb[0].mxu0 %v2634
    %v2670 = vpop.f32.mrb[0].mxu0
    %v2671 = vadd.f32 0.0, %v2670
    %v2672 = vpop.f32.mrb[0].mxu0
    %v2673 = vpop.f32.mrb[0].mxu0
    %v2674 = vpop.f32.mrb[0].mxu0
    %2675 = vdwg.mxu0
    %v2677 = vrot.slane %v2671, 2
    %v2679 = vadd.f32 %v2381, %v2677
    %v2680 = vxor.u32 %v2679, 2147483648
    %v2681 = vmul.f32 %v2680, 1.442695
    %v2682 = vpow.pop %v2681
    %v2683 = vadd.f32 %v2682, 1.0
    %v2684 = vrcp.pop %v2683
    %v2685 = vmul.f32 1.0, %v2684
    %v2686 = vtanh.pop %v2679
    %v2688 = vrot.slane %v2621, 6
    %v2690 = vmul.f32 %v2685, %v2688
    %2692 = vrot.lane.b32.xlu0 %v2686, 32
    %v2693 = vpop.permute.xlu0 %2692
    %v2695 = vmul.f32 %v2685, %v2693
    %2697 = vrot.lane.b32.xlu0 %v2695, 32
    %v2698 = vpop.permute.xlu0 %2697
    %v2700 = vadd.f32 %v2690, %v2698
    %v2701 = vtanh.pop %v2700
    %2703 = vrot.lane.b32.xlu0 %v2701, 32
    %v2704 = vpop.permute.xlu0 %2703
    %v2706 = vmul.f32 %v2685, %v2704
    %v2707 = vpack.c.bf16 %v2706, %v2706
    %v2708 = vld [vmem:[%s8] sm:$0xf]
    %v2709 = vld [vmem:[%s8 + $0x4] sm:$0xf]
    %v2710 = vld [vmem:[%s8 + $0x8] sm:$0xf]
    %v2711 = vld [vmem:[%s8 + $0xc] sm:$0xf]
    %v2712 = vld [vmem:[%s9] sm:$0x1]
    %v2714 = vlaneseq
    %v2715 = vshrl.u32 %v2714, 7
    %v2716 = vsub.s32 0, %v2715
    %v2717 = vrot.slane %v2712, %v2716
    %v2720 = vrot.slane %v2707, 3
    %2721 = vrot.lane.b32.xlu0 %v2720, 64
    %v2722 = vpop.permute.xlu0 %2721
    %v2727 = vunpack.c.l.b16 %v2708
    %v2728 = vunpack.c.l.b16 %v2709
    %v2729 = vunpack.c.l.b16 %v2710
    %v2730 = vunpack.c.l.b16 %v2711
    %v2731 = vpack.c.b16 %v2728, %v2727
    %v2732 = vpack.c.b16 %v2730, %v2729
    %v2736 = vsel %vm2402, %v2722, 0
    %2738 = vmatprep.subr.bf16.mxu0 0
    %2739 = vmatpush1.bf16.msra.mxu0 %v2731
    %2740 = vmatprep.subr.bf16.mxu0 0
    %2741 = vmatpush1.bf16.msra.mxu0 %v2732
    %2742 = vmatprep.subr.bf16.mxu0 0
    %2743 = vmatpush1.bf16.msra.mxu0 0
    %2744 = vmatprep.subr.bf16.mxu0 0
    %2745 = vmatpush1.bf16.msra.mxu0 0
    %2746 = vmatprep.subr.bf16.mxu0 0
    %2747 = vmatpush1.bf16.msra.mxu0 0
    %2748 = vmatprep.subr.bf16.mxu0 0
    %2749 = vmatpush1.bf16.msra.mxu0 0
    %2750 = vmatprep.subr.bf16.mxu0 0
    %2751 = vmatpush1.bf16.msra.mxu0 0
    %2752 = vmatprep.subr.bf16.mxu0 0
    %2753 = vmatpush1.bf16.msra.mxu0 0
    %2754 = vmatprep.subr.bf16.mxu0 0
    %2755 = vmatpush1.bf16.msra.mxu0 0
    %2756 = vmatprep.subr.bf16.mxu0 0
    %2757 = vmatpush1.bf16.msra.mxu0 0
    %2758 = vmatprep.subr.bf16.mxu0 0
    %2759 = vmatpush1.bf16.msra.mxu0 0
    %2760 = vmatprep.subr.bf16.mxu0 0
    %2761 = vmatpush1.bf16.msra.mxu0 0
    %2762 = vmatprep.subr.bf16.mxu0 0
    %2763 = vmatpush1.bf16.msra.mxu0 0
    %2764 = vmatprep.subr.bf16.mxu0 0
    %2765 = vmatpush1.bf16.msra.mxu0 0
    %2766 = vmatprep.subr.bf16.mxu0 0
    %2767 = vmatpush1.bf16.msra.mxu0 0
    %2768 = vmatprep.subr.bf16.mxu0 0
    %2769 = vmatpush1.bf16.msra.mxu0 0
    %2770 = vmatprep.mubr.bf16.mxu0 0
    %2771 = vmatmul.mubr.bf16.gmra.mrb[0].mxu0 %v2736
    %v2772 = vpop.f32.mrb[0].mxu0
    %v2773 = vadd.f32 %v2717, %v2772
    %v2774 = vpop.f32.mrb[0].mxu0
    %v2775 = vpop.f32.mrb[0].mxu0
    %v2776 = vpop.f32.mrb[0].mxu0
    %2777 = vdwg.mxu0
    %vm2778 = vcmask 17408
    %2779 = vst.msk [vmem:[#allocation12] sm:$0x3] %vm2778, %v2773
    // Predicated region
    $region58: #{forward.1} parent=1 // pred_check
      _
    $region59: #{forward.1} parent=1 // pred_check_branch
      %2781 = sbr.rel (0) target = $region61
    $region60: #{forward.1} parent=1 // pred_region
      %s2783 = ssub.s32 32, 32
      %2784 = vsyncadd [#allocation5], %s2783
      %s2786 = sshll.u32 [#allocation12], 4
      %s2787 = int_to_ptr.vmem [resolvable:$true] %s2786
      %2789 = dma.vmem_to_hbm [thread:$0]  %s2787, 32, %s10, [#allocation5]
    $region61: #{forward.1} parent=1 // pred_fallthru
      _
    // Predicated region
    $region62: #{forward.1} parent=1 // pred_check
      _
    $region63: #{forward.1} parent=1 // pred_check_branch
      %2791 = sbr.rel (0) target = $region65
    $region64: #{forward.1} parent=1 // pred_region
      %2792 = dma.done [#allocation5], 32
    $region65: #{forward.1} parent=1 // pred_fallthru
      _
    %2793 = vsyncpa [#allocation5], 1
    %2794 = vsyncpa [#allocation6], 1
    %2795 = vsyncpa [#allocation8], 1
    %2796 = vsyncpa [#allocation11], 1

</llo_original>
